<compile_context>
chip_gen: v7x
topology: tpu7x:2x2x1
jax: 0.10.0
libtpu: 0.0.40
codegen_flags: <defaults>
</compile_context>

<pallas_src>
import functools
import math

import jax
import jax.numpy as jnp
from jax.experimental import pallas as pl
from jax.experimental.pallas import tpu as pltpu

LN_EPS = 1e-5
# bf16 operands on the MXU (full-rate path on v5e/v6e/v7x), f32 accumulation everywhere.
MXU_DTYPE = jnp.bfloat16


def _mxu_dot(a, b):
    return jnp.dot(a.astype(MXU_DTYPE), b.astype(MXU_DTYPE),
                   preferred_element_type=jnp.float32)


# -------------------- generation-aware sizing (VMEM capacity) --------------------
def _vmem_capacity_bytes():
    try:
        return int(pltpu.get_tpu_info().vmem_capacity_bytes)
    except Exception:
        return 128 * 1024 * 1024          # v5e / v6e default


_VMEM_CAP = _vmem_capacity_bytes()
# Leave headroom for Mosaic internal scratch / semaphores: <=48 MiB on a 64 MiB v7x core,
# ~96 MiB on 128 MiB (v5e/v6e) parts.
VMEM_LIMIT = int(min((_VMEM_CAP * 3) // 4, 100 * 1024 * 1024))
HIDDEN_TILE_TARGET = 2048 if _VMEM_CAP >= 96 * 1024 * 1024 else 1024
TOKEN_TILE_TARGET = 512


def _pick_token_tile(n, target=TOKEN_TILE_TARGET):
    """Token tile: full N when small, else the largest multiple-of-8 divisor <= target."""
    if n <= target:
        return n
    for t in range(target, 7, -1):
        if t % 8 == 0 and n % t == 0:
            return t
    return n


def _pick_hidden_tile(dh, target=HIDDEN_TILE_TARGET):
    """K-tile over the 4*D expert hidden dim (smaller target on v7x's 64 MiB VMEM)."""
    if dh <= target:
        return dh
    for t in range(target, 127, -128):
        if dh % t == 0:
            return t
    return dh


# ----------------------- K1: fused LayerNorm(ln_1) + QKV -----------------------
def _ln1_qkv_kernel(x_ref, lnw_ref, lnb_ref, w_ref, b_ref, o_ref):
    x = x_ref[...].astype(jnp.float32)
    mu = jnp.mean(x, axis=-1, keepdims=True)
    var = jnp.mean(jnp.square(x - mu), axis=-1, keepdims=True)
    h = (x - mu) * jax.lax.rsqrt(var + LN_EPS) * lnw_ref[...] + lnb_ref[...]
    o_ref[...] = (_mxu_dot(h, w_ref[...]) + b_ref[...]).astype(o_ref.dtype)


def fused_ln1_qkv(x2, ln1_w, ln1_b, wqkv, bqkv):
    N, D = x2.shape
    tm = _pick_token_tile(N)
    T = N // tm
    return pl.pallas_call(
        _ln1_qkv_kernel,
        out_shape=jax.ShapeDtypeStruct((N, 3 * D), x2.dtype),
        grid=(T,),
        in_specs=[
            pl.BlockSpec((tm, D), lambda t: (t, 0)),
            pl.BlockSpec((1, D), lambda t: (0, 0)),
            pl.BlockSpec((1, D), lambda t: (0, 0)),
            pl.BlockSpec((D, 3 * D), lambda t: (0, 0)),   # constant index -> VMEM-resident
            pl.BlockSpec((1, 3 * D), lambda t: (0, 0)),
        ],
        out_specs=pl.BlockSpec((tm, 3 * D), lambda t: (t, 0)),
        compiler_params=pltpu.CompilerParams(
            dimension_semantics=("parallel",),
            vmem_limit_bytes=VMEM_LIMIT),
    )(x2, ln1_w, ln1_b, wqkv, bqkv)


# --------------------- K2: multi-head attention (token-major I/O) ---------------
def _attn_kernel(scale, q_ref, k_ref, v_ref, o_ref):
    # q/k/v refs: (S, H, hd) token-major for one batch element; no HBM relayouts needed.
    H = q_ref.shape[1]
    for h in range(H):                                     # static unroll over heads
        q = q_ref[:, h, :].astype(jnp.float32) * scale     # torch scales q
        k = k_ref[:, h, :]
        v = v_ref[:, h, :]
        s = jax.lax.dot_general(
            q.astype(MXU_DTYPE), k.astype(MXU_DTYPE),
            dimension_numbers=(((1,), (1,)), ((), ())),
            preferred_element_type=jnp.float32)            # (S, S), attn_mask is None
        s = s - jnp.max(s, axis=-1, keepdims=True)
        p = jnp.exp(s)
        p = p / jnp.sum(p, axis=-1, keepdims=True)         # exact softmax (EUP divide)
        o = jnp.dot(p.astype(MXU_DTYPE), v.astype(MXU_DTYPE),
                    preferred_element_type=jnp.float32)
        o_ref[:, h, :] = o.astype(o_ref.dtype)


def attention_core(qkv5):
    # qkv5: (S, B, 3, H, hd) — a free view of K1's (N, 3D) output.  Grid over batch keeps
    # >=2 parallel steps for v7x's two TensorCores whenever B >= 2.
    S, B, _, H, hd = qkv5.shape
    scale = 1.0 / math.sqrt(hd)
    return pl.pallas_call(
        functools.partial(_attn_kernel, scale),
        out_shape=jax.ShapeDtypeStruct((S, B, H, hd), qkv5.dtype),
        grid=(B,),
        in_specs=[
            pl.BlockSpec((S, None, None, H, hd), lambda b: (0, b, 0, 0, 0)),   # Q
            pl.BlockSpec((S, None, None, H, hd), lambda b: (0, b, 1, 0, 0)),   # K
            pl.BlockSpec((S, None, None, H, hd), lambda b: (0, b, 2, 0, 0)),   # V
        ],
        out_specs=pl.BlockSpec((S, None, H, hd), lambda b: (0, b, 0, 0)),
        compiler_params=pltpu.CompilerParams(dimension_semantics=("parallel",)),
    )(qkv5, qkv5, qkv5)


# -------- K3: fused out-proj + residual + LayerNorm(ln_2) + router gate ---------
def _outproj_ln2_gate_kernel(o_ref, x_ref, wo_ref, bo_ref, lnw_ref, lnb_ref, wg_ref,
                             xa_ref, lg_ref):
    attn = _mxu_dot(o_ref[...], wo_ref[...]) + bo_ref[...]
    xa = x_ref[...].astype(jnp.float32) + attn                  # first residual folded in
    xa_ref[...] = xa.astype(xa_ref.dtype)
    mu = jnp.mean(xa, axis=-1, keepdims=True)
    var = jnp.mean(jnp.square(xa - mu), axis=-1, keepdims=True)
    h2 = (xa - mu) * jax.lax.rsqrt(var + LN_EPS) * lnw_ref[...] + lnb_ref[...]
    # Router gate in f32 (tiny matmul) so routing decisions keep full precision; the gate
    # weight is zero-padded to 128 lanes so this store is lane-dense (no masked vst).
    lg_ref[...] = jnp.dot(h2, wg_ref[...],
                          preferred_element_type=jnp.float32).astype(lg_ref.dtype)


def fused_outproj_ln2_gate(o2, x2, wout, bout, ln2_w, ln2_b, wgate_pad):
    N, D = o2.shape
    EP = wgate_pad.shape[1]
    tm = _pick_token_tile(N)
    T = N // tm
    return pl.pallas_call(
        _outproj_ln2_gate_kernel,
        out_shape=(jax.ShapeDtypeStruct((N, D), x2.dtype),
                   jax.ShapeDtypeStruct((N, EP), jnp.float32)),
        grid=(T,),
        in_specs=[
            pl.BlockSpec((tm, D), lambda t: (t, 0)),
            pl.BlockSpec((tm, D), lambda t: (t, 0)),
            pl.BlockSpec((D, D), lambda t: (0, 0)),
            pl.BlockSpec((1, D), lambda t: (0, 0)),
            pl.BlockSpec((1, D), lambda t: (0, 0)),
            pl.BlockSpec((1, D), lambda t: (0, 0)),
            pl.BlockSpec((D, EP), lambda t: (0, 0)),
        ],
        out_specs=(pl.BlockSpec((tm, D), lambda t: (t, 0)),
                   pl.BlockSpec((tm, EP), lambda t: (t, 0))),
        compiler_params=pltpu.CompilerParams(
            dimension_semantics=("parallel",),
            vmem_limit_bytes=VMEM_LIMIT),
    )(o2, x2, wout, bout, ln2_w, ln2_b, wgate_pad)


# -------------------- K4: MoE expert FFN + second residual ---------------------
def _moe_kernel(sched_ref, nact_ref, xa_ref, lnw_ref, lnb_ref,
                w1_ref, b1_ref, w2_ref, b2_ref, dw_ref, o_ref,
                h2_scr, acc_scr):
    e = pl.program_id(1)
    kh = pl.program_id(2)

    @pl.when((e == 0) & (kh == 0))
    def _():
        xa = xa_ref[...].astype(jnp.float32)
        acc_scr[...] = xa                                    # second residual folded in
        mu = jnp.mean(xa, axis=-1, keepdims=True)
        var = jnp.mean(jnp.square(xa - mu), axis=-1, keepdims=True)
        h2 = (xa - mu) * jax.lax.rsqrt(var + LN_EPS) * lnw_ref[...] + lnb_ref[...]
        h2_scr[...] = h2.astype(h2_scr.dtype)                # stored in MXU operand dtype

    # Only the first n_active expert steps do work; tail steps' index_maps repeat the last
    # active expert's block indices, so no fresh weight DMA is issued for empty experts.
    @pl.when(e < nact_ref[0])
    def _():
        h1 = _mxu_dot(h2_scr[...], w1_ref[0]) + b1_ref[0]    # c_fc (K-tile of the 4*D hidden)
        g = h1 * jax.nn.sigmoid(1.702 * h1)                  # QuickGELU
        # TODO(synk): nn.Dropout between gelu and c_proj is identity at inference (p=0.0 here).
        part = _mxu_dot(g, w2_ref[0])                        # c_proj partial product
        dw = dw_ref[0].astype(jnp.float32)                   # (tm, 1) routing weights, f32

        @pl.when(kh == 0)
        def _():
            acc_scr[...] += dw * b2_ref[0]                   # c_proj bias added once per expert

        acc_scr[...] += dw * part

    @pl.when((e == pl.num_programs(1) - 1) & (kh == pl.num_programs(2) - 1))
    def _():
        o_ref[...] = acc_scr[...].astype(o_ref.dtype)


def moe_ffn_residual(xattn, ln2_w, ln2_b, w1, b1, w2, b2, dense_w, sched, n_active):
    # xattn: (N, D); w1: (E, D, 4D) bf16; b1: (E, 1, 4D); w2: (E, 4D, D) bf16; b2: (E, 1, D)
    # dense_w: (E, N, 1) f32 routing weights (0 for unrouted tokens)
    # sched: (E,) int32 compacted active-expert ids; n_active: (1,) int32
    N, D = xattn.shape
    E, _, Dh = w1.shape
    tm = _pick_token_tile(N)
    T = N // tm
    tkh = _pick_hidden_tile(Dh)
    KH = Dh // tkh
    return pl.pallas_call(
        _moe_kernel,
        out_shape=jax.ShapeDtypeStruct((N, D), xattn.dtype),
        grid_spec=pltpu.PrefetchScalarGridSpec(
            num_scalar_prefetch=2,
            grid=(T, E, KH),
            in_specs=[
                pl.BlockSpec((tm, D), lambda t, e, k, sc, na: (t, 0)),
                pl.BlockSpec((1, D), lambda t, e, k, sc, na: (0, 0)),
                pl.BlockSpec((1, D), lambda t, e, k, sc, na: (0, 0)),
                pl.BlockSpec((1, D, tkh), lambda t, e, k, sc, na: (sc[e], 0, k)),   # c_fc W
                pl.BlockSpec((1, 1, tkh), lambda t, e, k, sc, na: (sc[e], 0, k)),   # c_fc b
                pl.BlockSpec((1, tkh, D), lambda t, e, k, sc, na: (sc[e], k, 0)),   # c_proj W
                pl.BlockSpec((1, 1, D), lambda t, e, k, sc, na: (sc[e], 0, 0)),     # c_proj b
                pl.BlockSpec((1, tm, 1), lambda t, e, k, sc, na: (sc[e], t, 0)),    # routing w
            ],
            out_specs=pl.BlockSpec((tm, D), lambda t, e, k, sc, na: (t, 0)),
            scratch_shapes=[pltpu.VMEM((tm, D), MXU_DTYPE),    # ln_2(x_attn), MXU operand dtype
                            pltpu.VMEM((tm, D), jnp.float32)],  # f32 accumulator
        ),
        compiler_params=pltpu.CompilerParams(
            dimension_semantics=("parallel", "arbitrary", "arbitrary"),
            vmem_limit_bytes=VMEM_LIMIT),
    )(sched, n_active, xattn, ln2_w, ln2_b, w1, b1, w2, b2, dense_w)


# ------------------------------ Parameter setup --------------------------------
def init_torch_params(key, d_model, num_experts):
    """Parameters in the PyTorch module's native layouts (f32)."""
    D = d_model
    ks = jax.random.split(key, 9)

    def nrm(k, shape, scale=0.05):
        return (scale * jax.random.normal(k, shape)).astype(jnp.float32)

    return dict(
        ln1_w=jnp.ones((D,), jnp.float32),
        ln1_b=jnp.zeros((D,), jnp.float32),
        ln2_w=jnp.ones((D,), jnp.float32),
        ln2_b=jnp.zeros((D,), jnp.float32),
        in_proj_w=nrm(ks[0], (3 * D, D)),           # nn.MultiheadAttention.in_proj_weight
        in_proj_b=nrm(ks[1], (3 * D,)),
        out_proj_w=nrm(ks[2], (D, D)),
        out_proj_b=nrm(ks[3], (D,)),
        gate_w=nrm(ks[4], (num_experts, D), scale=0.5),   # nn.Linear(D, E, bias=False)
        w1=nrm(ks[5], (num_experts, 4 * D, D)),     # experts[e].c_fc.weight
        b1=nrm(ks[6], (num_experts, 4 * D)),
        w2=nrm(ks[7], (num_experts, D, 4 * D)),     # experts[e].c_proj.weight
        b2=nrm(ks[8], (num_experts, D)),
    )


def prepare_kernel_params(p):
    """One-time layout / dtype transforms into kernel-friendly shapes.

    Matmul weights are stored in bf16 (MXU operand dtype, halves weight HBM traffic);
    LayerNorm params, biases and the router gate stay f32.
    """
    D = p["ln1_w"].shape[0]
    E, Dh = p["b1"].shape
    EP = max(128, ((E + 127) // 128) * 128)
    wgate_pad = jnp.zeros((D, EP), jnp.float32).at[:, :E].set(
        p["gate_w"].T.astype(jnp.float32))
    return dict(
        ln1_w=p["ln1_w"].reshape(1, D), ln1_b=p["ln1_b"].reshape(1, D),
        ln2_w=p["ln2_w"].reshape(1, D), ln2_b=p["ln2_b"].reshape(1, D),
        wqkv=p["in_proj_w"].T.astype(MXU_DTYPE),                    # (D, 3D) bf16
        bqkv=p["in_proj_b"].reshape(1, 3 * D).astype(jnp.float32),
        wout=p["out_proj_w"].T.astype(MXU_DTYPE),                   # (D, D) bf16
        bout=p["out_proj_b"].reshape(1, D).astype(jnp.float32),
        wgate_pad=wgate_pad,                                        # (D, EP) f32, zero-padded
        w1=jnp.transpose(p["w1"], (0, 2, 1)).astype(MXU_DTYPE),     # (E, D, 4D) bf16
        b1=p["b1"].reshape(E, 1, Dh).astype(jnp.float32),
        w2=jnp.transpose(p["w2"], (0, 2, 1)).astype(MXU_DTYPE),     # (E, 4D, D) bf16
        b2=p["b2"].reshape(E, 1, D).astype(jnp.float32),
    )


# ---------------------------------- Forward ------------------------------------
def moe_block_forward(x, kp, n_head, num_experts, top_k):
    S, B, D = x.shape
    H = n_head
    hd = D // H
    N = S * B
    x2 = x.reshape(N, D)                                               # free (row-major)

    # K1: x -> ln_1 -> fused QKV projection (single (tm,D)x(D,3D) matmul)
    qkv = fused_ln1_qkv(x2, kp["ln1_w"], kp["ln1_b"], kp["wqkv"], kp["bqkv"])   # (N, 3D)
    qkv5 = qkv.reshape(S, B, 3, H, hd)                                 # free view, no relayout

    # K2: attention reads/writes token-major — no XLA head split/merge HBM passes
    o = attention_core(qkv5)                                           # (S, B, H, hd)
    o2 = o.reshape(N, D)                                               # free

    # K3: out-proj + residual + ln_2 + router gate (fused, one activation pass)
    xattn, logits_pad = fused_outproj_ln2_gate(
        o2, x2, kp["wout"], kp["bout"], kp["ln2_w"], kp["ln2_b"], kp["wgate_pad"])
    router_logits = logits_pad[:, :num_experts]                        # (N, E) f32

    # Routing glue (tiny (N, E) top-k) in plain JAX; routing weights stay f32.
    probs = jax.nn.softmax(router_logits, axis=-1)
    top_w, top_i = jax.lax.top_k(probs, top_k)
    top_w = top_w / jnp.sum(top_w, axis=-1, keepdims=True)
    onehot = jax.nn.one_hot(top_i, num_experts, dtype=jnp.float32)     # (N, K, E)
    dense_w = jnp.sum(onehot * top_w[..., None], axis=1)               # (N, E) f32
    counts = jnp.sum(onehot, axis=(0, 1)).astype(jnp.int32)            # (E,)

    # Compacted active-expert schedule: active expert ids first, tail repeats the last
    # active id so the K4 pipeline issues no fresh weight DMA for empty experts.
    active = counts > 0
    nact = jnp.sum(active.astype(jnp.int32))
    order = jnp.argsort(jnp.where(active, 0, 1).astype(jnp.int32)).astype(jnp.int32)
    last_active = order[jnp.maximum(nact - 1, 0)]
    sched = jnp.where(jnp.arange(num_experts) < nact, order, last_active).astype(jnp.int32)

    dw = jnp.transpose(dense_w)[:, :, None]                            # (E, N, 1) f32

    # K4: MoE FFN (ln_2 recomputed in-kernel) + final residual
    out2 = moe_ffn_residual(xattn, kp["ln2_w"], kp["ln2_b"],
                            kp["w1"], kp["b1"], kp["w2"], kp["b2"],
                            dw, sched, nact.reshape(1))
    return out2.reshape(S, B, D), router_logits


# ----------------------------- Pure-JAX reference -------------------------------
def reference_forward(x, params, n_head, num_experts, top_k):
    """Pure-JAX reference with the same mixed-precision matmul policy as the kernels
    (bf16 MXU operands, f32 accumulation; f32 LayerNorm/softmax/routing), so the comparison
    isolates layout / fusion / routing bugs rather than dtype-policy differences."""
    S, B, D = x.shape
    H = n_head
    hd = D // H
    N = S * B

    def mm(a, b):
        return jnp.dot(a.astype(MXU_DTYPE), b.astype(MXU_DTYPE),
                       preferred_element_type=jnp.float32)

    def ln(v, w, b):
        m = jnp.mean(v, axis=-1, keepdims=True)
        var = jnp.mean(jnp.square(v - m), axis=-1, keepdims=True)
        return (v - m) * jax.lax.rsqrt(var + LN_EPS) * w + b

    x2 = x.reshape(N, D)
    h = ln(x2, params["ln1_w"], params["ln1_b"])
    qkv = mm(h, params["in_proj_w"].T) + params["in_proj_b"]
    q, k, v = jnp.split(qkv, 3, axis=-1)

    def heads(t):
        return t.reshape(S, B * H, hd).transpose(1, 0, 2)

    qh, kh, vh = heads(q), heads(k), heads(v)
    qh = qh * (1.0 / math.sqrt(hd))
    s = jnp.einsum("nld,nmd->nlm", qh.astype(MXU_DTYPE), kh.astype(MXU_DTYPE),
                   preferred_element_type=jnp.float32)
    p = jax.nn.softmax(s, axis=-1)
    o = jnp.einsum("nlm,nmd->nld", p.astype(MXU_DTYPE), vh.astype(MXU_DTYPE),
                   preferred_element_type=jnp.float32)
    o2 = o.transpose(1, 0, 2).reshape(N, D)
    x2 = x2 + mm(o2, params["out_proj_w"].T) + params["out_proj_b"]

    h2 = ln(x2, params["ln2_w"], params["ln2_b"])
    logits = jnp.dot(h2, params["gate_w"].T,
                     precision=jax.lax.Precision.HIGHEST)              # gate in f32
    probs = jax.nn.softmax(logits, axis=-1)
    top_w, top_i = jax.lax.top_k(probs, top_k)
    top_w = top_w / jnp.sum(top_w, axis=-1, keepdims=True)
    dense_w = jnp.sum(jax.nn.one_hot(top_i, num_experts, dtype=jnp.float32)
                      * top_w[..., None], axis=1)

    final = jnp.zeros((N, D), jnp.float32)
    for e in range(num_experts):
        h1 = mm(h2, params["w1"][e].T) + params["b1"][e]
        g = h1 * jax.nn.sigmoid(1.702 * h1)
        oe = mm(g, params["w2"][e].T) + params["b2"][e]
        final = final + dense_w[:, e:e + 1] * oe
    return (x2 + final).reshape(S, B, D), logits


# ------------------------------------ Main --------------------------------------
if __name__ == "__main__":
    S, B, D, H = 8, 2, 64, 4          # seq, batch, d_model, n_head
    E, TOPK = 4, 2                    # MoE_args = (num_experts=4, top_k=2, dropout=0.0)

    key = jax.random.PRNGKey(0)
    kx, kparam = jax.random.split(key)
    x = jax.random.normal(kx, (S, B, D), jnp.float32)     # layout: (S, B, D)
    torch_params = init_torch_params(kparam, D, E)
    kernel_params = prepare_kernel_params(torch_params)   # one-time weight re-layout / bf16 cast

    fwd = jax.jit(functools.partial(moe_block_forward,
                                    n_head=H, num_experts=E, top_k=TOPK))
    out, router_logits = fwd(x, kernel_params)
    jax.block_until_ready((out, router_logits))

    ref_out, ref_logits = reference_forward(x, torch_params, H, E, TOPK)
    assert out.shape == (S, B, D) and router_logits.shape == (S * B, E)
    assert jnp.allclose(router_logits, ref_logits, atol=1e-2, rtol=1e-2), \
        "router logits mismatch"
    assert jnp.allclose(out, ref_out, atol=1e-2, rtol=1e-2), "block output mismatch"

    print("KERNEL_OK")
</pallas_src>

<mosaic_0001>
module attributes {stable_mosaic.version = 11 : i64} {
  func.func @_ln1_qkv_kernel(%arg0: i32, %arg1: memref<16x64xf32, #tpu.memory_space<vmem>>, %arg2: memref<1x64xf32, #tpu.memory_space<vmem>>, %arg3: memref<1x64xf32, #tpu.memory_space<vmem>>, %arg4: memref<64x192xbf16, #tpu.memory_space<vmem>>, %arg5: memref<1x192xf32, #tpu.memory_space<vmem>>, %arg6: memref<16x192xf32, #tpu.memory_space<vmem>>) attributes {dimension_semantics = [#tpu.dimension_semantics<parallel>], iteration_bounds = array<i64: 1>, scalar_prefetch = 0 : i64, scratch_operands = 0 : i64, tpu.core_type = #tpu.core_type<tc>, window_params = [{transform_indices = @transform_0, window_bounds = array<i64: 16, 64>}, {pipeline_mode = #tpu.pipeline_mode<synchronous>, transform_indices = @transform_1, window_bounds = array<i64: 1, 64>}, {pipeline_mode = #tpu.pipeline_mode<synchronous>, transform_indices = @transform_2, window_bounds = array<i64: 1, 64>}, {pipeline_mode = #tpu.pipeline_mode<synchronous>, transform_indices = @transform_3, window_bounds = array<i64: 64, 192>}, {pipeline_mode = #tpu.pipeline_mode<synchronous>, transform_indices = @transform_4, window_bounds = array<i64: 1, 192>}, {transform_indices = @transform_5, window_bounds = array<i64: 16, 192>}]} {
    %c0 = arith.constant 0 : index
    %c0_0 = arith.constant 0 : index
    %0 = vector.load %arg1[%c0, %c0_0] : memref<16x64xf32, #tpu.memory_space<vmem>>, vector<16x64xf32>
    %cst = arith.constant dense<0.000000e+00> : vector<16xf32>
    %1 = vector.multi_reduction <add>, %0, %cst [1] : vector<16x64xf32> to vector<16xf32>
    %2 = vector.shape_cast %1 : vector<16xf32> to vector<16x1xf32>
    %cst_1 = arith.constant 6.400000e+01 : f32
    %3 = vector.broadcast %cst_1 : f32 to vector<16x1xf32>
    %4 = arith.divf %2, %3 : vector<16x1xf32>
    %5 = vector.broadcast %4 : vector<16x1xf32> to vector<16x64xf32>
    %6 = arith.subf %0, %5 : vector<16x64xf32>
    %7 = arith.mulf %6, %6 : vector<16x64xf32>
    %cst_2 = arith.constant dense<0.000000e+00> : vector<16xf32>
    %8 = vector.multi_reduction <add>, %7, %cst_2 [1] : vector<16x64xf32> to vector<16xf32>
    %9 = vector.shape_cast %8 : vector<16xf32> to vector<16x1xf32>
    %cst_3 = arith.constant 6.400000e+01 : f32
    %10 = vector.broadcast %cst_3 : f32 to vector<16x1xf32>
    %11 = arith.divf %9, %10 : vector<16x1xf32>
    %12 = vector.broadcast %4 : vector<16x1xf32> to vector<16x64xf32>
    %13 = arith.subf %0, %12 : vector<16x64xf32>
    %cst_4 = arith.constant 9.99999974E-6 : f32
    %14 = vector.broadcast %cst_4 : f32 to vector<16x1xf32>
    %15 = arith.addf %11, %14 : vector<16x1xf32>
    %16 = math.rsqrt %15 : vector<16x1xf32>
    %17 = vector.broadcast %16 : vector<16x1xf32> to vector<16x64xf32>
    %18 = arith.mulf %13, %17 : vector<16x64xf32>
    %c0_5 = arith.constant 0 : index
    %c0_6 = arith.constant 0 : index
    %19 = vector.load %arg2[%c0_5, %c0_6] : memref<1x64xf32, #tpu.memory_space<vmem>>, vector<1x64xf32>
    %20 = vector.broadcast %19 : vector<1x64xf32> to vector<16x64xf32>
    %21 = arith.mulf %18, %20 : vector<16x64xf32>
    %c0_7 = arith.constant 0 : index
    %c0_8 = arith.constant 0 : index
    %22 = vector.load %arg3[%c0_7, %c0_8] : memref<1x64xf32, #tpu.memory_space<vmem>>, vector<1x64xf32>
    %23 = vector.broadcast %22 : vector<1x64xf32> to vector<16x64xf32>
    %24 = arith.addf %21, %23 : vector<16x64xf32>
    %c0_9 = arith.constant 0 : index
    %c0_10 = arith.constant 0 : index
    %25 = vector.load %arg4[%c0_9, %c0_10] : memref<64x192xbf16, #tpu.memory_space<vmem>>, vector<64x192xbf16>
    %26 = arith.truncf %24 : vector<16x64xf32> to vector<16x64xbf16>
    %cst_11 = arith.constant dense<0.000000e+00> : vector<16x192xf32>
    %27 = tpu.matmul %26, %25, %cst_11 {dimension_numbers = #tpu.dot_dimension_numbers<[1], [0], [0], [1], [0, 0, 1, 1], [], []>} : vector<16x64xbf16>, vector<64x192xbf16>, vector<16x192xf32> -> vector<16x192xf32>
    %c0_12 = arith.constant 0 : index
    %c0_13 = arith.constant 0 : index
    %28 = vector.load %arg5[%c0_12, %c0_13] : memref<1x192xf32, #tpu.memory_space<vmem>>, vector<1x192xf32>
    %29 = vector.broadcast %28 : vector<1x192xf32> to vector<16x192xf32>
    %30 = arith.addf %27, %29 : vector<16x192xf32>
    %c0_14 = arith.constant 0 : index
    %c0_15 = arith.constant 0 : index
    %31 = vector.load %arg6[%c0_14, %c0_15] : memref<16x192xf32, #tpu.memory_space<vmem>>, vector<16x192xf32>
    tpu.vector_store %arg6[%c0_14, %c0_15], %30 {strides = array<i32>} : memref<16x192xf32, #tpu.memory_space<vmem>>, vector<16x192xf32>,
    return
  }
  func.func @transform_0(%arg0: i32) -> (i32, i32) {
    %c0_i32 = arith.constant 0 : i32
    %c0_i32_0 = arith.constant 0 : i32
    return %arg0, %c0_i32 : i32, i32
  }
  func.func @transform_1(%arg0: i32) -> (i32, i32) {
    %c0_i32 = arith.constant 0 : i32
    %c0_i32_0 = arith.constant 0 : i32
    %c0_i32_1 = arith.constant 0 : i32
    return %c0_i32, %c0_i32_0 : i32, i32
  }
  func.func @transform_2(%arg0: i32) -> (i32, i32) {
    %c0_i32 = arith.constant 0 : i32
    %c0_i32_0 = arith.constant 0 : i32
    %c0_i32_1 = arith.constant 0 : i32
    return %c0_i32, %c0_i32_0 : i32, i32
  }
  func.func @transform_3(%arg0: i32) -> (i32, i32) {
    %c0_i32 = arith.constant 0 : i32
    %c0_i32_0 = arith.constant 0 : i32
    %c0_i32_1 = arith.constant 0 : i32
    return %c0_i32, %c0_i32_0 : i32, i32
  }
  func.func @transform_4(%arg0: i32) -> (i32, i32) {
    %c0_i32 = arith.constant 0 : i32
    %c0_i32_0 = arith.constant 0 : i32
    %c0_i32_1 = arith.constant 0 : i32
    return %c0_i32, %c0_i32_0 : i32, i32
  }
  func.func @transform_5(%arg0: i32) -> (i32, i32) {
    %c0_i32 = arith.constant 0 : i32
    %c0_i32_0 = arith.constant 0 : i32
    return %arg0, %c0_i32 : i32, i32
  }
}

module attributes {stable_mosaic.version = 11 : i64} {
  func.func @_attn_kernel(%arg0: i32, %arg1: memref<8x1x1x4x16xf32, #tpu.memory_space<vmem>>, %arg2: memref<8x1x1x4x16xf32, #tpu.memory_space<vmem>>, %arg3: memref<8x1x1x4x16xf32, #tpu.memory_space<vmem>>, %arg4: memref<8x1x4x16xf32, #tpu.memory_space<vmem>>) attributes {dimension_semantics = [#tpu.dimension_semantics<parallel>], iteration_bounds = array<i64: 2>, scalar_prefetch = 0 : i64, scratch_operands = 0 : i64, tpu.core_type = #tpu.core_type<tc>, window_params = [{transform_indices = @transform_0, window_bounds = array<i64: 8, 1, 1, 4, 16>}, {transform_indices = @transform_1, window_bounds = array<i64: 8, 1, 1, 4, 16>}, {transform_indices = @transform_2, window_bounds = array<i64: 8, 1, 1, 4, 16>}, {transform_indices = @transform_3, window_bounds = array<i64: 8, 1, 4, 16>}]} {
    %c0 = arith.constant 0 : index
    %c0_0 = arith.constant 0 : index
    %c0_1 = arith.constant 0 : index
    %c0_2 = arith.constant 0 : index
    %c0_3 = arith.constant 0 : index
    %0 = vector.load %arg1[%c0, %c0_0, %c0_1, %c0_2, %c0_3] : memref<8x1x1x4x16xf32, #tpu.memory_space<vmem>>, vector<8x1x1x1x16xf32>
    %1 = vector.shape_cast %0 : vector<8x1x1x1x16xf32> to vector<8x16xf32>
    %cst = arith.constant 2.500000e-01 : f32
    %2 = vector.broadcast %cst : f32 to vector<8x16xf32>
    %3 = arith.mulf %1, %2 : vector<8x16xf32>
    %c0_4 = arith.constant 0 : index
    %c0_5 = arith.constant 0 : index
    %c0_6 = arith.constant 0 : index
    %c0_7 = arith.constant 0 : index
    %c0_8 = arith.constant 0 : index
    %4 = vector.load %arg2[%c0_4, %c0_5, %c0_6, %c0_7, %c0_8] : memref<8x1x1x4x16xf32, #tpu.memory_space<vmem>>, vector<8x1x1x1x16xf32>
    %5 = vector.shape_cast %4 : vector<8x1x1x1x16xf32> to vector<8x16xf32>
    %c0_9 = arith.constant 0 : index
    %c0_10 = arith.constant 0 : index
    %c0_11 = arith.constant 0 : index
    %c0_12 = arith.constant 0 : index
    %c0_13 = arith.constant 0 : index
    %6 = vector.load %arg3[%c0_9, %c0_10, %c0_11, %c0_12, %c0_13] : memref<8x1x1x4x16xf32, #tpu.memory_space<vmem>>, vector<8x1x1x1x16xf32>
    %7 = vector.shape_cast %6 : vector<8x1x1x1x16xf32> to vector<8x16xf32>
    %8 = arith.truncf %3 : vector<8x16xf32> to vector<8x16xbf16>
    %9 = arith.truncf %5 : vector<8x16xf32> to vector<8x16xbf16>
    %cst_14 = arith.constant dense<0.000000e+00> : vector<8x8xf32>
    %10 = tpu.matmul %8, %9, %cst_14 {dimension_numbers = #tpu.dot_dimension_numbers<[1], [1], [0], [0], [0, 0, 1, 0], [], []>} : vector<8x16xbf16>, vector<8x16xbf16>, vector<8x8xf32> -> vector<8x8xf32>
    %cst_15 = arith.constant dense<0xFF800000> : vector<8xf32>
    %11 = vector.multi_reduction <maximumf>, %10, %cst_15 [1] : vector<8x8xf32> to vector<8xf32>
    %12 = vector.shape_cast %11 : vector<8xf32> to vector<8x1xf32>
    %13 = vector.broadcast %12 : vector<8x1xf32> to vector<8x8xf32>
    %14 = arith.subf %10, %13 : vector<8x8xf32>
    %15 = math.exp %14 : vector<8x8xf32>
    %cst_16 = arith.constant dense<0.000000e+00> : vector<8xf32>
    %16 = vector.multi_reduction <add>, %15, %cst_16 [1] : vector<8x8xf32> to vector<8xf32>
    %17 = vector.shape_cast %16 : vector<8xf32> to vector<8x1xf32>
    %18 = vector.broadcast %17 : vector<8x1xf32> to vector<8x8xf32>
    %19 = arith.divf %15, %18 : vector<8x8xf32>
    %20 = arith.truncf %19 : vector<8x8xf32> to vector<8x8xbf16>
    %21 = arith.truncf %7 : vector<8x16xf32> to vector<8x16xbf16>
    %cst_17 = arith.constant dense<0.000000e+00> : vector<8x16xf32>
    %22 = tpu.matmul %20, %21, %cst_17 {dimension_numbers = #tpu.dot_dimension_numbers<[1], [0], [0], [1], [0, 0, 1, 1], [], []>} : vector<8x8xbf16>, vector<8x16xbf16>, vector<8x16xf32> -> vector<8x16xf32>
    %c0_18 = arith.constant 0 : index
    %c0_19 = arith.constant 0 : index
    %c0_20 = arith.constant 0 : index
    %c0_21 = arith.constant 0 : index
    %23 = vector.load %arg4[%c0_18, %c0_19, %c0_20, %c0_21] : memref<8x1x4x16xf32, #tpu.memory_space<vmem>>, vector<8x1x1x16xf32>
    %24 = vector.shape_cast %23 : vector<8x1x1x16xf32> to vector<8x16xf32>
    %25 = vector.shape_cast %22 : vector<8x16xf32> to vector<8x1x1x16xf32>
    tpu.vector_store %arg4[%c0_18, %c0_19, %c0_20, %c0_21], %25 {strides = array<i32>} : memref<8x1x4x16xf32, #tpu.memory_space<vmem>>, vector<8x1x1x16xf32>,
    %c0_22 = arith.constant 0 : index
    %c0_23 = arith.constant 0 : index
    %c0_24 = arith.constant 0 : index
    %c1 = arith.constant 1 : index
    %c0_25 = arith.constant 0 : index
    %26 = vector.load %arg1[%c0_22, %c0_23, %c0_24, %c1, %c0_25] : memref<8x1x1x4x16xf32, #tpu.memory_space<vmem>>, vector<8x1x1x1x16xf32>
    %27 = vector.shape_cast %26 : vector<8x1x1x1x16xf32> to vector<8x16xf32>
    %cst_26 = arith.constant 2.500000e-01 : f32
    %28 = vector.broadcast %cst_26 : f32 to vector<8x16xf32>
    %29 = arith.mulf %27, %28 : vector<8x16xf32>
    %c0_27 = arith.constant 0 : index
    %c0_28 = arith.constant 0 : index
    %c0_29 = arith.constant 0 : index
    %c1_30 = arith.constant 1 : index
    %c0_31 = arith.constant 0 : index
    %30 = vector.load %arg2[%c0_27, %c0_28, %c0_29, %c1_30, %c0_31] : memref<8x1x1x4x16xf32, #tpu.memory_space<vmem>>, vector<8x1x1x1x16xf32>
    %31 = vector.shape_cast %30 : vector<8x1x1x1x16xf32> to vector<8x16xf32>
    %c0_32 = arith.constant 0 : index
    %c0_33 = arith.constant 0 : index
    %c0_34 = arith.constant 0 : index
    %c1_35 = arith.constant 1 : index
    %c0_36 = arith.constant 0 : index
    %32 = vector.load %arg3[%c0_32, %c0_33, %c0_34, %c1_35, %c0_36] : memref<8x1x1x4x16xf32, #tpu.memory_space<vmem>>, vector<8x1x1x1x16xf32>
    %33 = vector.shape_cast %32 : vector<8x1x1x1x16xf32> to vector<8x16xf32>
    %34 = arith.truncf %29 : vector<8x16xf32> to vector<8x16xbf16>
    %35 = arith.truncf %31 : vector<8x16xf32> to vector<8x16xbf16>
    %cst_37 = arith.constant dense<0.000000e+00> : vector<8x8xf32>
    %36 = tpu.matmul %34, %35, %cst_37 {dimension_numbers = #tpu.dot_dimension_numbers<[1], [1], [0], [0], [0, 0, 1, 0], [], []>} : vector<8x16xbf16>, vector<8x16xbf16>, vector<8x8xf32> -> vector<8x8xf32>
    %cst_38 = arith.constant dense<0xFF800000> : vector<8xf32>
    %37 = vector.multi_reduction <maximumf>, %36, %cst_38 [1] : vector<8x8xf32> to vector<8xf32>
    %38 = vector.shape_cast %37 : vector<8xf32> to vector<8x1xf32>
    %39 = vector.broadcast %38 : vector<8x1xf32> to vector<8x8xf32>
    %40 = arith.subf %36, %39 : vector<8x8xf32>
    %41 = math.exp %40 : vector<8x8xf32>
    %cst_39 = arith.constant dense<0.000000e+00> : vector<8xf32>
    %42 = vector.multi_reduction <add>, %41, %cst_39 [1] : vector<8x8xf32> to vector<8xf32>
    %43 = vector.shape_cast %42 : vector<8xf32> to vector<8x1xf32>
    %44 = vector.broadcast %43 : vector<8x1xf32> to vector<8x8xf32>
    %45 = arith.divf %41, %44 : vector<8x8xf32>
    %46 = arith.truncf %45 : vector<8x8xf32> to vector<8x8xbf16>
    %47 = arith.truncf %33 : vector<8x16xf32> to vector<8x16xbf16>
    %cst_40 = arith.constant dense<0.000000e+00> : vector<8x16xf32>
    %48 = tpu.matmul %46, %47, %cst_40 {dimension_numbers = #tpu.dot_dimension_numbers<[1], [0], [0], [1], [0, 0, 1, 1], [], []>} : vector<8x8xbf16>, vector<8x16xbf16>, vector<8x16xf32> -> vector<8x16xf32>
    %c0_41 = arith.constant 0 : index
    %c0_42 = arith.constant 0 : index
    %c1_43 = arith.constant 1 : index
    %c0_44 = arith.constant 0 : index
    %49 = vector.load %arg4[%c0_41, %c0_42, %c1_43, %c0_44] : memref<8x1x4x16xf32, #tpu.memory_space<vmem>>, vector<8x1x1x16xf32>
    %50 = vector.shape_cast %49 : vector<8x1x1x16xf32> to vector<8x16xf32>
    %51 = vector.shape_cast %48 : vector<8x16xf32> to vector<8x1x1x16xf32>
    tpu.vector_store %arg4[%c0_41, %c0_42, %c1_43, %c0_44], %51 {strides = array<i32>} : memref<8x1x4x16xf32, #tpu.memory_space<vmem>>, vector<8x1x1x16xf32>,
    %c0_45 = arith.constant 0 : index
    %c0_46 = arith.constant 0 : index
    %c0_47 = arith.constant 0 : index
    %c2 = arith.constant 2 : index
    %c0_48 = arith.constant 0 : index
    %52 = vector.load %arg1[%c0_45, %c0_46, %c0_47, %c2, %c0_48] : memref<8x1x1x4x16xf32, #tpu.memory_space<vmem>>, vector<8x1x1x1x16xf32>
    %53 = vector.shape_cast %52 : vector<8x1x1x1x16xf32> to vector<8x16xf32>
    %cst_49 = arith.constant 2.500000e-01 : f32
    %54 = vector.broadcast %cst_49 : f32 to vector<8x16xf32>
    %55 = arith.mulf %53, %54 : vector<8x16xf32>
    %c0_50 = arith.constant 0 : index
    %c0_51 = arith.constant 0 : index
    %c0_52 = arith.constant 0 : index
    %c2_53 = arith.constant 2 : index
    %c0_54 = arith.constant 0 : index
    %56 = vector.load %arg2[%c0_50, %c0_51, %c0_52, %c2_53, %c0_54] : memref<8x1x1x4x16xf32, #tpu.memory_space<vmem>>, vector<8x1x1x1x16xf32>
    %57 = vector.shape_cast %56 : vector<8x1x1x1x16xf32> to vector<8x16xf32>
    %c0_55 = arith.constant 0 : index
    %c0_56 = arith.constant 0 : index
    %c0_57 = arith.constant 0 : index
    %c2_58 = arith.constant 2 : index
    %c0_59 = arith.constant 0 : index
    %58 = vector.load %arg3[%c0_55, %c0_56, %c0_57, %c2_58, %c0_59] : memref<8x1x1x4x16xf32, #tpu.memory_space<vmem>>, vector<8x1x1x1x16xf32>
    %59 = vector.shape_cast %58 : vector<8x1x1x1x16xf32> to vector<8x16xf32>
    %60 = arith.truncf %55 : vector<8x16xf32> to vector<8x16xbf16>
    %61 = arith.truncf %57 : vector<8x16xf32> to vector<8x16xbf16>
    %cst_60 = arith.constant dense<0.000000e+00> : vector<8x8xf32>
    %62 = tpu.matmul %60, %61, %cst_60 {dimension_numbers = #tpu.dot_dimension_numbers<[1], [1], [0], [0], [0, 0, 1, 0], [], []>} : vector<8x16xbf16>, vector<8x16xbf16>, vector<8x8xf32> -> vector<8x8xf32>
    %cst_61 = arith.constant dense<0xFF800000> : vector<8xf32>
    %63 = vector.multi_reduction <maximumf>, %62, %cst_61 [1] : vector<8x8xf32> to vector<8xf32>
    %64 = vector.shape_cast %63 : vector<8xf32> to vector<8x1xf32>
    %65 = vector.broadcast %64 : vector<8x1xf32> to vector<8x8xf32>
    %66 = arith.subf %62, %65 : vector<8x8xf32>
    %67 = math.exp %66 : vector<8x8xf32>
    %cst_62 = arith.constant dense<0.000000e+00> : vector<8xf32>
    %68 = vector.multi_reduction <add>, %67, %cst_62 [1] : vector<8x8xf32> to vector<8xf32>
    %69 = vector.shape_cast %68 : vector<8xf32> to vector<8x1xf32>
    %70 = vector.broadcast %69 : vector<8x1xf32> to vector<8x8xf32>
    %71 = arith.divf %67, %70 : vector<8x8xf32>
    %72 = arith.truncf %71 : vector<8x8xf32> to vector<8x8xbf16>
    %73 = arith.truncf %59 : vector<8x16xf32> to vector<8x16xbf16>
    %cst_63 = arith.constant dense<0.000000e+00> : vector<8x16xf32>
    %74 = tpu.matmul %72, %73, %cst_63 {dimension_numbers = #tpu.dot_dimension_numbers<[1], [0], [0], [1], [0, 0, 1, 1], [], []>} : vector<8x8xbf16>, vector<8x16xbf16>, vector<8x16xf32> -> vector<8x16xf32>
    %c0_64 = arith.constant 0 : index
    %c0_65 = arith.constant 0 : index
    %c2_66 = arith.constant 2 : index
    %c0_67 = arith.constant 0 : index
    %75 = vector.load %arg4[%c0_64, %c0_65, %c2_66, %c0_67] : memref<8x1x4x16xf32, #tpu.memory_space<vmem>>, vector<8x1x1x16xf32>
    %76 = vector.shape_cast %75 : vector<8x1x1x16xf32> to vector<8x16xf32>
    %77 = vector.shape_cast %74 : vector<8x16xf32> to vector<8x1x1x16xf32>
    tpu.vector_store %arg4[%c0_64, %c0_65, %c2_66, %c0_67], %77 {strides = array<i32>} : memref<8x1x4x16xf32, #tpu.memory_space<vmem>>, vector<8x1x1x16xf32>,
    %c0_68 = arith.constant 0 : index
    %c0_69 = arith.constant 0 : index
    %c0_70 = arith.constant 0 : index
    %c3 = arith.constant 3 : index
    %c0_71 = arith.constant 0 : index
    %78 = vector.load %arg1[%c0_68, %c0_69, %c0_70, %c3, %c0_71] : memref<8x1x1x4x16xf32, #tpu.memory_space<vmem>>, vector<8x1x1x1x16xf32>
    %79 = vector.shape_cast %78 : vector<8x1x1x1x16xf32> to vector<8x16xf32>
    %cst_72 = arith.constant 2.500000e-01 : f32
    %80 = vector.broadcast %cst_72 : f32 to vector<8x16xf32>
    %81 = arith.mulf %79, %80 : vector<8x16xf32>
    %c0_73 = arith.constant 0 : index
    %c0_74 = arith.constant 0 : index
    %c0_75 = arith.constant 0 : index
    %c3_76 = arith.constant 3 : index
    %c0_77 = arith.constant 0 : index
    %82 = vector.load %arg2[%c0_73, %c0_74, %c0_75, %c3_76, %c0_77] : memref<8x1x1x4x16xf32, #tpu.memory_space<vmem>>, vector<8x1x1x1x16xf32>
    %83 = vector.shape_cast %82 : vector<8x1x1x1x16xf32> to vector<8x16xf32>
    %c0_78 = arith.constant 0 : index
    %c0_79 = arith.constant 0 : index
    %c0_80 = arith.constant 0 : index
    %c3_81 = arith.constant 3 : index
    %c0_82 = arith.constant 0 : index
    %84 = vector.load %arg3[%c0_78, %c0_79, %c0_80, %c3_81, %c0_82] : memref<8x1x1x4x16xf32, #tpu.memory_space<vmem>>, vector<8x1x1x1x16xf32>
    %85 = vector.shape_cast %84 : vector<8x1x1x1x16xf32> to vector<8x16xf32>
    %86 = arith.truncf %81 : vector<8x16xf32> to vector<8x16xbf16>
    %87 = arith.truncf %83 : vector<8x16xf32> to vector<8x16xbf16>
    %cst_83 = arith.constant dense<0.000000e+00> : vector<8x8xf32>
    %88 = tpu.matmul %86, %87, %cst_83 {dimension_numbers = #tpu.dot_dimension_numbers<[1], [1], [0], [0], [0, 0, 1, 0], [], []>} : vector<8x16xbf16>, vector<8x16xbf16>, vector<8x8xf32> -> vector<8x8xf32>
    %cst_84 = arith.constant dense<0xFF800000> : vector<8xf32>
    %89 = vector.multi_reduction <maximumf>, %88, %cst_84 [1] : vector<8x8xf32> to vector<8xf32>
    %90 = vector.shape_cast %89 : vector<8xf32> to vector<8x1xf32>
    %91 = vector.broadcast %90 : vector<8x1xf32> to vector<8x8xf32>
    %92 = arith.subf %88, %91 : vector<8x8xf32>
    %93 = math.exp %92 : vector<8x8xf32>
    %cst_85 = arith.constant dense<0.000000e+00> : vector<8xf32>
    %94 = vector.multi_reduction <add>, %93, %cst_85 [1] : vector<8x8xf32> to vector<8xf32>
    %95 = vector.shape_cast %94 : vector<8xf32> to vector<8x1xf32>
    %96 = vector.broadcast %95 : vector<8x1xf32> to vector<8x8xf32>
    %97 = arith.divf %93, %96 : vector<8x8xf32>
    %98 = arith.truncf %97 : vector<8x8xf32> to vector<8x8xbf16>
    %99 = arith.truncf %85 : vector<8x16xf32> to vector<8x16xbf16>
    %cst_86 = arith.constant dense<0.000000e+00> : vector<8x16xf32>
    %100 = tpu.matmul %98, %99, %cst_86 {dimension_numbers = #tpu.dot_dimension_numbers<[1], [0], [0], [1], [0, 0, 1, 1], [], []>} : vector<8x8xbf16>, vector<8x16xbf16>, vector<8x16xf32> -> vector<8x16xf32>
    %c0_87 = arith.constant 0 : index
    %c0_88 = arith.constant 0 : index
    %c3_89 = arith.constant 3 : index
    %c0_90 = arith.constant 0 : index
    %101 = vector.load %arg4[%c0_87, %c0_88, %c3_89, %c0_90] : memref<8x1x4x16xf32, #tpu.memory_space<vmem>>, vector<8x1x1x16xf32>
    %102 = vector.shape_cast %101 : vector<8x1x1x16xf32> to vector<8x16xf32>
    %103 = vector.shape_cast %100 : vector<8x16xf32> to vector<8x1x1x16xf32>
    tpu.vector_store %arg4[%c0_87, %c0_88, %c3_89, %c0_90], %103 {strides = array<i32>} : memref<8x1x4x16xf32, #tpu.memory_space<vmem>>, vector<8x1x1x16xf32>,
    return
  }
  func.func @transform_0(%arg0: i32) -> (i32, i32, i32, i32, i32) {
    %c0_i32 = arith.constant 0 : i32
    %c0_i32_0 = arith.constant 0 : i32
    %c0_i32_1 = arith.constant 0 : i32
    %c0_i32_2 = arith.constant 0 : i32
    %c0_i32_3 = arith.constant 0 : i32
    return %c0_i32, %arg0, %c0_i32_0, %c0_i32_1, %c0_i32_2 : i32, i32, i32, i32, i32
  }
  func.func @transform_1(%arg0: i32) -> (i32, i32, i32, i32, i32) {
    %c0_i32 = arith.constant 0 : i32
    %c1_i32 = arith.constant 1 : i32
    %c0_i32_0 = arith.constant 0 : i32
    %c0_i32_1 = arith.constant 0 : i32
    %c0_i32_2 = arith.constant 0 : i32
    return %c0_i32, %arg0, %c1_i32, %c0_i32_0, %c0_i32_1 : i32, i32, i32, i32, i32
  }
  func.func @transform_2(%arg0: i32) -> (i32, i32, i32, i32, i32) {
    %c0_i32 = arith.constant 0 : i32
    %c2_i32 = arith.constant 2 : i32
    %c0_i32_0 = arith.constant 0 : i32
    %c0_i32_1 = arith.constant 0 : i32
    %c0_i32_2 = arith.constant 0 : i32
    return %c0_i32, %arg0, %c2_i32, %c0_i32_0, %c0_i32_1 : i32, i32, i32, i32, i32
  }
  func.func @transform_3(%arg0: i32) -> (i32, i32, i32, i32) {
    %c0_i32 = arith.constant 0 : i32
    %c0_i32_0 = arith.constant 0 : i32
    %c0_i32_1 = arith.constant 0 : i32
    %c0_i32_2 = arith.constant 0 : i32
    return %c0_i32, %arg0, %c0_i32_0, %c0_i32_1 : i32, i32, i32, i32
  }
}

module attributes {stable_mosaic.version = 11 : i64} {
  func.func @_outproj_ln2_gate_kernel(%arg0: i32, %arg1: memref<16x64xf32, #tpu.memory_space<vmem>>, %arg2: memref<16x64xf32, #tpu.memory_space<vmem>>, %arg3: memref<64x64xbf16, #tpu.memory_space<vmem>>, %arg4: memref<1x64xf32, #tpu.memory_space<vmem>>, %arg5: memref<1x64xf32, #tpu.memory_space<vmem>>, %arg6: memref<1x64xf32, #tpu.memory_space<vmem>>, %arg7: memref<64x128xf32, #tpu.memory_space<vmem>>, %arg8: memref<16x64xf32, #tpu.memory_space<vmem>>, %arg9: memref<16x128xf32, #tpu.memory_space<vmem>>) attributes {dimension_semantics = [#tpu.dimension_semantics<parallel>], iteration_bounds = array<i64: 1>, scalar_prefetch = 0 : i64, scratch_operands = 0 : i64, tpu.core_type = #tpu.core_type<tc>, window_params = [{transform_indices = @transform_0, window_bounds = array<i64: 16, 64>}, {transform_indices = @transform_1, window_bounds = array<i64: 16, 64>}, {pipeline_mode = #tpu.pipeline_mode<synchronous>, transform_indices = @transform_2, window_bounds = array<i64: 64, 64>}, {pipeline_mode = #tpu.pipeline_mode<synchronous>, transform_indices = @transform_3, window_bounds = array<i64: 1, 64>}, {pipeline_mode = #tpu.pipeline_mode<synchronous>, transform_indices = @transform_4, window_bounds = array<i64: 1, 64>}, {pipeline_mode = #tpu.pipeline_mode<synchronous>, transform_indices = @transform_5, window_bounds = array<i64: 1, 64>}, {pipeline_mode = #tpu.pipeline_mode<synchronous>, transform_indices = @transform_6, window_bounds = array<i64: 64, 128>}, {transform_indices = @transform_7, window_bounds = array<i64: 16, 64>}, {transform_indices = @transform_8, window_bounds = array<i64: 16, 128>}]} {
    %c0 = arith.constant 0 : index
    %c0_0 = arith.constant 0 : index
    %0 = vector.load %arg1[%c0, %c0_0] : memref<16x64xf32, #tpu.memory_space<vmem>>, vector<16x64xf32>
    %c0_1 = arith.constant 0 : index
    %c0_2 = arith.constant 0 : index
    %1 = vector.load %arg3[%c0_1, %c0_2] : memref<64x64xbf16, #tpu.memory_space<vmem>>, vector<64x64xbf16>
    %2 = arith.truncf %0 : vector<16x64xf32> to vector<16x64xbf16>
    %cst = arith.constant dense<0.000000e+00> : vector<16x64xf32>
    %3 = tpu.matmul %2, %1, %cst {dimension_numbers = #tpu.dot_dimension_numbers<[1], [0], [0], [1], [0, 0, 1, 1], [], []>} : vector<16x64xbf16>, vector<64x64xbf16>, vector<16x64xf32> -> vector<16x64xf32>
    %c0_3 = arith.constant 0 : index
    %c0_4 = arith.constant 0 : index
    %4 = vector.load %arg4[%c0_3, %c0_4] : memref<1x64xf32, #tpu.memory_space<vmem>>, vector<1x64xf32>
    %5 = vector.broadcast %4 : vector<1x64xf32> to vector<16x64xf32>
    %6 = arith.addf %3, %5 : vector<16x64xf32>
    %c0_5 = arith.constant 0 : index
    %c0_6 = arith.constant 0 : index
    %7 = vector.load %arg2[%c0_5, %c0_6] : memref<16x64xf32, #tpu.memory_space<vmem>>, vector<16x64xf32>
    %8 = arith.addf %7, %6 : vector<16x64xf32>
    %c0_7 = arith.constant 0 : index
    %c0_8 = arith.constant 0 : index
    %9 = vector.load %arg8[%c0_7, %c0_8] : memref<16x64xf32, #tpu.memory_space<vmem>>, vector<16x64xf32>
    tpu.vector_store %arg8[%c0_7, %c0_8], %8 {strides = array<i32>} : memref<16x64xf32, #tpu.memory_space<vmem>>, vector<16x64xf32>,
    %cst_9 = arith.constant dense<0.000000e+00> : vector<16xf32>
    %10 = vector.multi_reduction <add>, %8, %cst_9 [1] : vector<16x64xf32> to vector<16xf32>
    %11 = vector.shape_cast %10 : vector<16xf32> to vector<16x1xf32>
    %cst_10 = arith.constant 6.400000e+01 : f32
    %12 = vector.broadcast %cst_10 : f32 to vector<16x1xf32>
    %13 = arith.divf %11, %12 : vector<16x1xf32>
    %14 = vector.broadcast %13 : vector<16x1xf32> to vector<16x64xf32>
    %15 = arith.subf %8, %14 : vector<16x64xf32>
    %16 = arith.mulf %15, %15 : vector<16x64xf32>
    %cst_11 = arith.constant dense<0.000000e+00> : vector<16xf32>
    %17 = vector.multi_reduction <add>, %16, %cst_11 [1] : vector<16x64xf32> to vector<16xf32>
    %18 = vector.shape_cast %17 : vector<16xf32> to vector<16x1xf32>
    %cst_12 = arith.constant 6.400000e+01 : f32
    %19 = vector.broadcast %cst_12 : f32 to vector<16x1xf32>
    %20 = arith.divf %18, %19 : vector<16x1xf32>
    %21 = vector.broadcast %13 : vector<16x1xf32> to vector<16x64xf32>
    %22 = arith.subf %8, %21 : vector<16x64xf32>
    %cst_13 = arith.constant 9.99999974E-6 : f32
    %23 = vector.broadcast %cst_13 : f32 to vector<16x1xf32>
    %24 = arith.addf %20, %23 : vector<16x1xf32>
    %25 = math.rsqrt %24 : vector<16x1xf32>
    %26 = vector.broadcast %25 : vector<16x1xf32> to vector<16x64xf32>
    %27 = arith.mulf %22, %26 : vector<16x64xf32>
    %c0_14 = arith.constant 0 : index
    %c0_15 = arith.constant 0 : index
    %28 = vector.load %arg5[%c0_14, %c0_15] : memref<1x64xf32, #tpu.memory_space<vmem>>, vector<1x64xf32>
    %29 = vector.broadcast %28 : vector<1x64xf32> to vector<16x64xf32>
    %30 = arith.mulf %27, %29 : vector<16x64xf32>
    %c0_16 = arith.constant 0 : index
    %c0_17 = arith.constant 0 : index
    %31 = vector.load %arg6[%c0_16, %c0_17] : memref<1x64xf32, #tpu.memory_space<vmem>>, vector<1x64xf32>
    %32 = vector.broadcast %31 : vector<1x64xf32> to vector<16x64xf32>
    %33 = arith.addf %30, %32 : vector<16x64xf32>
    %c0_18 = arith.constant 0 : index
    %c0_19 = arith.constant 0 : index
    %34 = vector.load %arg7[%c0_18, %c0_19] : memref<64x128xf32, #tpu.memory_space<vmem>>, vector<64x128xf32>
    %cst_20 = arith.constant dense<0.000000e+00> : vector<16x128xf32>
    %35 = tpu.matmul %33, %34, %cst_20 {dimension_numbers = #tpu.dot_dimension_numbers<[1], [0], [0], [1], [0, 0, 1, 1], [], []>} : vector<16x64xf32>, vector<64x128xf32>, vector<16x128xf32> -> vector<16x128xf32>
    %c0_21 = arith.constant 0 : index
    %c0_22 = arith.constant 0 : index
    %36 = vector.load %arg9[%c0_21, %c0_22] : memref<16x128xf32, #tpu.memory_space<vmem>>, vector<16x128xf32>
    tpu.vector_store %arg9[%c0_21, %c0_22], %35 {strides = array<i32>} : memref<16x128xf32, #tpu.memory_space<vmem>>, vector<16x128xf32>,
    return
  }
  func.func @transform_0(%arg0: i32) -> (i32, i32) {
    %c0_i32 = arith.constant 0 : i32
    %c0_i32_0 = arith.constant 0 : i32
    return %arg0, %c0_i32 : i32, i32
  }
  func.func @transform_1(%arg0: i32) -> (i32, i32) {
    %c0_i32 = arith.constant 0 : i32
    %c0_i32_0 = arith.constant 0 : i32
    return %arg0, %c0_i32 : i32, i32
  }
  func.func @transform_2(%arg0: i32) -> (i32, i32) {
    %c0_i32 = arith.constant 0 : i32
    %c0_i32_0 = arith.constant 0 : i32
    %c0_i32_1 = arith.constant 0 : i32
    return %c0_i32, %c0_i32_0 : i32, i32
  }
  func.func @transform_3(%arg0: i32) -> (i32, i32) {
    %c0_i32 = arith.constant 0 : i32
    %c0_i32_0 = arith.constant 0 : i32
    %c0_i32_1 = arith.constant 0 : i32
    return %c0_i32, %c0_i32_0 : i32, i32
  }
  func.func @transform_4(%arg0: i32) -> (i32, i32) {
    %c0_i32 = arith.constant 0 : i32
    %c0_i32_0 = arith.constant 0 : i32
    %c0_i32_1 = arith.constant 0 : i32
    return %c0_i32, %c0_i32_0 : i32, i32
  }
  func.func @transform_5(%arg0: i32) -> (i32, i32) {
    %c0_i32 = arith.constant 0 : i32
    %c0_i32_0 = arith.constant 0 : i32
    %c0_i32_1 = arith.constant 0 : i32
    return %c0_i32, %c0_i32_0 : i32, i32
  }
  func.func @transform_6(%arg0: i32) -> (i32, i32) {
    %c0_i32 = arith.constant 0 : i32
    %c0_i32_0 = arith.constant 0 : i32
    %c0_i32_1 = arith.constant 0 : i32
    return %c0_i32, %c0_i32_0 : i32, i32
  }
  func.func @transform_7(%arg0: i32) -> (i32, i32) {
    %c0_i32 = arith.constant 0 : i32
    %c0_i32_0 = arith.constant 0 : i32
    return %arg0, %c0_i32 : i32, i32
  }
  func.func @transform_8(%arg0: i32) -> (i32, i32) {
    %c0_i32 = arith.constant 0 : i32
    %c0_i32_0 = arith.constant 0 : i32
    return %arg0, %c0_i32 : i32, i32
  }
}

module attributes {stable_mosaic.version = 11 : i64} {
  func.func @_moe_kernel(%arg0: i32, %arg1: i32, %arg2: i32, %arg3: memref<4xi32, #tpu.memory_space<smem>>, %arg4: memref<1xi32, #tpu.memory_space<smem>>, %arg5: memref<16x64xf32, #tpu.memory_space<vmem>>, %arg6: memref<1x64xf32, #tpu.memory_space<vmem>>, %arg7: memref<1x64xf32, #tpu.memory_space<vmem>>, %arg8: memref<1x64x256xbf16, #tpu.memory_space<vmem>>, %arg9: memref<1x1x256xf32, #tpu.memory_space<vmem>>, %arg10: memref<1x256x64xbf16, #tpu.memory_space<vmem>>, %arg11: memref<1x1x64xf32, #tpu.memory_space<vmem>>, %arg12: memref<1x16x1xf32, #tpu.memory_space<vmem>>, %arg13: memref<16x64xf32, #tpu.memory_space<vmem>>, %arg14: memref<16x64xbf16, #tpu.memory_space<vmem>>, %arg15: memref<16x64xf32, #tpu.memory_space<vmem>>) attributes {dimension_semantics = [#tpu.dimension_semantics<parallel>, #tpu.dimension_semantics<arbitrary>, #tpu.dimension_semantics<arbitrary>], iteration_bounds = array<i64: 1, 4, 1>, scalar_prefetch = 2 : i64, scratch_operands = 2 : i64, tpu.core_type = #tpu.core_type<tc>, window_params = [{transform_indices = @transform_0, window_bounds = array<i64: 16, 64>}, {pipeline_mode = #tpu.pipeline_mode<synchronous>, transform_indices = @transform_1, window_bounds = array<i64: 1, 64>}, {pipeline_mode = #tpu.pipeline_mode<synchronous>, transform_indices = @transform_2, window_bounds = array<i64: 1, 64>}, {transform_indices = @transform_3, window_bounds = array<i64: 1, 64, 256>}, {transform_indices = @transform_4, window_bounds = array<i64: 1, 1, 256>}, {transform_indices = @transform_5, window_bounds = array<i64: 1, 256, 64>}, {transform_indices = @transform_6, window_bounds = array<i64: 1, 1, 64>}, {transform_indices = @transform_7, window_bounds = array<i64: 1, 16, 1>}, {transform_indices = @transform_8, window_bounds = array<i64: 16, 64>}]} {
    %c0_i32 = arith.constant 0 : i32
    %0 = arith.cmpi eq, %arg1, %c0_i32 : i32
    %c0_i32_0 = arith.constant 0 : i32
    %1 = arith.cmpi eq, %arg2, %c0_i32_0 : i32
    %2 = arith.andi %0, %1 : i1
    %3 = arith.extui %2 : i1 to i32
    %c0_i32_1 = arith.constant 0 : i32
    %4 = arith.cmpi ne, %3, %c0_i32_1 : i32
    scf.if %4 {
      %c0_5 = arith.constant 0 : index
      %c0_6 = arith.constant 0 : index
      %14 = vector.load %arg5[%c0_5, %c0_6] : memref<16x64xf32, #tpu.memory_space<vmem>>, vector<16x64xf32>
      %c0_7 = arith.constant 0 : index
      %c0_8 = arith.constant 0 : index
      %15 = vector.load %arg15[%c0_7, %c0_8] : memref<16x64xf32, #tpu.memory_space<vmem>>, vector<16x64xf32>
      tpu.vector_store %arg15[%c0_7, %c0_8], %14 {strides = array<i32>} : memref<16x64xf32, #tpu.memory_space<vmem>>, vector<16x64xf32>,
      %cst = arith.constant dense<0.000000e+00> : vector<16xf32>
      %16 = vector.multi_reduction <add>, %14, %cst [1] : vector<16x64xf32> to vector<16xf32>
      %17 = vector.shape_cast %16 : vector<16xf32> to vector<16x1xf32>
      %cst_9 = arith.constant 6.400000e+01 : f32
      %18 = vector.broadcast %cst_9 : f32 to vector<16x1xf32>
      %19 = arith.divf %17, %18 : vector<16x1xf32>
      %20 = vector.broadcast %19 : vector<16x1xf32> to vector<16x64xf32>
      %21 = arith.subf %14, %20 : vector<16x64xf32>
      %22 = arith.mulf %21, %21 : vector<16x64xf32>
      %cst_10 = arith.constant dense<0.000000e+00> : vector<16xf32>
      %23 = vector.multi_reduction <add>, %22, %cst_10 [1] : vector<16x64xf32> to vector<16xf32>
      %24 = vector.shape_cast %23 : vector<16xf32> to vector<16x1xf32>
      %cst_11 = arith.constant 6.400000e+01 : f32
      %25 = vector.broadcast %cst_11 : f32 to vector<16x1xf32>
      %26 = arith.divf %24, %25 : vector<16x1xf32>
      %27 = vector.broadcast %19 : vector<16x1xf32> to vector<16x64xf32>
      %28 = arith.subf %14, %27 : vector<16x64xf32>
      %cst_12 = arith.constant 9.99999974E-6 : f32
      %29 = vector.broadcast %cst_12 : f32 to vector<16x1xf32>
      %30 = arith.addf %26, %29 : vector<16x1xf32>
      %31 = math.rsqrt %30 : vector<16x1xf32>
      %32 = vector.broadcast %31 : vector<16x1xf32> to vector<16x64xf32>
      %33 = arith.mulf %28, %32 : vector<16x64xf32>
      %c0_13 = arith.constant 0 : index
      %c0_14 = arith.constant 0 : index
      %34 = vector.load %arg6[%c0_13, %c0_14] : memref<1x64xf32, #tpu.memory_space<vmem>>, vector<1x64xf32>
      %35 = vector.broadcast %34 : vector<1x64xf32> to vector<16x64xf32>
      %36 = arith.mulf %33, %35 : vector<16x64xf32>
      %c0_15 = arith.constant 0 : index
      %c0_16 = arith.constant 0 : index
      %37 = vector.load %arg7[%c0_15, %c0_16] : memref<1x64xf32, #tpu.memory_space<vmem>>, vector<1x64xf32>
      %38 = vector.broadcast %37 : vector<1x64xf32> to vector<16x64xf32>
      %39 = arith.addf %36, %38 : vector<16x64xf32>
      %40 = arith.truncf %39 : vector<16x64xf32> to vector<16x64xbf16>
      %c0_17 = arith.constant 0 : index
      %c0_18 = arith.constant 0 : index
      %41 = vector.load %arg14[%c0_17, %c0_18] : memref<16x64xbf16, #tpu.memory_space<vmem>>, vector<16x64xbf16>
      tpu.vector_store %arg14[%c0_17, %c0_18], %40 {strides = array<i32>} : memref<16x64xbf16, #tpu.memory_space<vmem>>, vector<16x64xbf16>,
    } else {
    }
    %c0 = arith.constant 0 : index
    %5 = memref.load %arg4[%c0] : memref<1xi32, #tpu.memory_space<smem>>
    %6 = arith.cmpi slt, %arg1, %5 : i32
    %7 = arith.extui %6 : i1 to i32
    %c0_i32_2 = arith.constant 0 : i32
    %8 = arith.cmpi ne, %7, %c0_i32_2 : i32
    scf.if %8 {
      %c0_5 = arith.constant 0 : index
      %c0_6 = arith.constant 0 : index
      %14 = vector.load %arg14[%c0_5, %c0_6] : memref<16x64xbf16, #tpu.memory_space<vmem>>, vector<16x64xbf16>
      %c0_7 = arith.constant 0 : index
      %c0_8 = arith.constant 0 : index
      %c0_9 = arith.constant 0 : index
      %15 = vector.load %arg8[%c0_7, %c0_8, %c0_9] : memref<1x64x256xbf16, #tpu.memory_space<vmem>>, vector<1x64x256xbf16>
      %16 = vector.shape_cast %15 : vector<1x64x256xbf16> to vector<64x256xbf16>
      %cst = arith.constant dense<0.000000e+00> : vector<16x256xf32>
      %17 = tpu.matmul %14, %16, %cst {dimension_numbers = #tpu.dot_dimension_numbers<[1], [0], [0], [1], [0, 0, 1, 1], [], []>} : vector<16x64xbf16>, vector<64x256xbf16>, vector<16x256xf32> -> vector<16x256xf32>
      %c0_10 = arith.constant 0 : index
      %c0_11 = arith.constant 0 : index
      %c0_12 = arith.constant 0 : index
      %18 = vector.load %arg9[%c0_10, %c0_11, %c0_12] : memref<1x1x256xf32, #tpu.memory_space<vmem>>, vector<1x1x256xf32>
      %19 = vector.shape_cast %18 : vector<1x1x256xf32> to vector<1x256xf32>
      %20 = vector.broadcast %19 : vector<1x256xf32> to vector<16x256xf32>
      %21 = arith.addf %17, %20 : vector<16x256xf32>
      %cst_13 = arith.constant 1.702000e+00 : f32
      %22 = vector.broadcast %cst_13 : f32 to vector<16x256xf32>
      %23 = arith.mulf %22, %21 : vector<16x256xf32>
      %24 = arith.negf %23 : vector<16x256xf32>
      %25 = math.exp %24 : vector<16x256xf32>
      %cst_14 = arith.constant 1.000000e+00 : f32
      %26 = vector.broadcast %cst_14 : f32 to vector<16x256xf32>
      %27 = arith.addf %26, %25 : vector<16x256xf32>
      %28 = arith.divf %26, %27 : vector<16x256xf32>
      %29 = arith.mulf %21, %28 : vector<16x256xf32>
      %c0_15 = arith.constant 0 : index
      %c0_16 = arith.constant 0 : index
      %c0_17 = arith.constant 0 : index
      %30 = vector.load %arg10[%c0_15, %c0_16, %c0_17] : memref<1x256x64xbf16, #tpu.memory_space<vmem>>, vector<1x256x64xbf16>
      %31 = vector.shape_cast %30 : vector<1x256x64xbf16> to vector<256x64xbf16>
      %32 = arith.truncf %29 : vector<16x256xf32> to vector<16x256xbf16>
      %cst_18 = arith.constant dense<0.000000e+00> : vector<16x64xf32>
      %33 = tpu.matmul %32, %31, %cst_18 {dimension_numbers = #tpu.dot_dimension_numbers<[1], [0], [0], [1], [0, 0, 1, 1], [], []>} : vector<16x256xbf16>, vector<256x64xbf16>, vector<16x64xf32> -> vector<16x64xf32>
      %c0_19 = arith.constant 0 : index
      %c0_20 = arith.constant 0 : index
      %c0_21 = arith.constant 0 : index
      %34 = vector.load %arg12[%c0_19, %c0_20, %c0_21] : memref<1x16x1xf32, #tpu.memory_space<vmem>>, vector<1x16x1xf32>
      %35 = vector.shape_cast %34 : vector<1x16x1xf32> to vector<16x1xf32>
      %c0_i32_22 = arith.constant 0 : i32
      %36 = arith.cmpi eq, %arg2, %c0_i32_22 : i32
      %37 = arith.extui %36 : i1 to i32
      %c0_i32_23 = arith.constant 0 : i32
      %38 = arith.cmpi ne, %37, %c0_i32_23 : i32
      scf.if %38 {
        %c0_28 = arith.constant 0 : index
        %c0_29 = arith.constant 0 : index
        %44 = vector.load %arg15[%c0_28, %c0_29] : memref<16x64xf32, #tpu.memory_space<vmem>>, vector<16x64xf32>
        %c0_30 = arith.constant 0 : index
        %c0_31 = arith.constant 0 : index
        %c0_32 = arith.constant 0 : index
        %45 = vector.load %arg11[%c0_30, %c0_31, %c0_32] : memref<1x1x64xf32, #tpu.memory_space<vmem>>, vector<1x1x64xf32>
        %46 = vector.shape_cast %45 : vector<1x1x64xf32> to vector<1x64xf32>
        %47 = vector.broadcast %35 : vector<16x1xf32> to vector<16x64xf32>
        %48 = vector.broadcast %46 : vector<1x64xf32> to vector<16x64xf32>
        %49 = arith.mulf %47, %48 : vector<16x64xf32>
        %50 = arith.addf %44, %49 : vector<16x64xf32>
        %c0_33 = arith.constant 0 : index
        %c0_34 = arith.constant 0 : index
        %51 = vector.load %arg15[%c0_33, %c0_34] : memref<16x64xf32, #tpu.memory_space<vmem>>, vector<16x64xf32>
        tpu.vector_store %arg15[%c0_33, %c0_34], %50 {strides = array<i32>} : memref<16x64xf32, #tpu.memory_space<vmem>>, vector<16x64xf32>,
      } else {
      }
      %c0_24 = arith.constant 0 : index
      %c0_25 = arith.constant 0 : index
      %39 = vector.load %arg15[%c0_24, %c0_25] : memref<16x64xf32, #tpu.memory_space<vmem>>, vector<16x64xf32>
      %40 = vector.broadcast %35 : vector<16x1xf32> to vector<16x64xf32>
      %41 = arith.mulf %40, %33 : vector<16x64xf32>
      %42 = arith.addf %39, %41 : vector<16x64xf32>
      %c0_26 = arith.constant 0 : index
      %c0_27 = arith.constant 0 : index
      %43 = vector.load %arg15[%c0_26, %c0_27] : memref<16x64xf32, #tpu.memory_space<vmem>>, vector<16x64xf32>
      tpu.vector_store %arg15[%c0_26, %c0_27], %42 {strides = array<i32>} : memref<16x64xf32, #tpu.memory_space<vmem>>, vector<16x64xf32>,
    } else {
    }
    %c3_i32 = arith.constant 3 : i32
    %9 = arith.cmpi eq, %arg1, %c3_i32 : i32
    %c0_i32_3 = arith.constant 0 : i32
    %10 = arith.cmpi eq, %arg2, %c0_i32_3 : i32
    %11 = arith.andi %9, %10 : i1
    %12 = arith.extui %11 : i1 to i32
    %c0_i32_4 = arith.constant 0 : i32
    %13 = arith.cmpi ne, %12, %c0_i32_4 : i32
    scf.if %13 {
      %c0_5 = arith.constant 0 : index
      %c0_6 = arith.constant 0 : index
      %14 = vector.load %arg15[%c0_5, %c0_6] : memref<16x64xf32, #tpu.memory_space<vmem>>, vector<16x64xf32>
      %c0_7 = arith.constant 0 : index
      %c0_8 = arith.constant 0 : index
      %15 = vector.load %arg13[%c0_7, %c0_8] : memref<16x64xf32, #tpu.memory_space<vmem>>, vector<16x64xf32>
      tpu.vector_store %arg13[%c0_7, %c0_8], %14 {strides = array<i32>} : memref<16x64xf32, #tpu.memory_space<vmem>>, vector<16x64xf32>,
    } else {
    }
    return
  }
  func.func @transform_0(%arg0: i32, %arg1: i32, %arg2: i32, %arg3: memref<4xi32, #tpu.memory_space<smem>>, %arg4: memref<1xi32, #tpu.memory_space<smem>>) -> (i32, i32) {
    %c0_i32 = arith.constant 0 : i32
    %c0_i32_0 = arith.constant 0 : i32
    return %arg0, %c0_i32 : i32, i32
  }
  func.func @transform_1(%arg0: i32, %arg1: i32, %arg2: i32, %arg3: memref<4xi32, #tpu.memory_space<smem>>, %arg4: memref<1xi32, #tpu.memory_space<smem>>) -> (i32, i32) {
    %c0_i32 = arith.constant 0 : i32
    %c0_i32_0 = arith.constant 0 : i32
    %c0_i32_1 = arith.constant 0 : i32
    return %c0_i32, %c0_i32_0 : i32, i32
  }
  func.func @transform_2(%arg0: i32, %arg1: i32, %arg2: i32, %arg3: memref<4xi32, #tpu.memory_space<smem>>, %arg4: memref<1xi32, #tpu.memory_space<smem>>) -> (i32, i32) {
    %c0_i32 = arith.constant 0 : i32
    %c0_i32_0 = arith.constant 0 : i32
    %c0_i32_1 = arith.constant 0 : i32
    return %c0_i32, %c0_i32_0 : i32, i32
  }
  func.func @transform_3(%arg0: i32, %arg1: i32, %arg2: i32, %arg3: memref<4xi32, #tpu.memory_space<smem>>, %arg4: memref<1xi32, #tpu.memory_space<smem>>) -> (i32, i32, i32) {
    %0 = arith.index_cast %arg1 : i32 to index
    %1 = memref.load %arg3[%0] : memref<4xi32, #tpu.memory_space<smem>>
    %c0_i32 = arith.constant 0 : i32
    %c0_i32_0 = arith.constant 0 : i32
    return %1, %c0_i32, %arg2 : i32, i32, i32
  }
  func.func @transform_4(%arg0: i32, %arg1: i32, %arg2: i32, %arg3: memref<4xi32, #tpu.memory_space<smem>>, %arg4: memref<1xi32, #tpu.memory_space<smem>>) -> (i32, i32, i32) {
    %0 = arith.index_cast %arg1 : i32 to index
    %1 = memref.load %arg3[%0] : memref<4xi32, #tpu.memory_space<smem>>
    %c0_i32 = arith.constant 0 : i32
    %c0_i32_0 = arith.constant 0 : i32
    return %1, %c0_i32, %arg2 : i32, i32, i32
  }
  func.func @transform_5(%arg0: i32, %arg1: i32, %arg2: i32, %arg3: memref<4xi32, #tpu.memory_space<smem>>, %arg4: memref<1xi32, #tpu.memory_space<smem>>) -> (i32, i32, i32) {
    %0 = arith.index_cast %arg1 : i32 to index
    %1 = memref.load %arg3[%0] : memref<4xi32, #tpu.memory_space<smem>>
    %c0_i32 = arith.constant 0 : i32
    %c0_i32_0 = arith.constant 0 : i32
    return %1, %arg2, %c0_i32 : i32, i32, i32
  }
  func.func @transform_6(%arg0: i32, %arg1: i32, %arg2: i32, %arg3: memref<4xi32, #tpu.memory_space<smem>>, %arg4: memref<1xi32, #tpu.memory_space<smem>>) -> (i32, i32, i32) {
    %0 = arith.index_cast %arg1 : i32 to index
    %1 = memref.load %arg3[%0] : memref<4xi32, #tpu.memory_space<smem>>
    %c0_i32 = arith.constant 0 : i32
    %c0_i32_0 = arith.constant 0 : i32
    %c0_i32_1 = arith.constant 0 : i32
    return %1, %c0_i32, %c0_i32_0 : i32, i32, i32
  }
  func.func @transform_7(%arg0: i32, %arg1: i32, %arg2: i32, %arg3: memref<4xi32, #tpu.memory_space<smem>>, %arg4: memref<1xi32, #tpu.memory_space<smem>>) -> (i32, i32, i32) {
    %0 = arith.index_cast %arg1 : i32 to index
    %1 = memref.load %arg3[%0] : memref<4xi32, #tpu.memory_space<smem>>
    %c0_i32 = arith.constant 0 : i32
    %c0_i32_0 = arith.constant 0 : i32
    return %1, %arg0, %c0_i32 : i32, i32, i32
  }
  func.func @transform_8(%arg0: i32, %arg1: i32, %arg2: i32, %arg3: memref<4xi32, #tpu.memory_space<smem>>, %arg4: memref<1xi32, #tpu.memory_space<smem>>) -> (i32, i32) {
    %c0_i32 = arith.constant 0 : i32
    %c0_i32_0 = arith.constant 0 : i32
    return %arg0, %c0_i32 : i32, i32
  }
}

</mosaic_0001>

<llo_original>
// kernel: moe_block_forward.4
$region0: #{moe_block_forward.4}
  #allocation0 [shape = 'u32[]', space=smem, size = 0x4, offset = 0x4, fixed_abs, tag = 'smem constant byte address 0x4 - core index']
  #allocation1 [shape = 'u32[144,128]{1,0:T(1,128)}', space=vmem, size = 0x12000, scoped, tag = 'internal scratch']
  %s0 = inlined_call_operand.hbm [shape: f32[16,64], index: 0, kind: input, shape index: {}]
  %s1 = inlined_call_operand.hbm [shape: f32[1,64], index: 1, kind: input, shape index: {}]
  %s2 = inlined_call_operand.hbm [shape: f32[1,64], index: 2, kind: input, shape index: {}]
  %s3 = inlined_call_operand.hbm [shape: bf16[64,192], index: 3, kind: input, shape index: {}]
  %s4 = inlined_call_operand.hbm [shape: f32[1,192], index: 4, kind: input, shape index: {}]
  %s5 = inlined_call_operand.hbm [shape: f32[16,192], index: 5, kind: output, shape index: {}]
  %s6 = sld [smem:[#allocation0]]
  $region50: #{moe_block_forward.4} parent=0
    _
  %s8 = ssub.s32 1, %s6
  %s9 = scalar_select 0, %s8, %s6
  $region1: #{moe_block_forward.4} parent=0
    #allocation2 [shape = 'u8[8192]{0}', space=vmem, size = 0x2000, scoped, tag = 'input window, operand 0, single buffered']
    #allocation3 [shape = 's32[1]{0}', space=sflag, size = 0x4, scoped, tag = 'scoped memory for moe_block_forward.4']
    #allocation4 [shape = 's32[1]{0}', space=sflag, size = 0x4, scoped, tag = 'scoped memory for moe_block_forward.4']
    #allocation5 [shape = 'u8[512]{0}', space=vmem, size = 0x400, scoped, tag = 'input window, operand 1, single buffered']
    #allocation6 [shape = 's32[1]{0}', space=sflag, size = 0x4, scoped, tag = 'scoped memory for moe_block_forward.4']
    #allocation7 [shape = 'u8[512]{0}', space=vmem, size = 0x400, scoped, tag = 'input window, operand 2, single buffered']
    #allocation8 [shape = 'u8[32768]{0}', space=vmem, size = 0x8000, scoped, tag = 'input window, operand 3, single buffered']
    #allocation9 [shape = 's32[1]{0}', space=sflag, size = 0x4, scoped, tag = 'scoped memory for moe_block_forward.4']
    #allocation10 [shape = 'u8[1024]{0}', space=vmem, size = 0x400, scoped, tag = 'input window, operand 4, single buffered']
    #allocation11 [shape = 'u8[16384]{0}', space=vmem, size = 0x4000, scoped, tag = 'output window, operand 0, single buffered']
    %10 = vsyncpa [#allocation3], 0
    %11 = vsyncpa [#allocation6], 0
    %12 = vsyncpa [#allocation9], 0
    %13 = vsyncpa [#allocation4], 0
    // Predicated region
    $region2: #{moe_block_forward.4} parent=1 // pred_check
      _
    $region3: #{moe_block_forward.4} parent=1 // pred_check_branch
      %15 = sbr.rel (0) target = $region5
    $region4: #{moe_block_forward.4} parent=1 // pred_region
      %s17 = ssub.s32 256, 256
      %18 = vsyncadd [#allocation3], %s17
      %s19 = sshll.u32 [#allocation2], 4
      %s20 = int_to_ptr.vmem [resolvable:$true] %s19
      %25 = dma.hbm_to_vmem [thread:$0]  %s0, 256, %s20, [#allocation3], 128, 128, 8
    $region5: #{moe_block_forward.4} parent=1 // pred_fallthru
      _
    // Predicated region
    $region6: #{moe_block_forward.4} parent=1 // pred_check
      _
    $region7: #{moe_block_forward.4} parent=1 // pred_check_branch
      %27 = sbr.rel (0) target = $region9
    $region8: #{moe_block_forward.4} parent=1 // pred_region
      %s29 = ssub.s32 16, 16
      %30 = vsyncadd [#allocation6], %s29
      %s32 = sshll.u32 [#allocation5], 4
      %s33 = int_to_ptr.vmem [resolvable:$true] %s32
      %35 = dma.hbm_to_vmem [thread:$0]  %s1, 16, %s33, [#allocation6]
    $region9: #{moe_block_forward.4} parent=1 // pred_fallthru
      _
    // Predicated region
    $region10: #{moe_block_forward.4} parent=1 // pred_check
      _
    $region11: #{moe_block_forward.4} parent=1 // pred_check_branch
      %37 = sbr.rel (0) target = $region13
    $region12: #{moe_block_forward.4} parent=1 // pred_region
      %s39 = ssub.s32 16, 16
      %40 = vsyncadd [#allocation6], %s39
      %s42 = sshll.u32 [#allocation7], 4
      %s43 = int_to_ptr.vmem [resolvable:$true] %s42
      %45 = dma.hbm_to_vmem [thread:$0]  %s2, 16, %s43, [#allocation6]
    $region13: #{moe_block_forward.4} parent=1 // pred_fallthru
      _
    // Predicated region
    $region14: #{moe_block_forward.4} parent=1 // pred_check
      _
    $region15: #{moe_block_forward.4} parent=1 // pred_check_branch
      %47 = sbr.rel (0) target = $region17
    $region16: #{moe_block_forward.4} parent=1 // pred_region
      %s49 = ssub.s32 1024, 1024
      %50 = vsyncadd [#allocation9], %s49
      %s51 = sshll.u32 [#allocation8], 4
      %s52 = int_to_ptr.vmem [resolvable:$true] %s51
      %57 = dma.hbm_to_vmem [thread:$0]  %s3, 1024, %s52, [#allocation9], 128, 128, 8
    $region17: #{moe_block_forward.4} parent=1 // pred_fallthru
      _
    // Predicated region
    $region18: #{moe_block_forward.4} parent=1 // pred_check
      _
    $region19: #{moe_block_forward.4} parent=1 // pred_check_branch
      %59 = sbr.rel (0) target = $region21
    $region20: #{moe_block_forward.4} parent=1 // pred_region
      %s61 = ssub.s32 32, 32
      %62 = vsyncadd [#allocation9], %s61
      %s64 = sshll.u32 [#allocation10], 4
      %s65 = int_to_ptr.vmem [resolvable:$true] %s64
      %67 = dma.hbm_to_vmem [thread:$0]  %s4, 32, %s65, [#allocation9]
    $region21: #{moe_block_forward.4} parent=1 // pred_fallthru
      _
    // Predicated region
    $region22: #{moe_block_forward.4} parent=1 // pred_check
      _
    $region23: #{moe_block_forward.4} parent=1 // pred_check_branch
      %69 = sbr.rel (0) target = $region25
    $region24: #{moe_block_forward.4} parent=1 // pred_region
      %70 = dma.done [#allocation3], 256
    $region25: #{moe_block_forward.4} parent=1 // pred_fallthru
      _
    // Predicated region
    $region26: #{moe_block_forward.4} parent=1 // pred_check
      _
    $region27: #{moe_block_forward.4} parent=1 // pred_check_branch
      %72 = sbr.rel (0) target = $region29
    $region28: #{moe_block_forward.4} parent=1 // pred_region
      %73 = dma.done [#allocation6], 16
    $region29: #{moe_block_forward.4} parent=1 // pred_fallthru
      _
    // Predicated region
    $region30: #{moe_block_forward.4} parent=1 // pred_check
      _
    $region31: #{moe_block_forward.4} parent=1 // pred_check_branch
      %75 = sbr.rel (0) target = $region33
    $region32: #{moe_block_forward.4} parent=1 // pred_region
      %76 = dma.done [#allocation6], 16
    $region33: #{moe_block_forward.4} parent=1 // pred_fallthru
      _
    // Predicated region
    $region34: #{moe_block_forward.4} parent=1 // pred_check
      _
    $region35: #{moe_block_forward.4} parent=1 // pred_check_branch
      %78 = sbr.rel (0) target = $region37
    $region36: #{moe_block_forward.4} parent=1 // pred_region
      %79 = dma.done [#allocation9], 1024
    $region37: #{moe_block_forward.4} parent=1 // pred_fallthru
      _
    // Predicated region
    $region38: #{moe_block_forward.4} parent=1 // pred_check
      _
    $region39: #{moe_block_forward.4} parent=1 // pred_check_branch
      %81 = sbr.rel (0) target = $region41
    $region40: #{moe_block_forward.4} parent=1 // pred_region
      %82 = dma.done [#allocation9], 32
    $region41: #{moe_block_forward.4} parent=1 // pred_fallthru
      _
    %v84 = vld [vmem:[#allocation2] sm:$0xff]
    %v85 = vld [vmem:[#allocation2 + $0x8] sm:$0xff]
    %vm86 = vcmask 523264
    %v87 = vsel %vm86, %v84, 0.0
    %88 = vadd.xlane.f32.xlu0 %v87
    %v89 = vpop.xlane.xlu0 %88
    %v90 = vsel %vm86, %v85, 0.0
    %91 = vadd.xlane.f32.xlu0 %v90
    %v92 = vpop.xlane.xlu0 %91
    %v93 = vrcp.pop 64.0
    %v94 = vmul.f32 %v89, %v93
    %v95 = vmul.f32 %v92, %v93
    %v96 = vsub.f32 %v84, %v94
    %v97 = vsub.f32 %v85, %v95
    %v98 = vmul.f32 %v96, %v96
    %v99 = vmul.f32 %v97, %v97
    %v100 = vsel %vm86, %v98, 0.0
    %101 = vadd.xlane.f32.xlu0 %v100
    %v102 = vpop.xlane.xlu0 %101
    %v103 = vsel %vm86, %v99, 0.0
    %104 = vadd.xlane.f32.xlu0 %v103
    %v105 = vpop.xlane.xlu0 %104
    %v106 = vmul.f32 %v102, %v93
    %v107 = vmul.f32 %v105, %v93
    %v108 = vadd.f32 %v106, 1e-05
    %v109 = vadd.f32 %v107, 1e-05
    %v110 = vrsqrt.pop %v108
    %v111 = vrsqrt.pop %v109
    %v112 = vmul.f32 %v96, %v110
    %v113 = vmul.f32 %v97, %v111
    %v114 = vld [vmem:[#allocation5] sm:$0x1]
    %v116 = vlaneseq
    %v117 = vshrl.u32 %v116, 7
    %v118 = vsub.s32 0, %v117
    %v119 = vrot.slane %v114, %v118
    %v121 = vmul.f32 %v112, %v119
    %v122 = vmul.f32 %v113, %v119
    %v123 = vld [vmem:[#allocation7] sm:$0x1]
    %v125 = vlaneseq
    %v126 = vshrl.u32 %v125, 7
    %v127 = vsub.s32 0, %v126
    %v128 = vrot.slane %v123, %v127
    %v130 = vadd.f32 %v121, %v128
    %v131 = vadd.f32 %v122, %v128
    %v132 = vld [vmem:[#allocation8] sm:$0xff]
    %v133 = vld [vmem:[#allocation8 + $0x8] sm:$0xff]
    %v134 = vld [vmem:[#allocation8 + $0x10] sm:$0xff]
    %v135 = vld [vmem:[#allocation8 + $0x18] sm:$0xff]
    %v136 = vld [vmem:[#allocation8 + $0x20] sm:$0xff]
    %v137 = vld [vmem:[#allocation8 + $0x28] sm:$0xff]
    %v138 = vld [vmem:[#allocation8 + $0x30] sm:$0xff]
    %v139 = vld [vmem:[#allocation8 + $0x38] sm:$0xff]
    %v140 = vpack.c.bf16 %v131, %v130
    %v141 = vld [vmem:[#allocation10] sm:$0x3]
    %v143 = vlaneseq
    %v144 = vshrl.u32 %v143, 7
    %v145 = vsub.s32 0, %v144
    %v146 = vrot.slane %v141, %v145
    %v147 = vlaneseq
    %v148 = vshrl.u32 %v147, 7
    %v149 = vsub.s32 1, %v148
    %v150 = vrot.slane %v141, %v149
    %v161 = vunpack.c.l.b16 %v132
    %v162 = vunpack.c.h.b16 %v132
    %v163 = vunpack.c.l.b16 %v133
    %v164 = vunpack.c.h.b16 %v133
    %v165 = vunpack.c.l.b16 %v134
    %v166 = vunpack.c.h.b16 %v134
    %v167 = vunpack.c.l.b16 %v135
    %v168 = vunpack.c.h.b16 %v135
    %v169 = vunpack.c.l.b16 %v136
    %v170 = vunpack.c.h.b16 %v136
    %v171 = vunpack.c.l.b16 %v137
    %v172 = vunpack.c.h.b16 %v137
    %v173 = vunpack.c.l.b16 %v138
    %v174 = vunpack.c.h.b16 %v138
    %v175 = vunpack.c.l.b16 %v139
    %v176 = vunpack.c.h.b16 %v139
    %v177 = vpack.c.b16 %v163, %v161
    %v178 = vpack.c.b16 %v164, %v162
    %v179 = vpack.c.b16 %v167, %v165
    %v180 = vpack.c.b16 %v168, %v166
    %v181 = vpack.c.b16 %v171, %v169
    %v182 = vpack.c.b16 %v172, %v170
    %v183 = vpack.c.b16 %v175, %v173
    %v184 = vpack.c.b16 %v176, %v174
    %v194 = vsel %vm86, %v140, 0
    %196 = vmatprep.subr.bf16.mxu0 %v178
    %197 = vmatpush1.bf16.msra.mxu0 %v177
    %198 = vmatprep.subr.bf16.mxu0 %v180
    %199 = vmatpush1.bf16.msra.mxu0 %v179
    %200 = vmatprep.subr.bf16.mxu0 %v182
    %201 = vmatpush1.bf16.msra.mxu0 %v181
    %202 = vmatprep.subr.bf16.mxu0 %v184
    %203 = vmatpush1.bf16.msra.mxu0 %v183
    %204 = vmatprep.subr.bf16.mxu0 0
    %205 = vmatpush1.bf16.msra.mxu0 0
    %206 = vmatprep.subr.bf16.mxu0 0
    %207 = vmatpush1.bf16.msra.mxu0 0
    %208 = vmatprep.subr.bf16.mxu0 0
    %209 = vmatpush1.bf16.msra.mxu0 0
    %210 = vmatprep.subr.bf16.mxu0 0
    %211 = vmatpush1.bf16.msra.mxu0 0
    %212 = vmatprep.subr.bf16.mxu0 0
    %213 = vmatpush1.bf16.msra.mxu0 0
    %214 = vmatprep.subr.bf16.mxu0 0
    %215 = vmatpush1.bf16.msra.mxu0 0
    %216 = vmatprep.subr.bf16.mxu0 0
    %217 = vmatpush1.bf16.msra.mxu0 0
    %218 = vmatprep.subr.bf16.mxu0 0
    %219 = vmatpush1.bf16.msra.mxu0 0
    %220 = vmatprep.subr.bf16.mxu0 0
    %221 = vmatpush1.bf16.msra.mxu0 0
    %222 = vmatprep.subr.bf16.mxu0 0
    %223 = vmatpush1.bf16.msra.mxu0 0
    %224 = vmatprep.subr.bf16.mxu0 0
    %225 = vmatpush1.bf16.msra.mxu0 0
    %226 = vmatprep.subr.bf16.mxu0 0
    %227 = vmatpush1.bf16.msra.mxu0 0
    %228 = vmatprep.mubr.bf16.mxu0 0
    %229 = vmatmul.mubr.bf16.gmra.mrb[0].mxu0 %v194
    %v230 = vpop.f32.mrb[0].mxu0
    %v231 = vadd.f32 %v146, %v230
    %v232 = vpop.f32.mrb[0].mxu0
    %v233 = vadd.f32 %v150, %v232
    %v234 = vpop.f32.mrb[0].mxu0
    %v235 = vadd.f32 %v146, %v234
    %v236 = vpop.f32.mrb[0].mxu0
    %v237 = vadd.f32 %v150, %v236
    %238 = vdwg.mxu0
    %239 = vst [vmem:[#allocation11] sm:$0xff] %v231
    %240 = vst.msk [vmem:[#allocation11 + $0x8] sm:$0xff] %vm86, %v233
    %241 = vst [vmem:[#allocation11 + $0x10] sm:$0xff] %v235
    %242 = vst.msk [vmem:[#allocation11 + $0x18] sm:$0xff] %vm86, %v237
    // Predicated region
    $region42: #{moe_block_forward.4} parent=1 // pred_check
      _
    $region43: #{moe_block_forward.4} parent=1 // pred_check_branch
      %244 = sbr.rel (0) target = $region45
    $region44: #{moe_block_forward.4} parent=1 // pred_region
      %s246 = ssub.s32 512, 512
      %247 = vsyncadd [#allocation4], %s246
      %s248 = sshll.u32 [#allocation11], 4
      %s249 = int_to_ptr.vmem [resolvable:$true] %s248
      %254 = dma.vmem_to_hbm [thread:$0]  %s249, 512, %s5, [#allocation4], 256, 256, 16
    $region45: #{moe_block_forward.4} parent=1 // pred_fallthru
      _
    // Predicated region
    $region46: #{moe_block_forward.4} parent=1 // pred_check
      _
    $region47: #{moe_block_forward.4} parent=1 // pred_check_branch
      %256 = sbr.rel (0) target = $region49
    $region48: #{moe_block_forward.4} parent=1 // pred_region
      %257 = dma.done [#allocation4], 512
    $region49: #{moe_block_forward.4} parent=1 // pred_fallthru
      _
    %258 = vsyncpa [#allocation3], 1
    %259 = vsyncpa [#allocation6], 1
    %260 = vsyncpa [#allocation9], 1
    %261 = vsyncpa [#allocation4], 1

// kernel: moe_block_forward.6
$region0: #{moe_block_forward.6}
  #allocation0 [shape = 'u32[]', space=smem, size = 0x4, offset = 0x4, fixed_abs, tag = 'smem constant byte address 0x4 - core index']
  #allocation1 [shape = 'u32[144,128]{1,0:T(1,128)}', space=vmem, size = 0x12000, scoped, tag = 'internal scratch']
  %s0 = inlined_call_operand.hbm [shape: f32[16,64], index: 0, kind: input, shape index: {}]
  %s1 = inlined_call_operand.hbm [shape: f32[16,64], index: 1, kind: input, shape index: {}]
  %s2 = inlined_call_operand.hbm [shape: bf16[64,64], index: 2, kind: input, shape index: {}]
  %s3 = inlined_call_operand.hbm [shape: f32[1,64], index: 3, kind: input, shape index: {}]
  %s4 = inlined_call_operand.hbm [shape: f32[1,64], index: 4, kind: input, shape index: {}]
  %s5 = inlined_call_operand.hbm [shape: f32[1,64], index: 5, kind: input, shape index: {}]
  %s6 = inlined_call_operand.hbm [shape: f32[64,128], index: 6, kind: input, shape index: {}]
  %s7 = inlined_call_operand.hbm [shape: f32[16,64], index: 7, kind: output, shape index: {0}]
  %s8 = inlined_call_operand.hbm [shape: f32[16,128], index: 8, kind: output, shape index: {1}]
  %9 = xla_tuple %s7, %s8
  %s10 = sld [smem:[#allocation0]]
  $region74: #{moe_block_forward.6} parent=0
    _
  %s12 = ssub.s32 1, %s10
  %s13 = scalar_select 0, %s12, %s10
  $region1: #{moe_block_forward.6} parent=0
    #allocation2 [shape = 'u8[8192]{0}', space=vmem, size = 0x2000, scoped, tag = 'input window, operand 0, single buffered']
    #allocation3 [shape = 's32[1]{0}', space=sflag, size = 0x4, scoped, tag = 'scoped memory for moe_block_forward.6']
    #allocation4 [shape = 's32[1]{0}', space=sflag, size = 0x4, scoped, tag = 'scoped memory for moe_block_forward.6']
    #allocation5 [shape = 'u8[8192]{0}', space=vmem, size = 0x2000, scoped, tag = 'input window, operand 1, single buffered']
    #allocation6 [shape = 's32[1]{0}', space=sflag, size = 0x4, scoped, tag = 'scoped memory for moe_block_forward.6']
    #allocation7 [shape = 'u8[16384]{0}', space=vmem, size = 0x4000, scoped, tag = 'input window, operand 2, single buffered']
    #allocation8 [shape = 'u8[512]{0}', space=vmem, size = 0x400, scoped, tag = 'input window, operand 3, single buffered']
    #allocation9 [shape = 's32[1]{0}', space=sflag, size = 0x4, scoped, tag = 'scoped memory for moe_block_forward.6']
    #allocation10 [shape = 'u8[512]{0}', space=vmem, size = 0x400, scoped, tag = 'input window, operand 4, single buffered']
    #allocation11 [shape = 'u8[512]{0}', space=vmem, size = 0x400, scoped, tag = 'input window, operand 5, single buffered']
    #allocation12 [shape = 's32[1]{0}', space=sflag, size = 0x4, scoped, tag = 'scoped memory for moe_block_forward.6']
    #allocation13 [shape = 'u8[32768]{0}', space=vmem, size = 0x8000, scoped, tag = 'input window, operand 6, single buffered']
    #allocation14 [shape = 'u8[8192]{0}', space=vmem, size = 0x2000, scoped, tag = 'output window, operand 0, single buffered']
    #allocation15 [shape = 'u8[8192]{0}', space=vmem, size = 0x2000, scoped, tag = 'output window, operand 1, single buffered']
    #allocation16 [shape = 's32[1]{0}', space=sflag, size = 0x4, scoped, tag = 'scoped memory for moe_block_forward.6']
    %14 = vsyncpa [#allocation3], 0
    %15 = vsyncpa [#allocation6], 0
    %16 = vsyncpa [#allocation9], 0
    %17 = vsyncpa [#allocation12], 0
    %18 = vsyncpa [#allocation4], 0
    %19 = vsyncpa [#allocation16], 0
    // Predicated region
    $region2: #{moe_block_forward.6} parent=1 // pred_check
      _
    $region3: #{moe_block_forward.6} parent=1 // pred_check_branch
      %21 = sbr.rel (0) target = $region5
    $region4: #{moe_block_forward.6} parent=1 // pred_region
      %s23 = ssub.s32 256, 256
      %24 = vsyncadd [#allocation3], %s23
      %s25 = sshll.u32 [#allocation2], 4
      %s26 = int_to_ptr.vmem [resolvable:$true] %s25
      %31 = dma.hbm_to_vmem [thread:$0]  %s0, 256, %s26, [#allocation3], 128, 128, 8
    $region5: #{moe_block_forward.6} parent=1 // pred_fallthru
      _
    // Predicated region
    $region6: #{moe_block_forward.6} parent=1 // pred_check
      _
    $region7: #{moe_block_forward.6} parent=1 // pred_check_branch
      %33 = sbr.rel (0) target = $region9
    $region8: #{moe_block_forward.6} parent=1 // pred_region
      %s35 = ssub.s32 256, 256
      %36 = vsyncadd [#allocation6], %s35
      %s37 = sshll.u32 [#allocation5], 4
      %s38 = int_to_ptr.vmem [resolvable:$true] %s37
      %43 = dma.hbm_to_vmem [thread:$0]  %s1, 256, %s38, [#allocation6], 128, 128, 8
    $region9: #{moe_block_forward.6} parent=1 // pred_fallthru
      _
    // Predicated region
    $region10: #{moe_block_forward.6} parent=1 // pred_check
      _
    $region11: #{moe_block_forward.6} parent=1 // pred_check_branch
      %45 = sbr.rel (0) target = $region13
    $region12: #{moe_block_forward.6} parent=1 // pred_region
      %s47 = ssub.s32 512, 512
      %48 = vsyncadd [#allocation6], %s47
      %s49 = sshll.u32 [#allocation7], 4
      %s50 = int_to_ptr.vmem [resolvable:$true] %s49
      %55 = dma.hbm_to_vmem [thread:$0]  %s2, 512, %s50, [#allocation6], 64, 64, 4
    $region13: #{moe_block_forward.6} parent=1 // pred_fallthru
      _
    // Predicated region
    $region14: #{moe_block_forward.6} parent=1 // pred_check
      _
    $region15: #{moe_block_forward.6} parent=1 // pred_check_branch
      %57 = sbr.rel (0) target = $region17
    $region16: #{moe_block_forward.6} parent=1 // pred_region
      %s59 = ssub.s32 16, 16
      %60 = vsyncadd [#allocation9], %s59
      %s62 = sshll.u32 [#allocation8], 4
      %s63 = int_to_ptr.vmem [resolvable:$true] %s62
      %65 = dma.hbm_to_vmem [thread:$0]  %s3, 16, %s63, [#allocation9]
    $region17: #{moe_block_forward.6} parent=1 // pred_fallthru
      _
    // Predicated region
    $region18: #{moe_block_forward.6} parent=1 // pred_check
      _
    $region19: #{moe_block_forward.6} parent=1 // pred_check_branch
      %67 = sbr.rel (0) target = $region21
    $region20: #{moe_block_forward.6} parent=1 // pred_region
      %s69 = ssub.s32 16, 16
      %70 = vsyncadd [#allocation9], %s69
      %s72 = sshll.u32 [#allocation10], 4
      %s73 = int_to_ptr.vmem [resolvable:$true] %s72
      %75 = dma.hbm_to_vmem [thread:$0]  %s4, 16, %s73, [#allocation9]
    $region21: #{moe_block_forward.6} parent=1 // pred_fallthru
      _
    // Predicated region
    $region22: #{moe_block_forward.6} parent=1 // pred_check
      _
    $region23: #{moe_block_forward.6} parent=1 // pred_check_branch
      %77 = sbr.rel (0) target = $region25
    $region24: #{moe_block_forward.6} parent=1 // pred_region
      %s79 = ssub.s32 16, 16
      %80 = vsyncadd [#allocation12], %s79
      %s82 = sshll.u32 [#allocation11], 4
      %s83 = int_to_ptr.vmem [resolvable:$true] %s82
      %85 = dma.hbm_to_vmem [thread:$0]  %s5, 16, %s83, [#allocation12]
    $region25: #{moe_block_forward.6} parent=1 // pred_fallthru
      _
    // Predicated region
    $region26: #{moe_block_forward.6} parent=1 // pred_check
      _
    $region27: #{moe_block_forward.6} parent=1 // pred_check_branch
      %87 = sbr.rel (0) target = $region29
    $region28: #{moe_block_forward.6} parent=1 // pred_region
      %s89 = ssub.s32 1024, 1024
      %90 = vsyncadd [#allocation12], %s89
      %s91 = sshll.u32 [#allocation13], 4
      %s92 = int_to_ptr.vmem [resolvable:$true] %s91
      %97 = dma.hbm_to_vmem [thread:$0]  %s6, 1024, %s92, [#allocation12], 128, 128, 8
    $region29: #{moe_block_forward.6} parent=1 // pred_fallthru
      _
    // Predicated region
    $region30: #{moe_block_forward.6} parent=1 // pred_check
      _
    $region31: #{moe_block_forward.6} parent=1 // pred_check_branch
      %99 = sbr.rel (0) target = $region33
    $region32: #{moe_block_forward.6} parent=1 // pred_region
      %100 = dma.done [#allocation3], 256
    $region33: #{moe_block_forward.6} parent=1 // pred_fallthru
      _
    // Predicated region
    $region34: #{moe_block_forward.6} parent=1 // pred_check
      _
    $region35: #{moe_block_forward.6} parent=1 // pred_check_branch
      %102 = sbr.rel (0) target = $region37
    $region36: #{moe_block_forward.6} parent=1 // pred_region
      %103 = dma.done [#allocation6], 256
    $region37: #{moe_block_forward.6} parent=1 // pred_fallthru
      _
    // Predicated region
    $region38: #{moe_block_forward.6} parent=1 // pred_check
      _
    $region39: #{moe_block_forward.6} parent=1 // pred_check_branch
      %105 = sbr.rel (0) target = $region41
    $region40: #{moe_block_forward.6} parent=1 // pred_region
      %106 = dma.done [#allocation6], 512
    $region41: #{moe_block_forward.6} parent=1 // pred_fallthru
      _
    // Predicated region
    $region42: #{moe_block_forward.6} parent=1 // pred_check
      _
    $region43: #{moe_block_forward.6} parent=1 // pred_check_branch
      %108 = sbr.rel (0) target = $region45
    $region44: #{moe_block_forward.6} parent=1 // pred_region
      %109 = dma.done [#allocation9], 16
    $region45: #{moe_block_forward.6} parent=1 // pred_fallthru
      _
    // Predicated region
    $region46: #{moe_block_forward.6} parent=1 // pred_check
      _
    $region47: #{moe_block_forward.6} parent=1 // pred_check_branch
      %111 = sbr.rel (0) target = $region49
    $region48: #{moe_block_forward.6} parent=1 // pred_region
      %112 = dma.done [#allocation9], 16
    $region49: #{moe_block_forward.6} parent=1 // pred_fallthru
      _
    // Predicated region
    $region50: #{moe_block_forward.6} parent=1 // pred_check
      _
    $region51: #{moe_block_forward.6} parent=1 // pred_check_branch
      %114 = sbr.rel (0) target = $region53
    $region52: #{moe_block_forward.6} parent=1 // pred_region
      %115 = dma.done [#allocation12], 16
    $region53: #{moe_block_forward.6} parent=1 // pred_fallthru
      _
    // Predicated region
    $region54: #{moe_block_forward.6} parent=1 // pred_check
      _
    $region55: #{moe_block_forward.6} parent=1 // pred_check_branch
      %117 = sbr.rel (0) target = $region57
    $region56: #{moe_block_forward.6} parent=1 // pred_region
      %118 = dma.done [#allocation12], 1024
    $region57: #{moe_block_forward.6} parent=1 // pred_fallthru
      _
    %v120 = vld [vmem:[#allocation2] sm:$0xff]
    %v121 = vld [vmem:[#allocation2 + $0x8] sm:$0xff]
    %v122 = vld [vmem:[#allocation7] sm:$0xf]
    %v123 = vld [vmem:[#allocation7 + $0x4] sm:$0xf]
    %v124 = vld [vmem:[#allocation7 + $0x8] sm:$0xf]
    %v125 = vld [vmem:[#allocation7 + $0xc] sm:$0xf]
    %v126 = vld [vmem:[#allocation7 + $0x10] sm:$0xf]
    %v127 = vld [vmem:[#allocation7 + $0x14] sm:$0xf]
    %v128 = vld [vmem:[#allocation7 + $0x18] sm:$0xf]
    %v129 = vld [vmem:[#allocation7 + $0x1c] sm:$0xf]
    %v130 = vpack.c.bf16 %v121, %v120
    %v131 = vld [vmem:[#allocation8] sm:$0x1]
    %v133 = vlaneseq
    %v134 = vshrl.u32 %v133, 7
    %v135 = vsub.s32 0, %v134
    %v136 = vrot.slane %v131, %v135
    %v146 = vunpack.c.l.b16 %v122
    %v147 = vunpack.c.l.b16 %v123
    %v148 = vunpack.c.l.b16 %v124
    %v149 = vunpack.c.l.b16 %v125
    %v150 = vunpack.c.l.b16 %v126
    %v151 = vunpack.c.l.b16 %v127
    %v152 = vunpack.c.l.b16 %v128
    %v153 = vunpack.c.l.b16 %v129
    %v154 = vpack.c.b16 %v147, %v146
    %v155 = vpack.c.b16 %v149, %v148
    %v156 = vpack.c.b16 %v151, %v150
    %v157 = vpack.c.b16 %v153, %v152
    %vm162 = vcmask 523264
    %v164 = vsel %vm162, %v130, 0
    %166 = vmatprep.subr.bf16.mxu0 0
    %167 = vmatpush1.bf16.msra.mxu0 %v154
    %168 = vmatprep.subr.bf16.mxu0 0
    %169 = vmatpush1.bf16.msra.mxu0 %v155
    %170 = vmatprep.subr.bf16.mxu0 0
    %171 = vmatpush1.bf16.msra.mxu0 %v156
    %172 = vmatprep.subr.bf16.mxu0 0
    %173 = vmatpush1.bf16.msra.mxu0 %v157
    %174 = vmatprep.subr.bf16.mxu0 0
    %175 = vmatpush1.bf16.msra.mxu0 0
    %176 = vmatprep.subr.bf16.mxu0 0
    %177 = vmatpush1.bf16.msra.mxu0 0
    %178 = vmatprep.subr.bf16.mxu0 0
    %179 = vmatpush1.bf16.msra.mxu0 0
    %180 = vmatprep.subr.bf16.mxu0 0
    %181 = vmatpush1.bf16.msra.mxu0 0
    %182 = vmatprep.subr.bf16.mxu0 0
    %183 = vmatpush1.bf16.msra.mxu0 0
    %184 = vmatprep.subr.bf16.mxu0 0
    %185 = vmatpush1.bf16.msra.mxu0 0
    %186 = vmatprep.subr.bf16.mxu0 0
    %187 = vmatpush1.bf16.msra.mxu0 0
    %188 = vmatprep.subr.bf16.mxu0 0
    %189 = vmatpush1.bf16.msra.mxu0 0
    %190 = vmatprep.subr.bf16.mxu0 0
    %191 = vmatpush1.bf16.msra.mxu0 0
    %192 = vmatprep.subr.bf16.mxu0 0
    %193 = vmatpush1.bf16.msra.mxu0 0
    %194 = vmatprep.subr.bf16.mxu0 0
    %195 = vmatpush1.bf16.msra.mxu0 0
    %196 = vmatprep.subr.bf16.mxu0 0
    %197 = vmatpush1.bf16.msra.mxu0 0
    %198 = vmatprep.mubr.bf16.mxu0 0
    %199 = vmatmul.mubr.bf16.gmra.mrb[0].mxu0 %v164
    %v200 = vpop.f32.mrb[0].mxu0
    %v201 = vadd.f32 %v136, %v200
    %v202 = vpop.f32.mrb[0].mxu0
    %v203 = vpop.f32.mrb[0].mxu0
    %v204 = vadd.f32 %v136, %v203
    %v205 = vpop.f32.mrb[0].mxu0
    %206 = vdwg.mxu0
    %v207 = vld [vmem:[#allocation5] sm:$0xff]
    %v208 = vld [vmem:[#allocation5 + $0x8] sm:$0xff]
    %v209 = vadd.f32 %v207, %v201
    %v210 = vadd.f32 %v208, %v204
    %211 = vst.msk [vmem:[#allocation14] sm:$0xff] %vm162, %v209
    %212 = vst.msk [vmem:[#allocation14 + $0x8] sm:$0xff] %vm162, %v210
    %v213 = vsel %vm162, %v209, 0.0
    %214 = vadd.xlane.f32.xlu0 %v213
    %v215 = vpop.xlane.xlu0 %214
    %v216 = vsel %vm162, %v210, 0.0
    %217 = vadd.xlane.f32.xlu0 %v216
    %v218 = vpop.xlane.xlu0 %217
    %v219 = vrcp.pop 64.0
    %v220 = vmul.f32 %v215, %v219
    %v221 = vmul.f32 %v218, %v219
    %v222 = vsub.f32 %v209, %v220
    %v223 = vsub.f32 %v210, %v221
    %v224 = vmul.f32 %v222, %v222
    %v225 = vmul.f32 %v223, %v223
    %v226 = vsel %vm162, %v224, 0.0
    %227 = vadd.xlane.f32.xlu0 %v226
    %v228 = vpop.xlane.xlu0 %227
    %v229 = vsel %vm162, %v225, 0.0
    %230 = vadd.xlane.f32.xlu0 %v229
    %v231 = vpop.xlane.xlu0 %230
    %v232 = vmul.f32 %v228, %v219
    %v233 = vmul.f32 %v231, %v219
    %v234 = vadd.f32 %v232, 1e-05
    %v235 = vadd.f32 %v233, 1e-05
    %v236 = vrsqrt.pop %v234
    %v237 = vrsqrt.pop %v235
    %v238 = vmul.f32 %v222, %v236
    %v239 = vmul.f32 %v223, %v237
    %v240 = vld [vmem:[#allocation10] sm:$0x1]
    %v242 = vlaneseq
    %v243 = vshrl.u32 %v242, 7
    %v244 = vsub.s32 0, %v243
    %v245 = vrot.slane %v240, %v244
    %v247 = vmul.f32 %v238, %v245
    %v248 = vmul.f32 %v239, %v245
    %v249 = vld [vmem:[#allocation11] sm:$0x1]
    %v251 = vlaneseq
    %v252 = vshrl.u32 %v251, 7
    %v253 = vsub.s32 0, %v252
    %v254 = vrot.slane %v249, %v253
    %v256 = vadd.f32 %v247, %v254
    %v257 = vadd.f32 %v248, %v254
    %v258 = vld [vmem:[#allocation13] sm:$0xff]
    %v259 = vld [vmem:[#allocation13 + $0x8] sm:$0xff]
    %v260 = vld [vmem:[#allocation13 + $0x10] sm:$0xff]
    %v261 = vld [vmem:[#allocation13 + $0x18] sm:$0xff]
    %v262 = vld [vmem:[#allocation13 + $0x20] sm:$0xff]
    %v263 = vld [vmem:[#allocation13 + $0x28] sm:$0xff]
    %v264 = vld [vmem:[#allocation13 + $0x30] sm:$0xff]
    %v265 = vld [vmem:[#allocation13 + $0x38] sm:$0xff]
    %v267 = vsel %vm162, %v256, 0
    %v270 = vsel %vm162, %v257, 0
    %272 = vmatprep.subr.mxu0 0.0
    %273 = vmatpush1.msra.mxu0 %v258
    %274 = vmatprep.subr.mxu0 0.0
    %275 = vmatpush1.msra.mxu0 %v259
    %276 = vmatprep.subr.mxu0 0.0
    %277 = vmatpush1.msra.mxu0 %v260
    %278 = vmatprep.subr.mxu0 0.0
    %279 = vmatpush1.msra.mxu0 %v261
    %280 = vmatprep.subr.mxu0 0.0
    %281 = vmatpush1.msra.mxu0 %v262
    %282 = vmatprep.subr.mxu0 0.0
    %283 = vmatpush1.msra.mxu0 %v263
    %284 = vmatprep.subr.mxu0 0.0
    %285 = vmatpush1.msra.mxu0 %v264
    %286 = vmatprep.subr.mxu0 0.0
    %287 = vmatpush1.msra.mxu0 %v265
    %288 = vmatprep.subr.mxu0 0.0
    %289 = vmatpush1.msra.mxu0 0.0
    %290 = vmatprep.subr.mxu0 0.0
    %291 = vmatpush1.msra.mxu0 0.0
    %292 = vmatprep.subr.mxu0 0.0
    %293 = vmatpush1.msra.mxu0 0.0
    %294 = vmatprep.subr.mxu0 0.0
    %295 = vmatpush1.msra.mxu0 0.0
    %296 = vmatprep.subr.mxu0 0.0
    %297 = vmatpush1.msra.mxu0 0.0
    %298 = vmatprep.subr.mxu0 0.0
    %299 = vmatpush1.msra.mxu0 0.0
    %300 = vmatprep.subr.mxu0 0.0
    %301 = vmatpush1.msra.mxu0 0.0
    %302 = vmatprep.subr.mxu0 0.0
    %303 = vmatpush1.msra.mxu0 0.0
    %304 = vmatprep.subr.mxu0 0.0
    %305 = vmatpush1.msra.mxu0 0.0
    %306 = vmatprep.subr.mxu0 0.0
    %307 = vmatpush1.msra.mxu0 0.0
    %308 = vmatprep.subr.mxu0 0.0
    %309 = vmatpush1.msra.mxu0 0.0
    %310 = vmatprep.subr.mxu0 0.0
    %311 = vmatpush1.msra.mxu0 0.0
    %312 = vmatprep.subr.mxu0 0.0
    %313 = vmatpush1.msra.mxu0 0.0
    %314 = vmatprep.subr.mxu0 0.0
    %315 = vmatpush1.msra.mxu0 0.0
    %316 = vmatprep.subr.mxu0 0.0
    %317 = vmatpush1.msra.mxu0 0.0
    %318 = vmatprep.subr.mxu0 0.0
    %319 = vmatpush1.msra.mxu0 0.0
    %320 = vmatprep.subr.mxu0 0.0
    %321 = vmatpush1.msra.mxu0 0.0
    %322 = vmatprep.subr.mxu0 0.0
    %323 = vmatpush1.msra.mxu0 0.0
    %324 = vmatprep.subr.mxu0 0.0
    %325 = vmatpush1.msra.mxu0 0.0
    %326 = vmatprep.subr.mxu0 0.0
    %327 = vmatpush1.msra.mxu0 0.0
    %328 = vmatprep.subr.mxu0 0.0
    %329 = vmatpush1.msra.mxu0 0.0
    %330 = vmatprep.subr.mxu0 0.0
    %331 = vmatpush1.msra.mxu0 0.0
    %332 = vmatprep.subr.mxu0 0.0
    %333 = vmatpush1.msra.mxu0 0.0
    %334 = vmatprep.subr.mxu0 0.0
    %335 = vmatpush1.msra.mxu0 0.0
    %336 = vmatprep.mubr.f32.mxu0 0.0
    %337 = vmatmul.mubr.f32.gmra.mrb[0].mxu0 %v267
    %v338 = vpop.f32.mrb[0].mxu0
    %v339 = vadd.f32 0.0, %v338
    %v340 = vpop.f32.mrb[0].mxu0
    %341 = vmatprep.mubr.f32.mxu0 0.0
    %342 = vmatmul.mubr.f32.gmra.mrb[0].mxu0 %v270
    %v343 = vpop.f32.mrb[0].mxu0
    %v344 = vadd.f32 0.0, %v343
    %v345 = vpop.f32.mrb[0].mxu0
    %346 = vdwg.mxu0
    %347 = vst [vmem:[#allocation15] sm:$0xff] %v339
    %348 = vst [vmem:[#allocation15 + $0x8] sm:$0xff] %v344
    // Predicated region
    $region58: #{moe_block_forward.6} parent=1 // pred_check
      _
    $region59: #{moe_block_forward.6} parent=1 // pred_check_branch
      %350 = sbr.rel (0) target = $region61
    $region60: #{moe_block_forward.6} parent=1 // pred_region
      %s352 = ssub.s32 256, 256
      %353 = vsyncadd [#allocation4], %s352
      %s354 = sshll.u32 [#allocation14], 4
      %s355 = int_to_ptr.vmem [resolvable:$true] %s354
      %360 = dma.vmem_to_hbm [thread:$0]  %s355, 256, %s7, [#allocation4], 128, 128, 8
    $region61: #{moe_block_forward.6} parent=1 // pred_fallthru
      _
    // Predicated region
    $region62: #{moe_block_forward.6} parent=1 // pred_check
      _
    $region63: #{moe_block_forward.6} parent=1 // pred_check_branch
      %362 = sbr.rel (0) target = $region65
    $region64: #{moe_block_forward.6} parent=1 // pred_region
      %s364 = ssub.s32 256, 256
      %365 = vsyncadd [#allocation16], %s364
      %s366 = sshll.u32 [#allocation15], 4
      %s367 = int_to_ptr.vmem [resolvable:$true] %s366
      %372 = dma.vmem_to_hbm [thread:$0]  %s367, 256, %s8, [#allocation16], 128, 128, 8
    $region65: #{moe_block_forward.6} parent=1 // pred_fallthru
      _
    // Predicated region
    $region66: #{moe_block_forward.6} parent=1 // pred_check
      _
    $region67: #{moe_block_forward.6} parent=1 // pred_check_branch
      %374 = sbr.rel (0) target = $region69
    $region68: #{moe_block_forward.6} parent=1 // pred_region
      %375 = dma.done [#allocation4], 256
    $region69: #{moe_block_forward.6} parent=1 // pred_fallthru
      _
    // Predicated region
    $region70: #{moe_block_forward.6} parent=1 // pred_check
      _
    $region71: #{moe_block_forward.6} parent=1 // pred_check_branch
      %377 = sbr.rel (0) target = $region73
    $region72: #{moe_block_forward.6} parent=1 // pred_region
      %378 = dma.done [#allocation16], 256
    $region73: #{moe_block_forward.6} parent=1 // pred_fallthru
      _
    %379 = vsyncpa [#allocation3], 1
    %380 = vsyncpa [#allocation6], 1
    %381 = vsyncpa [#allocation9], 1
    %382 = vsyncpa [#allocation12], 1
    %383 = vsyncpa [#allocation4], 1
    %384 = vsyncpa [#allocation16], 1

// kernel: moe_block_forward.5
$region0: #{moe_block_forward.5}
  #allocation0 [shape = 'u32[]', space=smem, size = 0x4, offset = 0x4, fixed_abs, tag = 'smem constant byte address 0x4 - core index']
  #allocation1 [shape = 'u32[144,128]{1,0:T(1,128)}', space=vmem, size = 0x12000, scoped, tag = 'internal scratch']
  %s0 = inlined_call_operand.vmem [shape: f32[8,2,3,4,16], index: 0, kind: input, shape index: {}, may-alias: {0,1,2}]
  %s1 = inlined_call_operand.vmem [shape: f32[8,2,3,4,16], index: 1, kind: input, shape index: {}, may-alias: {0,1,2}]
  %s2 = inlined_call_operand.vmem [shape: f32[8,2,3,4,16], index: 2, kind: input, shape index: {}, may-alias: {0,1,2}]
  %s3 = inlined_call_operand.vmem [shape: f32[8,2,4,16], index: 3, kind: output, shape index: {}]
  %s4 = sld [smem:[#allocation0]]
  $region205: #{moe_block_forward.5} parent=0
    _
  %s6 = ssub.s32 1, %s4
  %s7 = scalar_select 0, %s6, %s4
  $region1: #{moe_block_forward.5} parent=0
    #allocation2 [shape = 'u8[32768]{0}', space=vmem, size = 0x8000, scoped, tag = 'input window, operand 0']
    #allocation3 [shape = 'u8[32768]{0}', space=vmem, size = 0x8000, scoped, tag = 'input window, operand 1']
    #allocation4 [shape = 'u8[32768]{0}', space=vmem, size = 0x8000, scoped, tag = 'input window, operand 2']
    #allocation5 [shape = 'u8[32768]{0}', space=vmem, size = 0x8000, scoped, tag = 'output window, operand 0']
    loop: start=0, step=1, limit=4
    $region2: #{moe_block_forward.5} parent=1 // loop_pre_header
      _
    $region3: #{moe_block_forward.5} parent=1 // loop_header
      %s9 = sphi 0, %s13
      %p10 = scmp.ge.s32.totalorder %s9, 4
      %s19 = sphi 0, %s21
      %s22 = sphi 0, %s19
      %s23 = sphi 0, %s22
      %s39 = sphi 0, %s23
      %s45 = sphi 0, %s47
      %s48 = sphi 0, %s45
      %s49 = sphi 0, %s48
      %s65 = sphi 0, %s49
      %s71 = sphi 0, %s73
      %s74 = sphi 0, %s71
      %s75 = sphi 0, %s74
      %s91 = sphi 0, %s75
      %s97 = sphi 0, %s99
      %s100 = sphi 0, %s97
      %s101 = sphi 0, %s100
      %s117 = sphi 0, %s101
    $region4: #{moe_block_forward.5} parent=1 // loop_header_branch
      %12 = sbr.rel (%p10) target = $region8
    $region5: #{moe_block_forward.5} parent=1 // loop_body
      %s14 = ssub.s32 %s9, 1
      %s15 = ssub.s32 %s9, 2
      %s16 = sadd.s32 %s9, 1
      %s17 = ssub.s32 %s9, %s16
      %p18 = scmp.eq.s32.totalorder %s17, 0
      %s20 = sadd.s32 %s19, 1
      %s21 = scalar_select %p18, %s19, %s20
      %p24 = pneg %p18
      %p25 = scmp.eq.s32.totalorder %s9, 1
      %p26 = por %p24, %p25
      %p27 = scmp.ne.s32.totalorder %s19, %s22
      %p28 = scmp.eq.s32.totalorder %s9, 0
      %p29 = por %p27, %p28
      %p30 = scmp.ne.s32.totalorder %s19, %s22
      %p31 = scmp.eq.s32.totalorder %s14, 1
      %p32 = por %p30, %p31
      %p33 = scmp.ne.s32.totalorder %s22, %s23
      %p34 = scmp.eq.s32.totalorder %s14, 0
      %p35 = por %p33, %p34
      %p36 = scmp.ne.s32.totalorder %s22, %s23
      %p37 = scmp.eq.s32.totalorder %s15, 1
      %p38 = por %p36, %p37
      %p40 = scmp.ne.s32.totalorder %s23, %s39
      %p41 = scmp.eq.s32.totalorder %s15, 0
      %p42 = por %p40, %p41
      %s43 = ssub.s32 %s9, %s16
      %p44 = scmp.eq.s32.totalorder %s43, 0
      %s46 = sadd.s32 %s45, 1
      %s47 = scalar_select %p44, %s45, %s46
      %p50 = pneg %p44
      %p51 = scmp.eq.s32.totalorder %s9, 1
      %p52 = por %p50, %p51
      %p53 = scmp.ne.s32.totalorder %s45, %s48
      %p54 = scmp.eq.s32.totalorder %s9, 0
      %p55 = por %p53, %p54
      %p56 = scmp.ne.s32.totalorder %s45, %s48
      %p57 = scmp.eq.s32.totalorder %s14, 1
      %p58 = por %p56, %p57
      %p59 = scmp.ne.s32.totalorder %s48, %s49
      %p60 = scmp.eq.s32.totalorder %s14, 0
      %p61 = por %p59, %p60
      %p62 = scmp.ne.s32.totalorder %s48, %s49
      %p63 = scmp.eq.s32.totalorder %s15, 1
      %p64 = por %p62, %p63
      %p66 = scmp.ne.s32.totalorder %s49, %s65
      %p67 = scmp.eq.s32.totalorder %s15, 0
      %p68 = por %p66, %p67
      %s69 = ssub.s32 %s9, %s16
      %p70 = scmp.eq.s32.totalorder %s69, 0
      %s72 = sadd.s32 %s71, 1
      %s73 = scalar_select %p70, %s71, %s72
      %p76 = pneg %p70
      %p77 = scmp.eq.s32.totalorder %s9, 1
      %p78 = por %p76, %p77
      %p79 = scmp.ne.s32.totalorder %s71, %s74
      %p80 = scmp.eq.s32.totalorder %s9, 0
      %p81 = por %p79, %p80
      %p82 = scmp.ne.s32.totalorder %s71, %s74
      %p83 = scmp.eq.s32.totalorder %s14, 1
      %p84 = por %p82, %p83
      %p85 = scmp.ne.s32.totalorder %s74, %s75
      %p86 = scmp.eq.s32.totalorder %s14, 0
      %p87 = por %p85, %p86
      %p88 = scmp.ne.s32.totalorder %s74, %s75
      %p89 = scmp.eq.s32.totalorder %s15, 1
      %p90 = por %p88, %p89
      %p92 = scmp.ne.s32.totalorder %s75, %s91
      %p93 = scmp.eq.s32.totalorder %s15, 0
      %p94 = por %p92, %p93
      %s95 = ssub.s32 %s9, %s16
      %p96 = scmp.eq.s32.totalorder %s95, 0
      %s98 = sadd.s32 %s97, 1
      %s99 = scalar_select %p96, %s97, %s98
      %p102 = pneg %p96
      %p103 = scmp.eq.s32.totalorder %s9, 1
      %p104 = por %p102, %p103
      %p105 = scmp.ne.s32.totalorder %s97, %s100
      %p106 = scmp.eq.s32.totalorder %s9, 0
      %p107 = por %p105, %p106
      %p108 = scmp.ne.s32.totalorder %s97, %s100
      %p109 = scmp.eq.s32.totalorder %s14, 1
      %p110 = por %p108, %p109
      %p111 = scmp.ne.s32.totalorder %s100, %s101
      %p112 = scmp.eq.s32.totalorder %s14, 0
      %p113 = por %p111, %p112
      %p114 = scmp.ne.s32.totalorder %s100, %s101
      %p115 = scmp.eq.s32.totalorder %s15, 1
      %p116 = por %p114, %p115
      %p118 = scmp.ne.s32.totalorder %s101, %s117
      %p119 = scmp.eq.s32.totalorder %s15, 0
      %p120 = por %p118, %p119
      %p121 = scmp.le.s32.totalorder 1, %s9
      %p122 = scmp.lt.s32.totalorder %s9, 3
      %p123 = pnand %p121, %p122
      %p124 = pneg %p123
      // Predicated region
      $region9: #{moe_block_forward.5} parent=5 // pred_check
        _
      $region10: #{moe_block_forward.5} parent=5 // pred_check_branch
        %126 = sbr.rel (%p123) target = $region12
      $region11: #{moe_block_forward.5} parent=5 // pred_region
        %s127 = ssub.s32 %s9, 1
      $region12: #{moe_block_forward.5} parent=5 // pred_fallthru
        _
      %p128 = scmp.lt.s32.totalorder %s9, 2
      // Predicated region
      $region13: #{moe_block_forward.5} parent=5 // pred_check
        %p129 = pneg %p128
      $region14: #{moe_block_forward.5} parent=5 // pred_check_branch
        %131 = sbr.rel (%p129) target = $region16
      $region15: #{moe_block_forward.5} parent=5 // pred_region
        // Predicated region
        $region17: #{moe_block_forward.5} parent=15 // pred_check
          %p132 = pneg %p29
        $region18: #{moe_block_forward.5} parent=15 // pred_check_branch
          %134 = sbr.rel (%p132) target = $region20
        $region19: #{moe_block_forward.5} parent=15 // pred_region
          %s135 = sand.u32 %s19, 1
          %s136 = sand.u32 %s19, 1
          %s137 = smul.addr %s136, 32
          %s138 = scalar_lea.vmem [#allocation2], %s137
          %s139 = smul.addr %s9, 3
          %s140 = smul.addr %s139, 4
          %s141 = scalar_lea.vmem %s0, %s140
          // Predicated region
          $region21: #{moe_block_forward.5} parent=19 // pred_check
            _
          $region22: #{moe_block_forward.5} parent=19 // pred_check_branch
            %143 = sbr.rel (0) target = $region24
          $region23: #{moe_block_forward.5} parent=19 // pred_region
            // Predicated region
            $region25: #{moe_block_forward.5} parent=23 // pred_check
              _
            $region26: #{moe_block_forward.5} parent=23 // pred_check_branch
              %145 = sbr.rel target = $region28
            $region27: #{moe_block_forward.5} parent=23 // pred_region
              // Predicated region
              $region40: #{moe_block_forward.5} parent=27 // pred_check
                _
              $region41: #{moe_block_forward.5} parent=27 // pred_check_branch
                %174 = sbr.rel (0) target = $region43
              $region42: #{moe_block_forward.5} parent=27 // pred_region
                loop: start=0, step=1, limit=1
                $region44: #{moe_block_forward.5} parent=42 // loop_pre_header
                  _
                $region45: #{moe_block_forward.5} parent=42 // loop_header
                  %s176 = sphi 0, %s180
                  %p177 = scmp.ge.s32.totalorder %s176, 1
                  %s181 = sphi %s141, %s141
                  %s182 = sphi %s138, %s138
                $region46: #{moe_block_forward.5} parent=42 // loop_header_branch
                  %179 = sbr.rel (%p177) target = $region50
                $region47: #{moe_block_forward.5} parent=42 // loop_body
                  _
                $region48: #{moe_block_forward.5} parent=42 // loop_footer
                  %s180 = sadd.s32 1, %s176
                $region49: #{moe_block_forward.5} parent=42 // loop_footer_branch
                  %175 = sbr.rel target = $region45
                $region50: #{moe_block_forward.5} parent=42 // loop_exit
                  _
                loop: start=0, step=1, limit=1
                $region51: #{moe_block_forward.5} parent=42 // loop_pre_header
                  _
                $region52: #{moe_block_forward.5} parent=42 // loop_header
                  %s185 = sphi 0, %s189
                  %p186 = scmp.ge.s32.totalorder %s185, 1
                  %s190 = sphi %s141, %s141
                  %s191 = sphi %s138, %s138
                $region53: #{moe_block_forward.5} parent=42 // loop_header_branch
                  %188 = sbr.rel (%p186) target = $region57
                $region54: #{moe_block_forward.5} parent=42 // loop_body
                  %v192 = vld [vmem:[%s190] sm:$0xf]
                  %193 = vst [vmem:[%s191] sm:$0xf] %v192
                  %v194 = vld [vmem:[%s190 + $0x18] sm:$0xf]
                  %195 = vst [vmem:[%s191 + $0x4] sm:$0xf] %v194
                  %v196 = vld [vmem:[%s190 + $0x30] sm:$0xf]
                  %197 = vst [vmem:[%s191 + $0x8] sm:$0xf] %v196
                  %v198 = vld [vmem:[%s190 + $0x48] sm:$0xf]
                  %199 = vst [vmem:[%s191 + $0xc] sm:$0xf] %v198
                  %v200 = vld [vmem:[%s190 + $0x60] sm:$0xf]
                  %201 = vst [vmem:[%s191 + $0x10] sm:$0xf] %v200
                  %v202 = vld [vmem:[%s190 + $0x78] sm:$0xf]
                  %203 = vst [vmem:[%s191 + $0x14] sm:$0xf] %v202
                  %v204 = vld [vmem:[%s190 + $0x90] sm:$0xf]
                  %205 = vst [vmem:[%s191 + $0x18] sm:$0xf] %v204
                  %v206 = vld [vmem:[%s190 + $0xa8] sm:$0xf]
                  %207 = vst [vmem:[%s191 + $0x1c] sm:$0xf] %v206
                $region55: #{moe_block_forward.5} parent=42 // loop_footer
                  %s189 = sadd.s32 1, %s185
                $region56: #{moe_block_forward.5} parent=42 // loop_footer_branch
                  %184 = sbr.rel target = $region52
                $region57: #{moe_block_forward.5} parent=42 // loop_exit
                  _
              $region43: #{moe_block_forward.5} parent=27 // pred_fallthru
                _
            $region28: #{moe_block_forward.5} parent=23 // pred_fallthru
              _
            // Predicated region
            $region29: #{moe_block_forward.5} parent=23 // pred_check
              _
            $region30: #{moe_block_forward.5} parent=23 // pred_check_branch
              %147 = sbr.rel (0) target = $region32
            $region31: #{moe_block_forward.5} parent=23 // pred_region
              loop: start=0, step=1, limit=1
              $region33: #{moe_block_forward.5} parent=31 // loop_pre_header
                _
              $region34: #{moe_block_forward.5} parent=31 // loop_header
                %s150 = sphi 0, %s154
                %p151 = scmp.ge.s32.totalorder %s150, 1
                %s155 = sphi %s141, %s141
                %s156 = sphi %s138, %s138
              $region35: #{moe_block_forward.5} parent=31 // loop_header_branch
                %153 = sbr.rel (%p151) target = $region39
              $region36: #{moe_block_forward.5} parent=31 // loop_body
                %v157 = vld [vmem:[%s155] sm:$0xf]
                %158 = vst [vmem:[%s156] sm:$0xf] %v157
                %v159 = vld [vmem:[%s155 + $0x18] sm:$0xf]
                %160 = vst [vmem:[%s156 + $0x4] sm:$0xf] %v159
                %v161 = vld [vmem:[%s155 + $0x30] sm:$0xf]
                %162 = vst [vmem:[%s156 + $0x8] sm:$0xf] %v161
                %v163 = vld [vmem:[%s155 + $0x48] sm:$0xf]
                %164 = vst [vmem:[%s156 + $0xc] sm:$0xf] %v163
                %v165 = vld [vmem:[%s155 + $0x60] sm:$0xf]
                %166 = vst [vmem:[%s156 + $0x10] sm:$0xf] %v165
                %v167 = vld [vmem:[%s155 + $0x78] sm:$0xf]
                %168 = vst [vmem:[%s156 + $0x14] sm:$0xf] %v167
                %v169 = vld [vmem:[%s155 + $0x90] sm:$0xf]
                %170 = vst [vmem:[%s156 + $0x18] sm:$0xf] %v169
                %v171 = vld [vmem:[%s155 + $0xa8] sm:$0xf]
                %172 = vst [vmem:[%s156 + $0x1c] sm:$0xf] %v171
              $region37: #{moe_block_forward.5} parent=31 // loop_footer
                %s154 = sadd.s32 1, %s150
              $region38: #{moe_block_forward.5} parent=31 // loop_footer_branch
                %149 = sbr.rel target = $region34
              $region39: #{moe_block_forward.5} parent=31 // loop_exit
                _
            $region32: #{moe_block_forward.5} parent=23 // pred_fallthru
              _
          $region24: #{moe_block_forward.5} parent=19 // pred_fallthru
            _
          %208 = vnop
        $region20: #{moe_block_forward.5} parent=15 // pred_fallthru
          _
        // Predicated region
        $region58: #{moe_block_forward.5} parent=15 // pred_check
          %p209 = pneg %p55
        $region59: #{moe_block_forward.5} parent=15 // pred_check_branch
          %211 = sbr.rel (%p209) target = $region61
        $region60: #{moe_block_forward.5} parent=15 // pred_region
          %s212 = sand.u32 %s45, 1
          %s213 = sand.u32 %s45, 1
          %s214 = smul.addr %s213, 32
          %s215 = scalar_lea.vmem [#allocation3], %s214
          %s216 = smul.addr %s9, 3
          %s217 = sadd.s32 1, %s216
          %s218 = smul.addr %s217, 4
          %s219 = scalar_lea.vmem %s1, %s218
          // Predicated region
          $region62: #{moe_block_forward.5} parent=60 // pred_check
            _
          $region63: #{moe_block_forward.5} parent=60 // pred_check_branch
            %221 = sbr.rel (0) target = $region65
          $region64: #{moe_block_forward.5} parent=60 // pred_region
            // Predicated region
            $region66: #{moe_block_forward.5} parent=64 // pred_check
              _
            $region67: #{moe_block_forward.5} parent=64 // pred_check_branch
              %223 = sbr.rel target = $region69
            $region68: #{moe_block_forward.5} parent=64 // pred_region
              // Predicated region
              $region81: #{moe_block_forward.5} parent=68 // pred_check
                _
              $region82: #{moe_block_forward.5} parent=68 // pred_check_branch
                %252 = sbr.rel (0) target = $region84
              $region83: #{moe_block_forward.5} parent=68 // pred_region
                loop: start=0, step=1, limit=1
                $region85: #{moe_block_forward.5} parent=83 // loop_pre_header
                  _
                $region86: #{moe_block_forward.5} parent=83 // loop_header
                  %s254 = sphi 0, %s258
                  %p255 = scmp.ge.s32.totalorder %s254, 1
                  %s259 = sphi %s219, %s219
                  %s260 = sphi %s215, %s215
                $region87: #{moe_block_forward.5} parent=83 // loop_header_branch
                  %257 = sbr.rel (%p255) target = $region91
                $region88: #{moe_block_forward.5} parent=83 // loop_body
                  _
                $region89: #{moe_block_forward.5} parent=83 // loop_footer
                  %s258 = sadd.s32 1, %s254
                $region90: #{moe_block_forward.5} parent=83 // loop_footer_branch
                  %253 = sbr.rel target = $region86
                $region91: #{moe_block_forward.5} parent=83 // loop_exit
                  _
                loop: start=0, step=1, limit=1
                $region92: #{moe_block_forward.5} parent=83 // loop_pre_header
                  _
                $region93: #{moe_block_forward.5} parent=83 // loop_header
                  %s263 = sphi 0, %s267
                  %p264 = scmp.ge.s32.totalorder %s263, 1
                  %s268 = sphi %s219, %s219
                  %s269 = sphi %s215, %s215
                $region94: #{moe_block_forward.5} parent=83 // loop_header_branch
                  %266 = sbr.rel (%p264) target = $region98
                $region95: #{moe_block_forward.5} parent=83 // loop_body
                  %v270 = vld [vmem:[%s268] sm:$0xf]
                  %271 = vst [vmem:[%s269] sm:$0xf] %v270
                  %v272 = vld [vmem:[%s268 + $0x18] sm:$0xf]
                  %273 = vst [vmem:[%s269 + $0x4] sm:$0xf] %v272
                  %v274 = vld [vmem:[%s268 + $0x30] sm:$0xf]
                  %275 = vst [vmem:[%s269 + $0x8] sm:$0xf] %v274
                  %v276 = vld [vmem:[%s268 + $0x48] sm:$0xf]
                  %277 = vst [vmem:[%s269 + $0xc] sm:$0xf] %v276
                  %v278 = vld [vmem:[%s268 + $0x60] sm:$0xf]
                  %279 = vst [vmem:[%s269 + $0x10] sm:$0xf] %v278
                  %v280 = vld [vmem:[%s268 + $0x78] sm:$0xf]
                  %281 = vst [vmem:[%s269 + $0x14] sm:$0xf] %v280
                  %v282 = vld [vmem:[%s268 + $0x90] sm:$0xf]
                  %283 = vst [vmem:[%s269 + $0x18] sm:$0xf] %v282
                  %v284 = vld [vmem:[%s268 + $0xa8] sm:$0xf]
                  %285 = vst [vmem:[%s269 + $0x1c] sm:$0xf] %v284
                $region96: #{moe_block_forward.5} parent=83 // loop_footer
                  %s267 = sadd.s32 1, %s263
                $region97: #{moe_block_forward.5} parent=83 // loop_footer_branch
                  %262 = sbr.rel target = $region93
                $region98: #{moe_block_forward.5} parent=83 // loop_exit
                  _
              $region84: #{moe_block_forward.5} parent=68 // pred_fallthru
                _
            $region69: #{moe_block_forward.5} parent=64 // pred_fallthru
              _
            // Predicated region
            $region70: #{moe_block_forward.5} parent=64 // pred_check
              _
            $region71: #{moe_block_forward.5} parent=64 // pred_check_branch
              %225 = sbr.rel (0) target = $region73
            $region72: #{moe_block_forward.5} parent=64 // pred_region
              loop: start=0, step=1, limit=1
              $region74: #{moe_block_forward.5} parent=72 // loop_pre_header
                _
              $region75: #{moe_block_forward.5} parent=72 // loop_header
                %s228 = sphi 0, %s232
                %p229 = scmp.ge.s32.totalorder %s228, 1
                %s233 = sphi %s219, %s219
                %s234 = sphi %s215, %s215
              $region76: #{moe_block_forward.5} parent=72 // loop_header_branch
                %231 = sbr.rel (%p229) target = $region80
              $region77: #{moe_block_forward.5} parent=72 // loop_body
                %v235 = vld [vmem:[%s233] sm:$0xf]
                %236 = vst [vmem:[%s234] sm:$0xf] %v235
                %v237 = vld [vmem:[%s233 + $0x18] sm:$0xf]
                %238 = vst [vmem:[%s234 + $0x4] sm:$0xf] %v237
                %v239 = vld [vmem:[%s233 + $0x30] sm:$0xf]
                %240 = vst [vmem:[%s234 + $0x8] sm:$0xf] %v239
                %v241 = vld [vmem:[%s233 + $0x48] sm:$0xf]
                %242 = vst [vmem:[%s234 + $0xc] sm:$0xf] %v241
                %v243 = vld [vmem:[%s233 + $0x60] sm:$0xf]
                %244 = vst [vmem:[%s234 + $0x10] sm:$0xf] %v243
                %v245 = vld [vmem:[%s233 + $0x78] sm:$0xf]
                %246 = vst [vmem:[%s234 + $0x14] sm:$0xf] %v245
                %v247 = vld [vmem:[%s233 + $0x90] sm:$0xf]
                %248 = vst [vmem:[%s234 + $0x18] sm:$0xf] %v247
                %v249 = vld [vmem:[%s233 + $0xa8] sm:$0xf]
                %250 = vst [vmem:[%s234 + $0x1c] sm:$0xf] %v249
              $region78: #{moe_block_forward.5} parent=72 // loop_footer
                %s232 = sadd.s32 1, %s228
              $region79: #{moe_block_forward.5} parent=72 // loop_footer_branch
                %227 = sbr.rel target = $region75
              $region80: #{moe_block_forward.5} parent=72 // loop_exit
                _
            $region73: #{moe_block_forward.5} parent=64 // pred_fallthru
              _
          $region65: #{moe_block_forward.5} parent=60 // pred_fallthru
            _
          %286 = vnop
        $region61: #{moe_block_forward.5} parent=15 // pred_fallthru
          _
        // Predicated region
        $region99: #{moe_block_forward.5} parent=15 // pred_check
          %p287 = pneg %p81
        $region100: #{moe_block_forward.5} parent=15 // pred_check_branch
          %289 = sbr.rel (%p287) target = $region102
        $region101: #{moe_block_forward.5} parent=15 // pred_region
          %s290 = sand.u32 %s71, 1
          %s291 = sand.u32 %s71, 1
          %s292 = smul.addr %s291, 32
          %s293 = scalar_lea.vmem [#allocation4], %s292
          %s294 = smul.addr %s9, 3
          %s295 = sadd.s32 2, %s294
          %s296 = smul.addr %s295, 4
          %s297 = scalar_lea.vmem %s2, %s296
          // Predicated region
          $region103: #{moe_block_forward.5} parent=101 // pred_check
            _
          $region104: #{moe_block_forward.5} parent=101 // pred_check_branch
            %299 = sbr.rel (0) target = $region106
          $region105: #{moe_block_forward.5} parent=101 // pred_region
            // Predicated region
            $region107: #{moe_block_forward.5} parent=105 // pred_check
              _
            $region108: #{moe_block_forward.5} parent=105 // pred_check_branch
              %301 = sbr.rel target = $region110
            $region109: #{moe_block_forward.5} parent=105 // pred_region
              // Predicated region
              $region122: #{moe_block_forward.5} parent=109 // pred_check
                _
              $region123: #{moe_block_forward.5} parent=109 // pred_check_branch
                %330 = sbr.rel (0) target = $region125
              $region124: #{moe_block_forward.5} parent=109 // pred_region
                loop: start=0, step=1, limit=1
                $region126: #{moe_block_forward.5} parent=124 // loop_pre_header
                  _
                $region127: #{moe_block_forward.5} parent=124 // loop_header
                  %s332 = sphi 0, %s336
                  %p333 = scmp.ge.s32.totalorder %s332, 1
                  %s337 = sphi %s297, %s297
                  %s338 = sphi %s293, %s293
                $region128: #{moe_block_forward.5} parent=124 // loop_header_branch
                  %335 = sbr.rel (%p333) target = $region132
                $region129: #{moe_block_forward.5} parent=124 // loop_body
                  _
                $region130: #{moe_block_forward.5} parent=124 // loop_footer
                  %s336 = sadd.s32 1, %s332
                $region131: #{moe_block_forward.5} parent=124 // loop_footer_branch
                  %331 = sbr.rel target = $region127
                $region132: #{moe_block_forward.5} parent=124 // loop_exit
                  _
                loop: start=0, step=1, limit=1
                $region133: #{moe_block_forward.5} parent=124 // loop_pre_header
                  _
                $region134: #{moe_block_forward.5} parent=124 // loop_header
                  %s341 = sphi 0, %s345
                  %p342 = scmp.ge.s32.totalorder %s341, 1
                  %s346 = sphi %s297, %s297
                  %s347 = sphi %s293, %s293
                $region135: #{moe_block_forward.5} parent=124 // loop_header_branch
                  %344 = sbr.rel (%p342) target = $region139
                $region136: #{moe_block_forward.5} parent=124 // loop_body
                  %v348 = vld [vmem:[%s346] sm:$0xf]
                  %349 = vst [vmem:[%s347] sm:$0xf] %v348
                  %v350 = vld [vmem:[%s346 + $0x18] sm:$0xf]
                  %351 = vst [vmem:[%s347 + $0x4] sm:$0xf] %v350
                  %v352 = vld [vmem:[%s346 + $0x30] sm:$0xf]
                  %353 = vst [vmem:[%s347 + $0x8] sm:$0xf] %v352
                  %v354 = vld [vmem:[%s346 + $0x48] sm:$0xf]
                  %355 = vst [vmem:[%s347 + $0xc] sm:$0xf] %v354
                  %v356 = vld [vmem:[%s346 + $0x60] sm:$0xf]
                  %357 = vst [vmem:[%s347 + $0x10] sm:$0xf] %v356
                  %v358 = vld [vmem:[%s346 + $0x78] sm:$0xf]
                  %359 = vst [vmem:[%s347 + $0x14] sm:$0xf] %v358
                  %v360 = vld [vmem:[%s346 + $0x90] sm:$0xf]
                  %361 = vst [vmem:[%s347 + $0x18] sm:$0xf] %v360
                  %v362 = vld [vmem:[%s346 + $0xa8] sm:$0xf]
                  %363 = vst [vmem:[%s347 + $0x1c] sm:$0xf] %v362
                $region137: #{moe_block_forward.5} parent=124 // loop_footer
                  %s345 = sadd.s32 1, %s341
                $region138: #{moe_block_forward.5} parent=124 // loop_footer_branch
                  %340 = sbr.rel target = $region134
                $region139: #{moe_block_forward.5} parent=124 // loop_exit
                  _
              $region125: #{moe_block_forward.5} parent=109 // pred_fallthru
                _
            $region110: #{moe_block_forward.5} parent=105 // pred_fallthru
              _
            // Predicated region
            $region111: #{moe_block_forward.5} parent=105 // pred_check
              _
            $region112: #{moe_block_forward.5} parent=105 // pred_check_branch
              %303 = sbr.rel (0) target = $region114
            $region113: #{moe_block_forward.5} parent=105 // pred_region
              loop: start=0, step=1, limit=1
              $region115: #{moe_block_forward.5} parent=113 // loop_pre_header
                _
              $region116: #{moe_block_forward.5} parent=113 // loop_header
                %s306 = sphi 0, %s310
                %p307 = scmp.ge.s32.totalorder %s306, 1
                %s311 = sphi %s297, %s297
                %s312 = sphi %s293, %s293
              $region117: #{moe_block_forward.5} parent=113 // loop_header_branch
                %309 = sbr.rel (%p307) target = $region121
              $region118: #{moe_block_forward.5} parent=113 // loop_body
                %v313 = vld [vmem:[%s311] sm:$0xf]
                %314 = vst [vmem:[%s312] sm:$0xf] %v313
                %v315 = vld [vmem:[%s311 + $0x18] sm:$0xf]
                %316 = vst [vmem:[%s312 + $0x4] sm:$0xf] %v315
                %v317 = vld [vmem:[%s311 + $0x30] sm:$0xf]
                %318 = vst [vmem:[%s312 + $0x8] sm:$0xf] %v317
                %v319 = vld [vmem:[%s311 + $0x48] sm:$0xf]
                %320 = vst [vmem:[%s312 + $0xc] sm:$0xf] %v319
                %v321 = vld [vmem:[%s311 + $0x60] sm:$0xf]
                %322 = vst [vmem:[%s312 + $0x10] sm:$0xf] %v321
                %v323 = vld [vmem:[%s311 + $0x78] sm:$0xf]
                %324 = vst [vmem:[%s312 + $0x14] sm:$0xf] %v323
                %v325 = vld [vmem:[%s311 + $0x90] sm:$0xf]
                %326 = vst [vmem:[%s312 + $0x18] sm:$0xf] %v325
                %v327 = vld [vmem:[%s311 + $0xa8] sm:$0xf]
                %328 = vst [vmem:[%s312 + $0x1c] sm:$0xf] %v327
              $region119: #{moe_block_forward.5} parent=113 // loop_footer
                %s310 = sadd.s32 1, %s306
              $region120: #{moe_block_forward.5} parent=113 // loop_footer_branch
                %305 = sbr.rel target = $region116
              $region121: #{moe_block_forward.5} parent=113 // loop_exit
                _
            $region114: #{moe_block_forward.5} parent=105 // pred_fallthru
              _
          $region106: #{moe_block_forward.5} parent=101 // pred_fallthru
            _
          %364 = vnop
        $region102: #{moe_block_forward.5} parent=15 // pred_fallthru
          _
      $region16: #{moe_block_forward.5} parent=5 // pred_fallthru
        _
      %p365 = scmp.le.s32.totalorder 1, %s9
      %p366 = scmp.lt.s32.totalorder %s9, 3
      %p367 = pnand %p365, %p366
      %p368 = pneg %p367
      // Predicated region
      $region140: #{moe_block_forward.5} parent=5 // pred_check
        _
      $region141: #{moe_block_forward.5} parent=5 // pred_check_branch
        %370 = sbr.rel (%p367) target = $region143
      $region142: #{moe_block_forward.5} parent=5 // pred_region
        %s371 = ssub.s32 %s9, 1
        %s372 = sand.u32 %s22, 1
        %s373 = sand.u32 %s22, 1
        %s374 = smul.addr %s373, 32
        %s375 = scalar_lea.vmem [#allocation2], %s374
        // Predicated region
        $region144: #{moe_block_forward.5} parent=142 // pred_check
          %p376 = pneg %p35
        $region145: #{moe_block_forward.5} parent=142 // pred_check_branch
          %378 = sbr.rel (%p376) target = $region147
        $region146: #{moe_block_forward.5} parent=142 // pred_region
          _
        $region147: #{moe_block_forward.5} parent=142 // pred_fallthru
          _
        %s379 = sand.u32 %s48, 1
        %s380 = sand.u32 %s48, 1
        %s381 = smul.addr %s380, 32
        %s382 = scalar_lea.vmem [#allocation3], %s381
        // Predicated region
        $region148: #{moe_block_forward.5} parent=142 // pred_check
          %p383 = pneg %p61
        $region149: #{moe_block_forward.5} parent=142 // pred_check_branch
          %385 = sbr.rel (%p383) target = $region151
        $region150: #{moe_block_forward.5} parent=142 // pred_region
          _
        $region151: #{moe_block_forward.5} parent=142 // pred_fallthru
          _
        %s386 = sand.u32 %s74, 1
        %s387 = sand.u32 %s74, 1
        %s388 = smul.addr %s387, 32
        %s389 = scalar_lea.vmem [#allocation4], %s388
        // Predicated region
        $region152: #{moe_block_forward.5} parent=142 // pred_check
          %p390 = pneg %p87
        $region153: #{moe_block_forward.5} parent=142 // pred_check_branch
          %392 = sbr.rel (%p390) target = $region155
        $region154: #{moe_block_forward.5} parent=142 // pred_region
          _
        $region155: #{moe_block_forward.5} parent=142 // pred_fallthru
          _
        %s393 = sand.u32 %s22, 1
        %s394 = sand.u32 %s22, 1
        %s395 = smul.addr %s394, 32
        %s396 = scalar_lea.vmem [#allocation2], %s395
        %p397 = pneg %p35
        %p398 = pneg %p32
        %s399 = sand.u32 %s48, 1
        %s400 = sand.u32 %s48, 1
        %s401 = smul.addr %s400, 32
        %s402 = scalar_lea.vmem [#allocation3], %s401
        %p403 = pneg %p61
        %p404 = pneg %p58
        %s405 = sand.u32 %s74, 1
        %s406 = sand.u32 %s74, 1
        %s407 = smul.addr %s406, 32
        %s408 = scalar_lea.vmem [#allocation4], %s407
        %p409 = pneg %p87
        %p410 = pneg %p84
        %p411 = pneg %p113
        %p412 = pneg %p110
        %s413 = sand.u32 %s100, 1
        %s414 = sand.u32 %s100, 1
        %s415 = smul.addr %s414, 32
        %s416 = scalar_lea.vmem [#allocation5], %s415
        %v418 = vld [vmem:[%s375] sm:$0x1]
        %v419 = vld [vmem:[%s375 + $0x4] sm:$0x1]
        %v420 = vld [vmem:[%s375 + $0x8] sm:$0x1]
        %v421 = vld [vmem:[%s375 + $0xc] sm:$0x1]
        %v422 = vld [vmem:[%s375 + $0x10] sm:$0x1]
        %v423 = vld [vmem:[%s375 + $0x14] sm:$0x1]
        %v424 = vld [vmem:[%s375 + $0x18] sm:$0x1]
        %v425 = vld [vmem:[%s375 + $0x1c] sm:$0x1]
        %v426 = vmul.f32 %v418, 0.25
        %v427 = vmul.f32 %v419, 0.25
        %v428 = vmul.f32 %v420, 0.25
        %v429 = vmul.f32 %v421, 0.25
        %v430 = vmul.f32 %v422, 0.25
        %v431 = vmul.f32 %v423, 0.25
        %v432 = vmul.f32 %v424, 0.25
        %v433 = vmul.f32 %v425, 0.25
        %v434 = vld [vmem:[%s382] sm:$0x1]
        %v435 = vld [vmem:[%s382 + $0x4] sm:$0x1]
        %v436 = vld [vmem:[%s382 + $0x8] sm:$0x1]
        %v437 = vld [vmem:[%s382 + $0xc] sm:$0x1]
        %v438 = vld [vmem:[%s382 + $0x10] sm:$0x1]
        %v439 = vld [vmem:[%s382 + $0x14] sm:$0x1]
        %v440 = vld [vmem:[%s382 + $0x18] sm:$0x1]
        %v441 = vld [vmem:[%s382 + $0x1c] sm:$0x1]
        %v442 = vld [vmem:[%s389] sm:$0x1]
        %v443 = vld [vmem:[%s389 + $0x4] sm:$0x1]
        %v444 = vld [vmem:[%s389 + $0x8] sm:$0x1]
        %v445 = vld [vmem:[%s389 + $0xc] sm:$0x1]
        %v446 = vld [vmem:[%s389 + $0x10] sm:$0x1]
        %v447 = vld [vmem:[%s389 + $0x14] sm:$0x1]
        %v448 = vld [vmem:[%s389 + $0x18] sm:$0x1]
        %v449 = vld [vmem:[%s389 + $0x1c] sm:$0x1]
        %v450 = vpack.c.bf16 %v426, %v426
        %v451 = vpack.c.bf16 %v427, %v427
        %v452 = vpack.c.bf16 %v428, %v428
        %v453 = vpack.c.bf16 %v429, %v429
        %v454 = vpack.c.bf16 %v430, %v430
        %v455 = vpack.c.bf16 %v431, %v431
        %v456 = vpack.c.bf16 %v432, %v432
        %v457 = vpack.c.bf16 %v433, %v433
        %v458 = vpack.c.bf16 %v434, %v434
        %v459 = vpack.c.bf16 %v435, %v435
        %v460 = vpack.c.bf16 %v436, %v436
        %v461 = vpack.c.bf16 %v437, %v437
        %v462 = vpack.c.bf16 %v438, %v438
        %v463 = vpack.c.bf16 %v439, %v439
        %v464 = vpack.c.bf16 %v440, %v440
        %v465 = vpack.c.bf16 %v441, %v441
        %v474 = vunpack.c.l.b16 %v450
        %v475 = vunpack.c.l.b16 %v451
        %v476 = vunpack.c.l.b16 %v452
        %v477 = vunpack.c.l.b16 %v453
        %v478 = vunpack.c.l.b16 %v454
        %v479 = vunpack.c.l.b16 %v455
        %v480 = vunpack.c.l.b16 %v456
        %v481 = vunpack.c.l.b16 %v457
        %v482 = vrot.slane %v475, 7
        %vm483 = vcmask 1041409
        %v484 = vsel %vm483, %v482, %v474
        %v485 = vrot.slane %v476, 6
        %vm486 = vcmask 1042434
        %v487 = vsel %vm486, %v485, %v484
        %v488 = vrot.slane %v477, 5
        %vm489 = vcmask 1043459
        %v490 = vsel %vm489, %v488, %v487
        %v491 = vrot.slane %v478, 4
        %vm492 = vcmask 1044484
        %v493 = vsel %vm492, %v491, %v490
        %v494 = vrot.slane %v479, 3
        %vm495 = vcmask 1045509
        %v496 = vsel %vm495, %v494, %v493
        %v497 = vrot.slane %v480, 2
        %vm498 = vcmask 1046534
        %v499 = vsel %vm498, %v497, %v496
        %v500 = vrot.slane %v481, 1
        %vm501 = vcmask 1047559
        %v502 = vsel %vm501, %v500, %v499
        %v503 = vpack.c.b16 %v502, %v502
        %v512 = vunpack.c.l.b16 %v458
        %v513 = vunpack.c.l.b16 %v459
        %v514 = vunpack.c.l.b16 %v460
        %v515 = vunpack.c.l.b16 %v461
        %v516 = vunpack.c.l.b16 %v462
        %v517 = vunpack.c.l.b16 %v463
        %v518 = vunpack.c.l.b16 %v464
        %v519 = vunpack.c.l.b16 %v465
        %v520 = vrot.slane %v513, 7
        %v521 = vsel %vm483, %v520, %v512
        %v522 = vrot.slane %v514, 6
        %v523 = vsel %vm486, %v522, %v521
        %v524 = vrot.slane %v515, 5
        %v525 = vsel %vm489, %v524, %v523
        %v526 = vrot.slane %v516, 4
        %v527 = vsel %vm492, %v526, %v525
        %v528 = vrot.slane %v517, 3
        %v529 = vsel %vm495, %v528, %v527
        %v530 = vrot.slane %v518, 2
        %v531 = vsel %vm498, %v530, %v529
        %v532 = vrot.slane %v519, 1
        %v533 = vsel %vm501, %v532, %v531
        %v534 = vpack.c.b16 %v533, %v533
        %vm535 = vcmask 130048
        %v537 = vsel %vm535, %v503, 0
        %v540 = vsel %vm535, %v534, 0
        %542 = vmatprep.subr.bf16.mxu0 0
        %543 = vmatpush1.bf16.xpose.msra.mxu0 %v540
        %544 = vmatprep.subr.bf16.mxu0 0
        %545 = vmatpush1.bf16.xpose.msra.mxu0 0
        %546 = vmatprep.subr.bf16.mxu0 0
        %547 = vmatpush1.bf16.xpose.msra.mxu0 0
        %548 = vmatprep.subr.bf16.mxu0 0
        %549 = vmatpush1.bf16.xpose.msra.mxu0 0
        %550 = vmatprep.subr.bf16.mxu0 0
        %551 = vmatpush1.bf16.xpose.msra.mxu0 0
        %552 = vmatprep.subr.bf16.mxu0 0
        %553 = vmatpush1.bf16.xpose.msra.mxu0 0
        %554 = vmatprep.subr.bf16.mxu0 0
        %555 = vmatpush1.bf16.xpose.msra.mxu0 0
        %556 = vmatprep.subr.bf16.mxu0 0
        %557 = vmatpush1.bf16.xpose.msra.mxu0 0
        %558 = vmatprep.subr.bf16.mxu0 0
        %559 = vmatpush1.bf16.xpose.msra.mxu0 0
        %560 = vmatprep.subr.bf16.mxu0 0
        %561 = vmatpush1.bf16.xpose.msra.mxu0 0
        %562 = vmatprep.subr.bf16.mxu0 0
        %563 = vmatpush1.bf16.xpose.msra.mxu0 0
        %564 = vmatprep.subr.bf16.mxu0 0
        %565 = vmatpush1.bf16.xpose.msra.mxu0 0
        %566 = vmatprep.subr.bf16.mxu0 0
        %567 = vmatpush1.bf16.xpose.msra.mxu0 0
        %568 = vmatprep.subr.bf16.mxu0 0
        %569 = vmatpush1.bf16.xpose.msra.mxu0 0
        %570 = vmatprep.subr.bf16.mxu0 0
        %571 = vmatpush1.bf16.xpose.msra.mxu0 0
        %572 = vmatprep.subr.bf16.mxu0 0
        %573 = vmatpush1.bf16.xpose.msra.mxu0 0
        %574 = vmatprep.mubr.bf16.mxu0 0
        %575 = vmatmul.mubr.bf16.gmra.mrb[0].mxu0 %v537
        %v576 = vpop.f32.mrb[0].mxu0
        %v577 = vadd.f32 0.0, %v576
        %v578 = vpop.f32.mrb[0].mxu0
        %v579 = vpop.f32.mrb[0].mxu0
        %v580 = vpop.f32.mrb[0].mxu0
        %581 = vdwg.mxu0
        %vm582 = vcmask 64512
        %v583 = vsel %vm582, %v577, -inf
        %584 = vmax.xlane.f32.xlu0 %v583
        %v585 = vpop.xlane.xlu0 %584
        %v586 = vsub.f32 %v577, %v585
        %v587 = vmul.f32 %v586, 1.442695
        %v588 = vpow.pop %v587
        %v589 = vsel %vm582, %v588, 0.0
        %590 = vadd.xlane.f32.xlu0 %v589
        %v591 = vpop.xlane.xlu0 %590
        %v592 = vrcp.pop %v591
        %v593 = vmul.f32 %v588, %v592
        %v594 = vpack.c.bf16 %v593, %v593
        %v595 = vpack.c.bf16 %v442, %v442
        %v596 = vpack.c.bf16 %v443, %v443
        %v597 = vpack.c.bf16 %v444, %v444
        %v598 = vpack.c.bf16 %v445, %v445
        %v599 = vpack.c.bf16 %v446, %v446
        %v600 = vpack.c.bf16 %v447, %v447
        %v601 = vpack.c.bf16 %v448, %v448
        %v602 = vpack.c.bf16 %v449, %v449
        %v611 = vunpack.c.l.b16 %v595
        %v612 = vunpack.c.l.b16 %v596
        %v613 = vunpack.c.l.b16 %v597
        %v614 = vunpack.c.l.b16 %v598
        %v615 = vunpack.c.l.b16 %v599
        %v616 = vunpack.c.l.b16 %v600
        %v617 = vunpack.c.l.b16 %v601
        %v618 = vunpack.c.l.b16 %v602
        %v619 = vrot.slane %v612, 7
        %v620 = vsel %vm483, %v619, %v611
        %v621 = vrot.slane %v613, 6
        %v622 = vsel %vm486, %v621, %v620
        %v623 = vrot.slane %v614, 5
        %v624 = vsel %vm489, %v623, %v622
        %v625 = vrot.slane %v615, 4
        %v626 = vsel %vm492, %v625, %v624
        %v627 = vrot.slane %v616, 3
        %v628 = vsel %vm495, %v627, %v626
        %v629 = vrot.slane %v617, 2
        %v630 = vsel %vm498, %v629, %v628
        %v631 = vrot.slane %v618, 1
        %v632 = vsel %vm501, %v631, %v630
        %v633 = vpack.c.b16 %v632, %v632
        %v635 = vsel %vm582, %v594, 0
        %vm637 = vcmask 1043456
        %v639 = vsel %vm637, %v633, 0
        %641 = vmatprep.subr.bf16.mxu0 0
        %642 = vmatpush1.bf16.msra.mxu0 %v639
        %643 = vmatprep.subr.bf16.mxu0 0
        %644 = vmatpush1.bf16.msra.mxu0 0
        %645 = vmatprep.subr.bf16.mxu0 0
        %646 = vmatpush1.bf16.msra.mxu0 0
        %647 = vmatprep.subr.bf16.mxu0 0
        %648 = vmatpush1.bf16.msra.mxu0 0
        %649 = vmatprep.subr.bf16.mxu0 0
        %650 = vmatpush1.bf16.msra.mxu0 0
        %651 = vmatprep.subr.bf16.mxu0 0
        %652 = vmatpush1.bf16.msra.mxu0 0
        %653 = vmatprep.subr.bf16.mxu0 0
        %654 = vmatpush1.bf16.msra.mxu0 0
        %655 = vmatprep.subr.bf16.mxu0 0
        %656 = vmatpush1.bf16.msra.mxu0 0
        %657 = vmatprep.subr.bf16.mxu0 0
        %658 = vmatpush1.bf16.msra.mxu0 0
        %659 = vmatprep.subr.bf16.mxu0 0
        %660 = vmatpush1.bf16.msra.mxu0 0
        %661 = vmatprep.subr.bf16.mxu0 0
        %662 = vmatpush1.bf16.msra.mxu0 0
        %663 = vmatprep.subr.bf16.mxu0 0
        %664 = vmatpush1.bf16.msra.mxu0 0
        %665 = vmatprep.subr.bf16.mxu0 0
        %666 = vmatpush1.bf16.msra.mxu0 0
        %667 = vmatprep.subr.bf16.mxu0 0
        %668 = vmatpush1.bf16.msra.mxu0 0
        %669 = vmatprep.subr.bf16.mxu0 0
        %670 = vmatpush1.bf16.msra.mxu0 0
        %671 = vmatprep.subr.bf16.mxu0 0
        %672 = vmatpush1.bf16.msra.mxu0 0
        %673 = vmatprep.mubr.bf16.mxu0 0
        %674 = vmatmul.mubr.bf16.gmra.mrb[0].mxu0 %v635
        %v675 = vpop.f32.mrb[0].mxu0
        %v676 = vadd.f32 0.0, %v675
        %v677 = vpop.f32.mrb[0].mxu0
        %v678 = vpop.f32.mrb[0].mxu0
        %v679 = vpop.f32.mrb[0].mxu0
        %680 = vdwg.mxu0
        %v682 = vcombine.high %v676, %v676
        %v684 = vunpack.c.l.s4 1966171168
        %v685 = vunpack.c.0.s8 %v684
        %v686 = vlaneseq
        %v687 = vshrl.u32 %v686, 7
        %v688 = vsub.s32 %v685, %v687
        %v689 = vrot.slane %v676, %v688
        %v691 = vunpack.c.l.s4 1966171168
        %v692 = vunpack.c.0.s8 %v691
        %v693 = vlaneseq
        %v694 = vshrl.u32 %v693, 7
        %v695 = vsub.s32 %v692, %v694
        %v696 = vrot.slane %v682, %v695
        %v697 = vcombine.high %v689, %v689
        %v698 = vcombine.high %v696, %v696
        %v700 = vunpack.c.l.s4 1966171168
        %v701 = vunpack.c.0.s8 %v700
        %v702 = vlaneseq
        %v703 = vshrl.u32 %v702, 7
        %v704 = vsub.s32 %v701, %v703
        %v705 = vrot.slane %v689, %v704
        %v707 = vunpack.c.l.s4 1966171168
        %v708 = vunpack.c.0.s8 %v707
        %v709 = vlaneseq
        %v710 = vshrl.u32 %v709, 7
        %v711 = vsub.s32 %v708, %v710
        %v712 = vrot.slane %v696, %v711
        %v714 = vunpack.c.l.s4 1966171168
        %v715 = vunpack.c.0.s8 %v714
        %v716 = vlaneseq
        %v717 = vshrl.u32 %v716, 7
        %v718 = vsub.s32 %v715, %v717
        %v719 = vrot.slane %v697, %v718
        %v721 = vunpack.c.l.s4 1966171168
        %v722 = vunpack.c.0.s8 %v721
        %v723 = vlaneseq
        %v724 = vshrl.u32 %v723, 7
        %v725 = vsub.s32 %v722, %v724
        %v726 = vrot.slane %v698, %v725
        %v727 = vcombine.high %v705, %v705
        %v728 = vcombine.high %v712, %v712
        %v729 = vcombine.high %v719, %v719
        %v730 = vcombine.high %v726, %v726
        %vm739 = vcmask 122880
        %740 = vst.msk [vmem:[%s416] sm:$0x1] %vm739, %v705
        %741 = vst.msk [vmem:[%s416 + $0x4] sm:$0x1] %vm739, %v719
        %742 = vst.msk [vmem:[%s416 + $0x8] sm:$0x1] %vm739, %v727
        %743 = vst.msk [vmem:[%s416 + $0xc] sm:$0x1] %vm739, %v729
        %744 = vst.msk [vmem:[%s416 + $0x10] sm:$0x1] %vm739, %v712
        %745 = vst.msk [vmem:[%s416 + $0x14] sm:$0x1] %vm739, %v726
        %746 = vst.msk [vmem:[%s416 + $0x18] sm:$0x1] %vm739, %v728
        %747 = vst.msk [vmem:[%s416 + $0x1c] sm:$0x1] %vm739, %v730
        %v748 = vld [vmem:[%s375 + $0x1] sm:$0x1]
        %v749 = vld [vmem:[%s375 + $0x5] sm:$0x1]
        %v750 = vld [vmem:[%s375 + $0x9] sm:$0x1]
        %v751 = vld [vmem:[%s375 + $0xd] sm:$0x1]
        %v752 = vld [vmem:[%s375 + $0x11] sm:$0x1]
        %v753 = vld [vmem:[%s375 + $0x15] sm:$0x1]
        %v754 = vld [vmem:[%s375 + $0x19] sm:$0x1]
        %v755 = vld [vmem:[%s375 + $0x1d] sm:$0x1]
        %v756 = vmul.f32 %v748, 0.25
        %v757 = vmul.f32 %v749, 0.25
        %v758 = vmul.f32 %v750, 0.25
        %v759 = vmul.f32 %v751, 0.25
        %v760 = vmul.f32 %v752, 0.25
        %v761 = vmul.f32 %v753, 0.25
        %v762 = vmul.f32 %v754, 0.25
        %v763 = vmul.f32 %v755, 0.25
        %v764 = vld [vmem:[%s382 + $0x1] sm:$0x1]
        %v765 = vld [vmem:[%s382 + $0x5] sm:$0x1]
        %v766 = vld [vmem:[%s382 + $0x9] sm:$0x1]
        %v767 = vld [vmem:[%s382 + $0xd] sm:$0x1]
        %v768 = vld [vmem:[%s382 + $0x11] sm:$0x1]
        %v769 = vld [vmem:[%s382 + $0x15] sm:$0x1]
        %v770 = vld [vmem:[%s382 + $0x19] sm:$0x1]
        %v771 = vld [vmem:[%s382 + $0x1d] sm:$0x1]
        %v772 = vld [vmem:[%s389 + $0x1] sm:$0x1]
        %v773 = vld [vmem:[%s389 + $0x5] sm:$0x1]
        %v774 = vld [vmem:[%s389 + $0x9] sm:$0x1]
        %v775 = vld [vmem:[%s389 + $0xd] sm:$0x1]
        %v776 = vld [vmem:[%s389 + $0x11] sm:$0x1]
        %v777 = vld [vmem:[%s389 + $0x15] sm:$0x1]
        %v778 = vld [vmem:[%s389 + $0x19] sm:$0x1]
        %v779 = vld [vmem:[%s389 + $0x1d] sm:$0x1]
        %v780 = vpack.c.bf16 %v756, %v756
        %v781 = vpack.c.bf16 %v757, %v757
        %v782 = vpack.c.bf16 %v758, %v758
        %v783 = vpack.c.bf16 %v759, %v759
        %v784 = vpack.c.bf16 %v760, %v760
        %v785 = vpack.c.bf16 %v761, %v761
        %v786 = vpack.c.bf16 %v762, %v762
        %v787 = vpack.c.bf16 %v763, %v763
        %v788 = vpack.c.bf16 %v764, %v764
        %v789 = vpack.c.bf16 %v765, %v765
        %v790 = vpack.c.bf16 %v766, %v766
        %v791 = vpack.c.bf16 %v767, %v767
        %v792 = vpack.c.bf16 %v768, %v768
        %v793 = vpack.c.bf16 %v769, %v769
        %v794 = vpack.c.bf16 %v770, %v770
        %v795 = vpack.c.bf16 %v771, %v771
        %v804 = vunpack.c.l.b16 %v780
        %v805 = vunpack.c.l.b16 %v781
        %v806 = vunpack.c.l.b16 %v782
        %v807 = vunpack.c.l.b16 %v783
        %v808 = vunpack.c.l.b16 %v784
        %v809 = vunpack.c.l.b16 %v785
        %v810 = vunpack.c.l.b16 %v786
        %v811 = vunpack.c.l.b16 %v787
        %v812 = vrot.slane %v805, 7
        %v813 = vsel %vm483, %v812, %v804
        %v814 = vrot.slane %v806, 6
        %v815 = vsel %vm486, %v814, %v813
        %v816 = vrot.slane %v807, 5
        %v817 = vsel %vm489, %v816, %v815
        %v818 = vrot.slane %v808, 4
        %v819 = vsel %vm492, %v818, %v817
        %v820 = vrot.slane %v809, 3
        %v821 = vsel %vm495, %v820, %v819
        %v822 = vrot.slane %v810, 2
        %v823 = vsel %vm498, %v822, %v821
        %v824 = vrot.slane %v811, 1
        %v825 = vsel %vm501, %v824, %v823
        %v826 = vpack.c.b16 %v825, %v825
        %v835 = vunpack.c.l.b16 %v788
        %v836 = vunpack.c.l.b16 %v789
        %v837 = vunpack.c.l.b16 %v790
        %v838 = vunpack.c.l.b16 %v791
        %v839 = vunpack.c.l.b16 %v792
        %v840 = vunpack.c.l.b16 %v793
        %v841 = vunpack.c.l.b16 %v794
        %v842 = vunpack.c.l.b16 %v795
        %v843 = vrot.slane %v836, 7
        %v844 = vsel %vm483, %v843, %v835
        %v845 = vrot.slane %v837, 6
        %v846 = vsel %vm486, %v845, %v844
        %v847 = vrot.slane %v838, 5
        %v848 = vsel %vm489, %v847, %v846
        %v849 = vrot.slane %v839, 4
        %v850 = vsel %vm492, %v849, %v848
        %v851 = vrot.slane %v840, 3
        %v852 = vsel %vm495, %v851, %v850
        %v853 = vrot.slane %v841, 2
        %v854 = vsel %vm498, %v853, %v852
        %v855 = vrot.slane %v842, 1
        %v856 = vsel %vm501, %v855, %v854
        %v857 = vpack.c.b16 %v856, %v856
        %v859 = vsel %vm535, %v826, 0
        %v862 = vsel %vm535, %v857, 0
        %864 = vmatprep.subr.bf16.mxu0 0
        %865 = vmatpush1.bf16.xpose.msra.mxu0 %v862
        %866 = vmatprep.subr.bf16.mxu0 0
        %867 = vmatpush1.bf16.xpose.msra.mxu0 0
        %868 = vmatprep.subr.bf16.mxu0 0
        %869 = vmatpush1.bf16.xpose.msra.mxu0 0
        %870 = vmatprep.subr.bf16.mxu0 0
        %871 = vmatpush1.bf16.xpose.msra.mxu0 0
        %872 = vmatprep.subr.bf16.mxu0 0
        %873 = vmatpush1.bf16.xpose.msra.mxu0 0
        %874 = vmatprep.subr.bf16.mxu0 0
        %875 = vmatpush1.bf16.xpose.msra.mxu0 0
        %876 = vmatprep.subr.bf16.mxu0 0
        %877 = vmatpush1.bf16.xpose.msra.mxu0 0
        %878 = vmatprep.subr.bf16.mxu0 0
        %879 = vmatpush1.bf16.xpose.msra.mxu0 0
        %880 = vmatprep.subr.bf16.mxu0 0
        %881 = vmatpush1.bf16.xpose.msra.mxu0 0
        %882 = vmatprep.subr.bf16.mxu0 0
        %883 = vmatpush1.bf16.xpose.msra.mxu0 0
        %884 = vmatprep.subr.bf16.mxu0 0
        %885 = vmatpush1.bf16.xpose.msra.mxu0 0
        %886 = vmatprep.subr.bf16.mxu0 0
        %887 = vmatpush1.bf16.xpose.msra.mxu0 0
        %888 = vmatprep.subr.bf16.mxu0 0
        %889 = vmatpush1.bf16.xpose.msra.mxu0 0
        %890 = vmatprep.subr.bf16.mxu0 0
        %891 = vmatpush1.bf16.xpose.msra.mxu0 0
        %892 = vmatprep.subr.bf16.mxu0 0
        %893 = vmatpush1.bf16.xpose.msra.mxu0 0
        %894 = vmatprep.subr.bf16.mxu0 0
        %895 = vmatpush1.bf16.xpose.msra.mxu0 0
        %896 = vmatprep.mubr.bf16.mxu0 0
        %897 = vmatmul.mubr.bf16.gmra.mrb[0].mxu0 %v859
        %v898 = vpop.f32.mrb[0].mxu0
        %v899 = vadd.f32 0.0, %v898
        %v900 = vpop.f32.mrb[0].mxu0
        %v901 = vpop.f32.mrb[0].mxu0
        %v902 = vpop.f32.mrb[0].mxu0
        %903 = vdwg.mxu0
        %v904 = vsel %vm582, %v899, -inf
        %905 = vmax.xlane.f32.xlu0 %v904
        %v906 = vpop.xlane.xlu0 %905
        %v907 = vsub.f32 %v899, %v906
        %v908 = vmul.f32 %v907, 1.442695
        %v909 = vpow.pop %v908
        %v910 = vsel %vm582, %v909, 0.0
        %911 = vadd.xlane.f32.xlu0 %v910
        %v912 = vpop.xlane.xlu0 %911
        %v913 = vrcp.pop %v912
        %v914 = vmul.f32 %v909, %v913
        %v915 = vpack.c.bf16 %v914, %v914
        %v916 = vpack.c.bf16 %v772, %v772
        %v917 = vpack.c.bf16 %v773, %v773
        %v918 = vpack.c.bf16 %v774, %v774
        %v919 = vpack.c.bf16 %v775, %v775
        %v920 = vpack.c.bf16 %v776, %v776
        %v921 = vpack.c.bf16 %v777, %v777
        %v922 = vpack.c.bf16 %v778, %v778
        %v923 = vpack.c.bf16 %v779, %v779
        %v932 = vunpack.c.l.b16 %v916
        %v933 = vunpack.c.l.b16 %v917
        %v934 = vunpack.c.l.b16 %v918
        %v935 = vunpack.c.l.b16 %v919
        %v936 = vunpack.c.l.b16 %v920
        %v937 = vunpack.c.l.b16 %v921
        %v938 = vunpack.c.l.b16 %v922
        %v939 = vunpack.c.l.b16 %v923
        %v940 = vrot.slane %v933, 7
        %v941 = vsel %vm483, %v940, %v932
        %v942 = vrot.slane %v934, 6
        %v943 = vsel %vm486, %v942, %v941
        %v944 = vrot.slane %v935, 5
        %v945 = vsel %vm489, %v944, %v943
        %v946 = vrot.slane %v936, 4
        %v947 = vsel %vm492, %v946, %v945
        %v948 = vrot.slane %v937, 3
        %v949 = vsel %vm495, %v948, %v947
        %v950 = vrot.slane %v938, 2
        %v951 = vsel %vm498, %v950, %v949
        %v952 = vrot.slane %v939, 1
        %v953 = vsel %vm501, %v952, %v951
        %v954 = vpack.c.b16 %v953, %v953
        %v956 = vsel %vm582, %v915, 0
        %v959 = vsel %vm637, %v954, 0
        %961 = vmatprep.subr.bf16.mxu0 0
        %962 = vmatpush1.bf16.msra.mxu0 %v959
        %963 = vmatprep.subr.bf16.mxu0 0
        %964 = vmatpush1.bf16.msra.mxu0 0
        %965 = vmatprep.subr.bf16.mxu0 0
        %966 = vmatpush1.bf16.msra.mxu0 0
        %967 = vmatprep.subr.bf16.mxu0 0
        %968 = vmatpush1.bf16.msra.mxu0 0
        %969 = vmatprep.subr.bf16.mxu0 0
        %970 = vmatpush1.bf16.msra.mxu0 0
        %971 = vmatprep.subr.bf16.mxu0 0
        %972 = vmatpush1.bf16.msra.mxu0 0
        %973 = vmatprep.subr.bf16.mxu0 0
        %974 = vmatpush1.bf16.msra.mxu0 0
        %975 = vmatprep.subr.bf16.mxu0 0
        %976 = vmatpush1.bf16.msra.mxu0 0
        %977 = vmatprep.subr.bf16.mxu0 0
        %978 = vmatpush1.bf16.msra.mxu0 0
        %979 = vmatprep.subr.bf16.mxu0 0
        %980 = vmatpush1.bf16.msra.mxu0 0
        %981 = vmatprep.subr.bf16.mxu0 0
        %982 = vmatpush1.bf16.msra.mxu0 0
        %983 = vmatprep.subr.bf16.mxu0 0
        %984 = vmatpush1.bf16.msra.mxu0 0
        %985 = vmatprep.subr.bf16.mxu0 0
        %986 = vmatpush1.bf16.msra.mxu0 0
        %987 = vmatprep.subr.bf16.mxu0 0
        %988 = vmatpush1.bf16.msra.mxu0 0
        %989 = vmatprep.subr.bf16.mxu0 0
        %990 = vmatpush1.bf16.msra.mxu0 0
        %991 = vmatprep.subr.bf16.mxu0 0
        %992 = vmatpush1.bf16.msra.mxu0 0
        %993 = vmatprep.mubr.bf16.mxu0 0
        %994 = vmatmul.mubr.bf16.gmra.mrb[0].mxu0 %v956
        %v995 = vpop.f32.mrb[0].mxu0
        %v996 = vadd.f32 0.0, %v995
        %v997 = vpop.f32.mrb[0].mxu0
        %v998 = vpop.f32.mrb[0].mxu0
        %v999 = vpop.f32.mrb[0].mxu0
        %1000 = vdwg.mxu0
        %v1002 = vcombine.high %v996, %v996
        %v1004 = vunpack.c.l.s4 1966171168
        %v1005 = vunpack.c.0.s8 %v1004
        %v1006 = vlaneseq
        %v1007 = vshrl.u32 %v1006, 7
        %v1008 = vsub.s32 %v1005, %v1007
        %v1009 = vrot.slane %v996, %v1008
        %v1011 = vunpack.c.l.s4 1966171168
        %v1012 = vunpack.c.0.s8 %v1011
        %v1013 = vlaneseq
        %v1014 = vshrl.u32 %v1013, 7
        %v1015 = vsub.s32 %v1012, %v1014
        %v1016 = vrot.slane %v1002, %v1015
        %v1017 = vcombine.high %v1009, %v1009
        %v1018 = vcombine.high %v1016, %v1016
        %v1020 = vunpack.c.l.s4 1966171168
        %v1021 = vunpack.c.0.s8 %v1020
        %v1022 = vlaneseq
        %v1023 = vshrl.u32 %v1022, 7
        %v1024 = vsub.s32 %v1021, %v1023
        %v1025 = vrot.slane %v1009, %v1024
        %v1027 = vunpack.c.l.s4 1966171168
        %v1028 = vunpack.c.0.s8 %v1027
        %v1029 = vlaneseq
        %v1030 = vshrl.u32 %v1029, 7
        %v1031 = vsub.s32 %v1028, %v1030
        %v1032 = vrot.slane %v1016, %v1031
        %v1034 = vunpack.c.l.s4 1966171168
        %v1035 = vunpack.c.0.s8 %v1034
        %v1036 = vlaneseq
        %v1037 = vshrl.u32 %v1036, 7
        %v1038 = vsub.s32 %v1035, %v1037
        %v1039 = vrot.slane %v1017, %v1038
        %v1041 = vunpack.c.l.s4 1966171168
        %v1042 = vunpack.c.0.s8 %v1041
        %v1043 = vlaneseq
        %v1044 = vshrl.u32 %v1043, 7
        %v1045 = vsub.s32 %v1042, %v1044
        %v1046 = vrot.slane %v1018, %v1045
        %v1047 = vcombine.high %v1025, %v1025
        %v1048 = vcombine.high %v1032, %v1032
        %v1049 = vcombine.high %v1039, %v1039
        %v1050 = vcombine.high %v1046, %v1046
        %1059 = vst.msk [vmem:[%s416 + $0x1] sm:$0x1] %vm739, %v1025
        %1060 = vst.msk [vmem:[%s416 + $0x5] sm:$0x1] %vm739, %v1039
        %1061 = vst.msk [vmem:[%s416 + $0x9] sm:$0x1] %vm739, %v1047
        %1062 = vst.msk [vmem:[%s416 + $0xd] sm:$0x1] %vm739, %v1049
        %1063 = vst.msk [vmem:[%s416 + $0x11] sm:$0x1] %vm739, %v1032
        %1064 = vst.msk [vmem:[%s416 + $0x15] sm:$0x1] %vm739, %v1046
        %1065 = vst.msk [vmem:[%s416 + $0x19] sm:$0x1] %vm739, %v1048
        %1066 = vst.msk [vmem:[%s416 + $0x1d] sm:$0x1] %vm739, %v1050
        %v1067 = vld [vmem:[%s375 + $0x2] sm:$0x1]
        %v1068 = vld [vmem:[%s375 + $0x6] sm:$0x1]
        %v1069 = vld [vmem:[%s375 + $0xa] sm:$0x1]
        %v1070 = vld [vmem:[%s375 + $0xe] sm:$0x1]
        %v1071 = vld [vmem:[%s375 + $0x12] sm:$0x1]
        %v1072 = vld [vmem:[%s375 + $0x16] sm:$0x1]
        %v1073 = vld [vmem:[%s375 + $0x1a] sm:$0x1]
        %v1074 = vld [vmem:[%s375 + $0x1e] sm:$0x1]
        %v1075 = vmul.f32 %v1067, 0.25
        %v1076 = vmul.f32 %v1068, 0.25
        %v1077 = vmul.f32 %v1069, 0.25
        %v1078 = vmul.f32 %v1070, 0.25
        %v1079 = vmul.f32 %v1071, 0.25
        %v1080 = vmul.f32 %v1072, 0.25
        %v1081 = vmul.f32 %v1073, 0.25
        %v1082 = vmul.f32 %v1074, 0.25
        %v1083 = vld [vmem:[%s382 + $0x2] sm:$0x1]
        %v1084 = vld [vmem:[%s382 + $0x6] sm:$0x1]
        %v1085 = vld [vmem:[%s382 + $0xa] sm:$0x1]
        %v1086 = vld [vmem:[%s382 + $0xe] sm:$0x1]
        %v1087 = vld [vmem:[%s382 + $0x12] sm:$0x1]
        %v1088 = vld [vmem:[%s382 + $0x16] sm:$0x1]
        %v1089 = vld [vmem:[%s382 + $0x1a] sm:$0x1]
        %v1090 = vld [vmem:[%s382 + $0x1e] sm:$0x1]
        %v1091 = vld [vmem:[%s389 + $0x2] sm:$0x1]
        %v1092 = vld [vmem:[%s389 + $0x6] sm:$0x1]
        %v1093 = vld [vmem:[%s389 + $0xa] sm:$0x1]
        %v1094 = vld [vmem:[%s389 + $0xe] sm:$0x1]
        %v1095 = vld [vmem:[%s389 + $0x12] sm:$0x1]
        %v1096 = vld [vmem:[%s389 + $0x16] sm:$0x1]
        %v1097 = vld [vmem:[%s389 + $0x1a] sm:$0x1]
        %v1098 = vld [vmem:[%s389 + $0x1e] sm:$0x1]
        %v1099 = vpack.c.bf16 %v1075, %v1075
        %v1100 = vpack.c.bf16 %v1076, %v1076
        %v1101 = vpack.c.bf16 %v1077, %v1077
        %v1102 = vpack.c.bf16 %v1078, %v1078
        %v1103 = vpack.c.bf16 %v1079, %v1079
        %v1104 = vpack.c.bf16 %v1080, %v1080
        %v1105 = vpack.c.bf16 %v1081, %v1081
        %v1106 = vpack.c.bf16 %v1082, %v1082
        %v1107 = vpack.c.bf16 %v1083, %v1083
        %v1108 = vpack.c.bf16 %v1084, %v1084
        %v1109 = vpack.c.bf16 %v1085, %v1085
        %v1110 = vpack.c.bf16 %v1086, %v1086
        %v1111 = vpack.c.bf16 %v1087, %v1087
        %v1112 = vpack.c.bf16 %v1088, %v1088
        %v1113 = vpack.c.bf16 %v1089, %v1089
        %v1114 = vpack.c.bf16 %v1090, %v1090
        %v1123 = vunpack.c.l.b16 %v1099
        %v1124 = vunpack.c.l.b16 %v1100
        %v1125 = vunpack.c.l.b16 %v1101
        %v1126 = vunpack.c.l.b16 %v1102
        %v1127 = vunpack.c.l.b16 %v1103
        %v1128 = vunpack.c.l.b16 %v1104
        %v1129 = vunpack.c.l.b16 %v1105
        %v1130 = vunpack.c.l.b16 %v1106
        %v1131 = vrot.slane %v1124, 7
        %v1132 = vsel %vm483, %v1131, %v1123
        %v1133 = vrot.slane %v1125, 6
        %v1134 = vsel %vm486, %v1133, %v1132
        %v1135 = vrot.slane %v1126, 5
        %v1136 = vsel %vm489, %v1135, %v1134
        %v1137 = vrot.slane %v1127, 4
        %v1138 = vsel %vm492, %v1137, %v1136
        %v1139 = vrot.slane %v1128, 3
        %v1140 = vsel %vm495, %v1139, %v1138
        %v1141 = vrot.slane %v1129, 2
        %v1142 = vsel %vm498, %v1141, %v1140
        %v1143 = vrot.slane %v1130, 1
        %v1144 = vsel %vm501, %v1143, %v1142
        %v1145 = vpack.c.b16 %v1144, %v1144
        %v1154 = vunpack.c.l.b16 %v1107
        %v1155 = vunpack.c.l.b16 %v1108
        %v1156 = vunpack.c.l.b16 %v1109
        %v1157 = vunpack.c.l.b16 %v1110
        %v1158 = vunpack.c.l.b16 %v1111
        %v1159 = vunpack.c.l.b16 %v1112
        %v1160 = vunpack.c.l.b16 %v1113
        %v1161 = vunpack.c.l.b16 %v1114
        %v1162 = vrot.slane %v1155, 7
        %v1163 = vsel %vm483, %v1162, %v1154
        %v1164 = vrot.slane %v1156, 6
        %v1165 = vsel %vm486, %v1164, %v1163
        %v1166 = vrot.slane %v1157, 5
        %v1167 = vsel %vm489, %v1166, %v1165
        %v1168 = vrot.slane %v1158, 4
        %v1169 = vsel %vm492, %v1168, %v1167
        %v1170 = vrot.slane %v1159, 3
        %v1171 = vsel %vm495, %v1170, %v1169
        %v1172 = vrot.slane %v1160, 2
        %v1173 = vsel %vm498, %v1172, %v1171
        %v1174 = vrot.slane %v1161, 1
        %v1175 = vsel %vm501, %v1174, %v1173
        %v1176 = vpack.c.b16 %v1175, %v1175
        %v1178 = vsel %vm535, %v1145, 0
        %v1181 = vsel %vm535, %v1176, 0
        %1183 = vmatprep.subr.bf16.mxu0 0
        %1184 = vmatpush1.bf16.xpose.msra.mxu0 %v1181
        %1185 = vmatprep.subr.bf16.mxu0 0
        %1186 = vmatpush1.bf16.xpose.msra.mxu0 0
        %1187 = vmatprep.subr.bf16.mxu0 0
        %1188 = vmatpush1.bf16.xpose.msra.mxu0 0
        %1189 = vmatprep.subr.bf16.mxu0 0
        %1190 = vmatpush1.bf16.xpose.msra.mxu0 0
        %1191 = vmatprep.subr.bf16.mxu0 0
        %1192 = vmatpush1.bf16.xpose.msra.mxu0 0
        %1193 = vmatprep.subr.bf16.mxu0 0
        %1194 = vmatpush1.bf16.xpose.msra.mxu0 0
        %1195 = vmatprep.subr.bf16.mxu0 0
        %1196 = vmatpush1.bf16.xpose.msra.mxu0 0
        %1197 = vmatprep.subr.bf16.mxu0 0
        %1198 = vmatpush1.bf16.xpose.msra.mxu0 0
        %1199 = vmatprep.subr.bf16.mxu0 0
        %1200 = vmatpush1.bf16.xpose.msra.mxu0 0
        %1201 = vmatprep.subr.bf16.mxu0 0
        %1202 = vmatpush1.bf16.xpose.msra.mxu0 0
        %1203 = vmatprep.subr.bf16.mxu0 0
        %1204 = vmatpush1.bf16.xpose.msra.mxu0 0
        %1205 = vmatprep.subr.bf16.mxu0 0
        %1206 = vmatpush1.bf16.xpose.msra.mxu0 0
        %1207 = vmatprep.subr.bf16.mxu0 0
        %1208 = vmatpush1.bf16.xpose.msra.mxu0 0
        %1209 = vmatprep.subr.bf16.mxu0 0
        %1210 = vmatpush1.bf16.xpose.msra.mxu0 0
        %1211 = vmatprep.subr.bf16.mxu0 0
        %1212 = vmatpush1.bf16.xpose.msra.mxu0 0
        %1213 = vmatprep.subr.bf16.mxu0 0
        %1214 = vmatpush1.bf16.xpose.msra.mxu0 0
        %1215 = vmatprep.mubr.bf16.mxu0 0
        %1216 = vmatmul.mubr.bf16.gmra.mrb[0].mxu0 %v1178
        %v1217 = vpop.f32.mrb[0].mxu0
        %v1218 = vadd.f32 0.0, %v1217
        %v1219 = vpop.f32.mrb[0].mxu0
        %v1220 = vpop.f32.mrb[0].mxu0
        %v1221 = vpop.f32.mrb[0].mxu0
        %1222 = vdwg.mxu0
        %v1223 = vsel %vm582, %v1218, -inf
        %1224 = vmax.xlane.f32.xlu0 %v1223
        %v1225 = vpop.xlane.xlu0 %1224
        %v1226 = vsub.f32 %v1218, %v1225
        %v1227 = vmul.f32 %v1226, 1.442695
        %v1228 = vpow.pop %v1227
        %v1229 = vsel %vm582, %v1228, 0.0
        %1230 = vadd.xlane.f32.xlu0 %v1229
        %v1231 = vpop.xlane.xlu0 %1230
        %v1232 = vrcp.pop %v1231
        %v1233 = vmul.f32 %v1228, %v1232
        %v1234 = vpack.c.bf16 %v1233, %v1233
        %v1235 = vpack.c.bf16 %v1091, %v1091
        %v1236 = vpack.c.bf16 %v1092, %v1092
        %v1237 = vpack.c.bf16 %v1093, %v1093
        %v1238 = vpack.c.bf16 %v1094, %v1094
        %v1239 = vpack.c.bf16 %v1095, %v1095
        %v1240 = vpack.c.bf16 %v1096, %v1096
        %v1241 = vpack.c.bf16 %v1097, %v1097
        %v1242 = vpack.c.bf16 %v1098, %v1098
        %v1251 = vunpack.c.l.b16 %v1235
        %v1252 = vunpack.c.l.b16 %v1236
        %v1253 = vunpack.c.l.b16 %v1237
        %v1254 = vunpack.c.l.b16 %v1238
        %v1255 = vunpack.c.l.b16 %v1239
        %v1256 = vunpack.c.l.b16 %v1240
        %v1257 = vunpack.c.l.b16 %v1241
        %v1258 = vunpack.c.l.b16 %v1242
        %v1259 = vrot.slane %v1252, 7
        %v1260 = vsel %vm483, %v1259, %v1251
        %v1261 = vrot.slane %v1253, 6
        %v1262 = vsel %vm486, %v1261, %v1260
        %v1263 = vrot.slane %v1254, 5
        %v1264 = vsel %vm489, %v1263, %v1262
        %v1265 = vrot.slane %v1255, 4
        %v1266 = vsel %vm492, %v1265, %v1264
        %v1267 = vrot.slane %v1256, 3
        %v1268 = vsel %vm495, %v1267, %v1266
        %v1269 = vrot.slane %v1257, 2
        %v1270 = vsel %vm498, %v1269, %v1268
        %v1271 = vrot.slane %v1258, 1
        %v1272 = vsel %vm501, %v1271, %v1270
        %v1273 = vpack.c.b16 %v1272, %v1272
        %v1275 = vsel %vm582, %v1234, 0
        %v1278 = vsel %vm637, %v1273, 0
        %1280 = vmatprep.subr.bf16.mxu0 0
        %1281 = vmatpush1.bf16.msra.mxu0 %v1278
        %1282 = vmatprep.subr.bf16.mxu0 0
        %1283 = vmatpush1.bf16.msra.mxu0 0
        %1284 = vmatprep.subr.bf16.mxu0 0
        %1285 = vmatpush1.bf16.msra.mxu0 0
        %1286 = vmatprep.subr.bf16.mxu0 0
        %1287 = vmatpush1.bf16.msra.mxu0 0
        %1288 = vmatprep.subr.bf16.mxu0 0
        %1289 = vmatpush1.bf16.msra.mxu0 0
        %1290 = vmatprep.subr.bf16.mxu0 0
        %1291 = vmatpush1.bf16.msra.mxu0 0
        %1292 = vmatprep.subr.bf16.mxu0 0
        %1293 = vmatpush1.bf16.msra.mxu0 0
        %1294 = vmatprep.subr.bf16.mxu0 0
        %1295 = vmatpush1.bf16.msra.mxu0 0
        %1296 = vmatprep.subr.bf16.mxu0 0
        %1297 = vmatpush1.bf16.msra.mxu0 0
        %1298 = vmatprep.subr.bf16.mxu0 0
        %1299 = vmatpush1.bf16.msra.mxu0 0
        %1300 = vmatprep.subr.bf16.mxu0 0
        %1301 = vmatpush1.bf16.msra.mxu0 0
        %1302 = vmatprep.subr.bf16.mxu0 0
        %1303 = vmatpush1.bf16.msra.mxu0 0
        %1304 = vmatprep.subr.bf16.mxu0 0
        %1305 = vmatpush1.bf16.msra.mxu0 0
        %1306 = vmatprep.subr.bf16.mxu0 0
        %1307 = vmatpush1.bf16.msra.mxu0 0
        %1308 = vmatprep.subr.bf16.mxu0 0
        %1309 = vmatpush1.bf16.msra.mxu0 0
        %1310 = vmatprep.subr.bf16.mxu0 0
        %1311 = vmatpush1.bf16.msra.mxu0 0
        %1312 = vmatprep.mubr.bf16.mxu0 0
        %1313 = vmatmul.mubr.bf16.gmra.mrb[0].mxu0 %v1275
        %v1314 = vpop.f32.mrb[0].mxu0
        %v1315 = vadd.f32 0.0, %v1314
        %v1316 = vpop.f32.mrb[0].mxu0
        %v1317 = vpop.f32.mrb[0].mxu0
        %v1318 = vpop.f32.mrb[0].mxu0
        %1319 = vdwg.mxu0
        %v1321 = vcombine.high %v1315, %v1315
        %v1323 = vunpack.c.l.s4 1966171168
        %v1324 = vunpack.c.0.s8 %v1323
        %v1325 = vlaneseq
        %v1326 = vshrl.u32 %v1325, 7
        %v1327 = vsub.s32 %v1324, %v1326
        %v1328 = vrot.slane %v1315, %v1327
        %v1330 = vunpack.c.l.s4 1966171168
        %v1331 = vunpack.c.0.s8 %v1330
        %v1332 = vlaneseq
        %v1333 = vshrl.u32 %v1332, 7
        %v1334 = vsub.s32 %v1331, %v1333
        %v1335 = vrot.slane %v1321, %v1334
        %v1336 = vcombine.high %v1328, %v1328
        %v1337 = vcombine.high %v1335, %v1335
        %v1339 = vunpack.c.l.s4 1966171168
        %v1340 = vunpack.c.0.s8 %v1339
        %v1341 = vlaneseq
        %v1342 = vshrl.u32 %v1341, 7
        %v1343 = vsub.s32 %v1340, %v1342
        %v1344 = vrot.slane %v1328, %v1343
        %v1346 = vunpack.c.l.s4 1966171168
        %v1347 = vunpack.c.0.s8 %v1346
        %v1348 = vlaneseq
        %v1349 = vshrl.u32 %v1348, 7
        %v1350 = vsub.s32 %v1347, %v1349
        %v1351 = vrot.slane %v1335, %v1350
        %v1353 = vunpack.c.l.s4 1966171168
        %v1354 = vunpack.c.0.s8 %v1353
        %v1355 = vlaneseq
        %v1356 = vshrl.u32 %v1355, 7
        %v1357 = vsub.s32 %v1354, %v1356
        %v1358 = vrot.slane %v1336, %v1357
        %v1360 = vunpack.c.l.s4 1966171168
        %v1361 = vunpack.c.0.s8 %v1360
        %v1362 = vlaneseq
        %v1363 = vshrl.u32 %v1362, 7
        %v1364 = vsub.s32 %v1361, %v1363
        %v1365 = vrot.slane %v1337, %v1364
        %v1366 = vcombine.high %v1344, %v1344
        %v1367 = vcombine.high %v1351, %v1351
        %v1368 = vcombine.high %v1358, %v1358
        %v1369 = vcombine.high %v1365, %v1365
        %1378 = vst.msk [vmem:[%s416 + $0x2] sm:$0x1] %vm739, %v1344
        %1379 = vst.msk [vmem:[%s416 + $0x6] sm:$0x1] %vm739, %v1358
        %1380 = vst.msk [vmem:[%s416 + $0xa] sm:$0x1] %vm739, %v1366
        %1381 = vst.msk [vmem:[%s416 + $0xe] sm:$0x1] %vm739, %v1368
        %1382 = vst.msk [vmem:[%s416 + $0x12] sm:$0x1] %vm739, %v1351
        %1383 = vst.msk [vmem:[%s416 + $0x16] sm:$0x1] %vm739, %v1365
        %1384 = vst.msk [vmem:[%s416 + $0x1a] sm:$0x1] %vm739, %v1367
        %1385 = vst.msk [vmem:[%s416 + $0x1e] sm:$0x1] %vm739, %v1369
        %v1386 = vld [vmem:[%s375 + $0x3] sm:$0x1]
        %v1387 = vld [vmem:[%s375 + $0x7] sm:$0x1]
        %v1388 = vld [vmem:[%s375 + $0xb] sm:$0x1]
        %v1389 = vld [vmem:[%s375 + $0xf] sm:$0x1]
        %v1390 = vld [vmem:[%s375 + $0x13] sm:$0x1]
        %v1391 = vld [vmem:[%s375 + $0x17] sm:$0x1]
        %v1392 = vld [vmem:[%s375 + $0x1b] sm:$0x1]
        %v1393 = vld [vmem:[%s375 + $0x1f] sm:$0x1]
        %v1394 = vmul.f32 %v1386, 0.25
        %v1395 = vmul.f32 %v1387, 0.25
        %v1396 = vmul.f32 %v1388, 0.25
        %v1397 = vmul.f32 %v1389, 0.25
        %v1398 = vmul.f32 %v1390, 0.25
        %v1399 = vmul.f32 %v1391, 0.25
        %v1400 = vmul.f32 %v1392, 0.25
        %v1401 = vmul.f32 %v1393, 0.25
        %v1402 = vld [vmem:[%s382 + $0x3] sm:$0x1]
        %v1403 = vld [vmem:[%s382 + $0x7] sm:$0x1]
        %v1404 = vld [vmem:[%s382 + $0xb] sm:$0x1]
        %v1405 = vld [vmem:[%s382 + $0xf] sm:$0x1]
        %v1406 = vld [vmem:[%s382 + $0x13] sm:$0x1]
        %v1407 = vld [vmem:[%s382 + $0x17] sm:$0x1]
        %v1408 = vld [vmem:[%s382 + $0x1b] sm:$0x1]
        %v1409 = vld [vmem:[%s382 + $0x1f] sm:$0x1]
        %v1410 = vld [vmem:[%s389 + $0x3] sm:$0x1]
        %v1411 = vld [vmem:[%s389 + $0x7] sm:$0x1]
        %v1412 = vld [vmem:[%s389 + $0xb] sm:$0x1]
        %v1413 = vld [vmem:[%s389 + $0xf] sm:$0x1]
        %v1414 = vld [vmem:[%s389 + $0x13] sm:$0x1]
        %v1415 = vld [vmem:[%s389 + $0x17] sm:$0x1]
        %v1416 = vld [vmem:[%s389 + $0x1b] sm:$0x1]
        %v1417 = vld [vmem:[%s389 + $0x1f] sm:$0x1]
        %v1418 = vpack.c.bf16 %v1394, %v1394
        %v1419 = vpack.c.bf16 %v1395, %v1395
        %v1420 = vpack.c.bf16 %v1396, %v1396
        %v1421 = vpack.c.bf16 %v1397, %v1397
        %v1422 = vpack.c.bf16 %v1398, %v1398
        %v1423 = vpack.c.bf16 %v1399, %v1399
        %v1424 = vpack.c.bf16 %v1400, %v1400
        %v1425 = vpack.c.bf16 %v1401, %v1401
        %v1426 = vpack.c.bf16 %v1402, %v1402
        %v1427 = vpack.c.bf16 %v1403, %v1403
        %v1428 = vpack.c.bf16 %v1404, %v1404
        %v1429 = vpack.c.bf16 %v1405, %v1405
        %v1430 = vpack.c.bf16 %v1406, %v1406
        %v1431 = vpack.c.bf16 %v1407, %v1407
        %v1432 = vpack.c.bf16 %v1408, %v1408
        %v1433 = vpack.c.bf16 %v1409, %v1409
        %v1442 = vunpack.c.l.b16 %v1418
        %v1443 = vunpack.c.l.b16 %v1419
        %v1444 = vunpack.c.l.b16 %v1420
        %v1445 = vunpack.c.l.b16 %v1421
        %v1446 = vunpack.c.l.b16 %v1422
        %v1447 = vunpack.c.l.b16 %v1423
        %v1448 = vunpack.c.l.b16 %v1424
        %v1449 = vunpack.c.l.b16 %v1425
        %v1450 = vrot.slane %v1443, 7
        %v1451 = vsel %vm483, %v1450, %v1442
        %v1452 = vrot.slane %v1444, 6
        %v1453 = vsel %vm486, %v1452, %v1451
        %v1454 = vrot.slane %v1445, 5
        %v1455 = vsel %vm489, %v1454, %v1453
        %v1456 = vrot.slane %v1446, 4
        %v1457 = vsel %vm492, %v1456, %v1455
        %v1458 = vrot.slane %v1447, 3
        %v1459 = vsel %vm495, %v1458, %v1457
        %v1460 = vrot.slane %v1448, 2
        %v1461 = vsel %vm498, %v1460, %v1459
        %v1462 = vrot.slane %v1449, 1
        %v1463 = vsel %vm501, %v1462, %v1461
        %v1464 = vpack.c.b16 %v1463, %v1463
        %v1473 = vunpack.c.l.b16 %v1426
        %v1474 = vunpack.c.l.b16 %v1427
        %v1475 = vunpack.c.l.b16 %v1428
        %v1476 = vunpack.c.l.b16 %v1429
        %v1477 = vunpack.c.l.b16 %v1430
        %v1478 = vunpack.c.l.b16 %v1431
        %v1479 = vunpack.c.l.b16 %v1432
        %v1480 = vunpack.c.l.b16 %v1433
        %v1481 = vrot.slane %v1474, 7
        %v1482 = vsel %vm483, %v1481, %v1473
        %v1483 = vrot.slane %v1475, 6
        %v1484 = vsel %vm486, %v1483, %v1482
        %v1485 = vrot.slane %v1476, 5
        %v1486 = vsel %vm489, %v1485, %v1484
        %v1487 = vrot.slane %v1477, 4
        %v1488 = vsel %vm492, %v1487, %v1486
        %v1489 = vrot.slane %v1478, 3
        %v1490 = vsel %vm495, %v1489, %v1488
        %v1491 = vrot.slane %v1479, 2
        %v1492 = vsel %vm498, %v1491, %v1490
        %v1493 = vrot.slane %v1480, 1
        %v1494 = vsel %vm501, %v1493, %v1492
        %v1495 = vpack.c.b16 %v1494, %v1494
        %v1497 = vsel %vm535, %v1464, 0
        %v1500 = vsel %vm535, %v1495, 0
        %1502 = vmatprep.subr.bf16.mxu0 0
        %1503 = vmatpush1.bf16.xpose.msra.mxu0 %v1500
        %1504 = vmatprep.subr.bf16.mxu0 0
        %1505 = vmatpush1.bf16.xpose.msra.mxu0 0
        %1506 = vmatprep.subr.bf16.mxu0 0
        %1507 = vmatpush1.bf16.xpose.msra.mxu0 0
        %1508 = vmatprep.subr.bf16.mxu0 0
        %1509 = vmatpush1.bf16.xpose.msra.mxu0 0
        %1510 = vmatprep.subr.bf16.mxu0 0
        %1511 = vmatpush1.bf16.xpose.msra.mxu0 0
        %1512 = vmatprep.subr.bf16.mxu0 0
        %1513 = vmatpush1.bf16.xpose.msra.mxu0 0
        %1514 = vmatprep.subr.bf16.mxu0 0
        %1515 = vmatpush1.bf16.xpose.msra.mxu0 0
        %1516 = vmatprep.subr.bf16.mxu0 0
        %1517 = vmatpush1.bf16.xpose.msra.mxu0 0
        %1518 = vmatprep.subr.bf16.mxu0 0
        %1519 = vmatpush1.bf16.xpose.msra.mxu0 0
        %1520 = vmatprep.subr.bf16.mxu0 0
        %1521 = vmatpush1.bf16.xpose.msra.mxu0 0
        %1522 = vmatprep.subr.bf16.mxu0 0
        %1523 = vmatpush1.bf16.xpose.msra.mxu0 0
        %1524 = vmatprep.subr.bf16.mxu0 0
        %1525 = vmatpush1.bf16.xpose.msra.mxu0 0
        %1526 = vmatprep.subr.bf16.mxu0 0
        %1527 = vmatpush1.bf16.xpose.msra.mxu0 0
        %1528 = vmatprep.subr.bf16.mxu0 0
        %1529 = vmatpush1.bf16.xpose.msra.mxu0 0
        %1530 = vmatprep.subr.bf16.mxu0 0
        %1531 = vmatpush1.bf16.xpose.msra.mxu0 0
        %1532 = vmatprep.subr.bf16.mxu0 0
        %1533 = vmatpush1.bf16.xpose.msra.mxu0 0
        %1534 = vmatprep.mubr.bf16.mxu0 0
        %1535 = vmatmul.mubr.bf16.gmra.mrb[0].mxu0 %v1497
        %v1536 = vpop.f32.mrb[0].mxu0
        %v1537 = vadd.f32 0.0, %v1536
        %v1538 = vpop.f32.mrb[0].mxu0
        %v1539 = vpop.f32.mrb[0].mxu0
        %v1540 = vpop.f32.mrb[0].mxu0
        %1541 = vdwg.mxu0
        %v1542 = vsel %vm582, %v1537, -inf
        %1543 = vmax.xlane.f32.xlu0 %v1542
        %v1544 = vpop.xlane.xlu0 %1543
        %v1545 = vsub.f32 %v1537, %v1544
        %v1546 = vmul.f32 %v1545, 1.442695
        %v1547 = vpow.pop %v1546
        %v1548 = vsel %vm582, %v1547, 0.0
        %1549 = vadd.xlane.f32.xlu0 %v1548
        %v1550 = vpop.xlane.xlu0 %1549
        %v1551 = vrcp.pop %v1550
        %v1552 = vmul.f32 %v1547, %v1551
        %v1553 = vpack.c.bf16 %v1552, %v1552
        %v1554 = vpack.c.bf16 %v1410, %v1410
        %v1555 = vpack.c.bf16 %v1411, %v1411
        %v1556 = vpack.c.bf16 %v1412, %v1412
        %v1557 = vpack.c.bf16 %v1413, %v1413
        %v1558 = vpack.c.bf16 %v1414, %v1414
        %v1559 = vpack.c.bf16 %v1415, %v1415
        %v1560 = vpack.c.bf16 %v1416, %v1416
        %v1561 = vpack.c.bf16 %v1417, %v1417
        %v1570 = vunpack.c.l.b16 %v1554
        %v1571 = vunpack.c.l.b16 %v1555
        %v1572 = vunpack.c.l.b16 %v1556
        %v1573 = vunpack.c.l.b16 %v1557
        %v1574 = vunpack.c.l.b16 %v1558
        %v1575 = vunpack.c.l.b16 %v1559
        %v1576 = vunpack.c.l.b16 %v1560
        %v1577 = vunpack.c.l.b16 %v1561
        %v1578 = vrot.slane %v1571, 7
        %v1579 = vsel %vm483, %v1578, %v1570
        %v1580 = vrot.slane %v1572, 6
        %v1581 = vsel %vm486, %v1580, %v1579
        %v1582 = vrot.slane %v1573, 5
        %v1583 = vsel %vm489, %v1582, %v1581
        %v1584 = vrot.slane %v1574, 4
        %v1585 = vsel %vm492, %v1584, %v1583
        %v1586 = vrot.slane %v1575, 3
        %v1587 = vsel %vm495, %v1586, %v1585
        %v1588 = vrot.slane %v1576, 2
        %v1589 = vsel %vm498, %v1588, %v1587
        %v1590 = vrot.slane %v1577, 1
        %v1591 = vsel %vm501, %v1590, %v1589
        %v1592 = vpack.c.b16 %v1591, %v1591
        %v1594 = vsel %vm582, %v1553, 0
        %v1597 = vsel %vm637, %v1592, 0
        %1599 = vmatprep.subr.bf16.mxu0 0
        %1600 = vmatpush1.bf16.msra.mxu0 %v1597
        %1601 = vmatprep.subr.bf16.mxu0 0
        %1602 = vmatpush1.bf16.msra.mxu0 0
        %1603 = vmatprep.subr.bf16.mxu0 0
        %1604 = vmatpush1.bf16.msra.mxu0 0
        %1605 = vmatprep.subr.bf16.mxu0 0
        %1606 = vmatpush1.bf16.msra.mxu0 0
        %1607 = vmatprep.subr.bf16.mxu0 0
        %1608 = vmatpush1.bf16.msra.mxu0 0
        %1609 = vmatprep.subr.bf16.mxu0 0
        %1610 = vmatpush1.bf16.msra.mxu0 0
        %1611 = vmatprep.subr.bf16.mxu0 0
        %1612 = vmatpush1.bf16.msra.mxu0 0
        %1613 = vmatprep.subr.bf16.mxu0 0
        %1614 = vmatpush1.bf16.msra.mxu0 0
        %1615 = vmatprep.subr.bf16.mxu0 0
        %1616 = vmatpush1.bf16.msra.mxu0 0
        %1617 = vmatprep.subr.bf16.mxu0 0
        %1618 = vmatpush1.bf16.msra.mxu0 0
        %1619 = vmatprep.subr.bf16.mxu0 0
        %1620 = vmatpush1.bf16.msra.mxu0 0
        %1621 = vmatprep.subr.bf16.mxu0 0
        %1622 = vmatpush1.bf16.msra.mxu0 0
        %1623 = vmatprep.subr.bf16.mxu0 0
        %1624 = vmatpush1.bf16.msra.mxu0 0
        %1625 = vmatprep.subr.bf16.mxu0 0
        %1626 = vmatpush1.bf16.msra.mxu0 0
        %1627 = vmatprep.subr.bf16.mxu0 0
        %1628 = vmatpush1.bf16.msra.mxu0 0
        %1629 = vmatprep.subr.bf16.mxu0 0
        %1630 = vmatpush1.bf16.msra.mxu0 0
        %1631 = vmatprep.mubr.bf16.mxu0 0
        %1632 = vmatmul.mubr.bf16.gmra.mrb[0].mxu0 %v1594
        %v1633 = vpop.f32.mrb[0].mxu0
        %v1634 = vadd.f32 0.0, %v1633
        %v1635 = vpop.f32.mrb[0].mxu0
        %v1636 = vpop.f32.mrb[0].mxu0
        %v1637 = vpop.f32.mrb[0].mxu0
        %1638 = vdwg.mxu0
        %v1640 = vcombine.high %v1634, %v1634
        %v1642 = vunpack.c.l.s4 1966171168
        %v1643 = vunpack.c.0.s8 %v1642
        %v1644 = vlaneseq
        %v1645 = vshrl.u32 %v1644, 7
        %v1646 = vsub.s32 %v1643, %v1645
        %v1647 = vrot.slane %v1634, %v1646
        %v1649 = vunpack.c.l.s4 1966171168
        %v1650 = vunpack.c.0.s8 %v1649
        %v1651 = vlaneseq
        %v1652 = vshrl.u32 %v1651, 7
        %v1653 = vsub.s32 %v1650, %v1652
        %v1654 = vrot.slane %v1640, %v1653
        %v1655 = vcombine.high %v1647, %v1647
        %v1656 = vcombine.high %v1654, %v1654
        %v1658 = vunpack.c.l.s4 1966171168
        %v1659 = vunpack.c.0.s8 %v1658
        %v1660 = vlaneseq
        %v1661 = vshrl.u32 %v1660, 7
        %v1662 = vsub.s32 %v1659, %v1661
        %v1663 = vrot.slane %v1647, %v1662
        %v1665 = vunpack.c.l.s4 1966171168
        %v1666 = vunpack.c.0.s8 %v1665
        %v1667 = vlaneseq
        %v1668 = vshrl.u32 %v1667, 7
        %v1669 = vsub.s32 %v1666, %v1668
        %v1670 = vrot.slane %v1654, %v1669
        %v1672 = vunpack.c.l.s4 1966171168
        %v1673 = vunpack.c.0.s8 %v1672
        %v1674 = vlaneseq
        %v1675 = vshrl.u32 %v1674, 7
        %v1676 = vsub.s32 %v1673, %v1675
        %v1677 = vrot.slane %v1655, %v1676
        %v1679 = vunpack.c.l.s4 1966171168
        %v1680 = vunpack.c.0.s8 %v1679
        %v1681 = vlaneseq
        %v1682 = vshrl.u32 %v1681, 7
        %v1683 = vsub.s32 %v1680, %v1682
        %v1684 = vrot.slane %v1656, %v1683
        %v1685 = vcombine.high %v1663, %v1663
        %v1686 = vcombine.high %v1670, %v1670
        %v1687 = vcombine.high %v1677, %v1677
        %v1688 = vcombine.high %v1684, %v1684
        %1697 = vst.msk [vmem:[%s416 + $0x3] sm:$0x1] %vm739, %v1663
        %1698 = vst.msk [vmem:[%s416 + $0x7] sm:$0x1] %vm739, %v1677
        %1699 = vst.msk [vmem:[%s416 + $0xb] sm:$0x1] %vm739, %v1685
        %1700 = vst.msk [vmem:[%s416 + $0xf] sm:$0x1] %vm739, %v1687
        %1701 = vst.msk [vmem:[%s416 + $0x13] sm:$0x1] %vm739, %v1670
        %1702 = vst.msk [vmem:[%s416 + $0x17] sm:$0x1] %vm739, %v1684
        %1703 = vst.msk [vmem:[%s416 + $0x1b] sm:$0x1] %vm739, %v1686
        %1704 = vst.msk [vmem:[%s416 + $0x1f] sm:$0x1] %vm739, %v1688
        %s1705 = sand.u32 %s100, 1
        %s1706 = sand.u32 %s100, 1
        %s1707 = smul.addr %s1706, 32
        %s1708 = scalar_lea.vmem [#allocation5], %s1707
        // Predicated region
        $region156: #{moe_block_forward.5} parent=142 // pred_check
          %p1709 = pneg %p110
        $region157: #{moe_block_forward.5} parent=142 // pred_check_branch
          %1711 = sbr.rel (%p1709) target = $region159
        $region158: #{moe_block_forward.5} parent=142 // pred_region
          %s1712 = smul.addr %s14, 4
          %s1713 = scalar_lea.vmem %s3, %s1712
          // Predicated region
          $region160: #{moe_block_forward.5} parent=158 // pred_check
            _
          $region161: #{moe_block_forward.5} parent=158 // pred_check_branch
            %1715 = sbr.rel (0) target = $region163
          $region162: #{moe_block_forward.5} parent=158 // pred_region
            // Predicated region
            $region164: #{moe_block_forward.5} parent=162 // pred_check
              _
            $region165: #{moe_block_forward.5} parent=162 // pred_check_branch
              %1717 = sbr.rel target = $region167
            $region166: #{moe_block_forward.5} parent=162 // pred_region
              // Predicated region
              $region179: #{moe_block_forward.5} parent=166 // pred_check
                _
              $region180: #{moe_block_forward.5} parent=166 // pred_check_branch
                %1746 = sbr.rel (0) target = $region182
              $region181: #{moe_block_forward.5} parent=166 // pred_region
                loop: start=0, step=1, limit=1
                $region183: #{moe_block_forward.5} parent=181 // loop_pre_header
                  _
                $region184: #{moe_block_forward.5} parent=181 // loop_header
                  %s1748 = sphi 0, %s1752
                  %p1749 = scmp.ge.s32.totalorder %s1748, 1
                  %s1753 = sphi %s1708, %s1708
                  %s1754 = sphi %s1713, %s1713
                $region185: #{moe_block_forward.5} parent=181 // loop_header_branch
                  %1751 = sbr.rel (%p1749) target = $region189
                $region186: #{moe_block_forward.5} parent=181 // loop_body
                  _
                $region187: #{moe_block_forward.5} parent=181 // loop_footer
                  %s1752 = sadd.s32 1, %s1748
                $region188: #{moe_block_forward.5} parent=181 // loop_footer_branch
                  %1747 = sbr.rel target = $region184
                $region189: #{moe_block_forward.5} parent=181 // loop_exit
                  _
                loop: start=0, step=1, limit=1
                $region190: #{moe_block_forward.5} parent=181 // loop_pre_header
                  _
                $region191: #{moe_block_forward.5} parent=181 // loop_header
                  %s1757 = sphi 0, %s1761
                  %p1758 = scmp.ge.s32.totalorder %s1757, 1
                  %s1762 = sphi %s1708, %s1708
                  %s1763 = sphi %s1713, %s1713
                $region192: #{moe_block_forward.5} parent=181 // loop_header_branch
                  %1760 = sbr.rel (%p1758) target = $region196
                $region193: #{moe_block_forward.5} parent=181 // loop_body
                  %v1764 = vld [vmem:[%s1762] sm:$0xf]
                  %1765 = vst [vmem:[%s1763] sm:$0xf] %v1764
                  %v1766 = vld [vmem:[%s1762 + $0x4] sm:$0xf]
                  %1767 = vst [vmem:[%s1763 + $0x8] sm:$0xf] %v1766
                  %v1768 = vld [vmem:[%s1762 + $0x8] sm:$0xf]
                  %1769 = vst [vmem:[%s1763 + $0x10] sm:$0xf] %v1768
                  %v1770 = vld [vmem:[%s1762 + $0xc] sm:$0xf]
                  %1771 = vst [vmem:[%s1763 + $0x18] sm:$0xf] %v1770
                  %v1772 = vld [vmem:[%s1762 + $0x10] sm:$0xf]
                  %1773 = vst [vmem:[%s1763 + $0x20] sm:$0xf] %v1772
                  %v1774 = vld [vmem:[%s1762 + $0x14] sm:$0xf]
                  %1775 = vst [vmem:[%s1763 + $0x28] sm:$0xf] %v1774
                  %v1776 = vld [vmem:[%s1762 + $0x18] sm:$0xf]
                  %1777 = vst [vmem:[%s1763 + $0x30] sm:$0xf] %v1776
                  %v1778 = vld [vmem:[%s1762 + $0x1c] sm:$0xf]
                  %1779 = vst [vmem:[%s1763 + $0x38] sm:$0xf] %v1778
                $region194: #{moe_block_forward.5} parent=181 // loop_footer
                  %s1761 = sadd.s32 1, %s1757
                $region195: #{moe_block_forward.5} parent=181 // loop_footer_branch
                  %1756 = sbr.rel target = $region191
                $region196: #{moe_block_forward.5} parent=181 // loop_exit
                  _
              $region182: #{moe_block_forward.5} parent=166 // pred_fallthru
                _
            $region167: #{moe_block_forward.5} parent=162 // pred_fallthru
              _
            // Predicated region
            $region168: #{moe_block_forward.5} parent=162 // pred_check
              _
            $region169: #{moe_block_forward.5} parent=162 // pred_check_branch
              %1719 = sbr.rel (0) target = $region171
            $region170: #{moe_block_forward.5} parent=162 // pred_region
              loop: start=0, step=1, limit=1
              $region172: #{moe_block_forward.5} parent=170 // loop_pre_header
                _
              $region173: #{moe_block_forward.5} parent=170 // loop_header
                %s1722 = sphi 0, %s1726
                %p1723 = scmp.ge.s32.totalorder %s1722, 1
                %s1727 = sphi %s1708, %s1708
                %s1728 = sphi %s1713, %s1713
              $region174: #{moe_block_forward.5} parent=170 // loop_header_branch
                %1725 = sbr.rel (%p1723) target = $region178
              $region175: #{moe_block_forward.5} parent=170 // loop_body
                %v1729 = vld [vmem:[%s1727] sm:$0xf]
                %1730 = vst [vmem:[%s1728] sm:$0xf] %v1729
                %v1731 = vld [vmem:[%s1727 + $0x4] sm:$0xf]
                %1732 = vst [vmem:[%s1728 + $0x8] sm:$0xf] %v1731
                %v1733 = vld [vmem:[%s1727 + $0x8] sm:$0xf]
                %1734 = vst [vmem:[%s1728 + $0x10] sm:$0xf] %v1733
                %v1735 = vld [vmem:[%s1727 + $0xc] sm:$0xf]
                %1736 = vst [vmem:[%s1728 + $0x18] sm:$0xf] %v1735
                %v1737 = vld [vmem:[%s1727 + $0x10] sm:$0xf]
                %1738 = vst [vmem:[%s1728 + $0x20] sm:$0xf] %v1737
                %v1739 = vld [vmem:[%s1727 + $0x14] sm:$0xf]
                %1740 = vst [vmem:[%s1728 + $0x28] sm:$0xf] %v1739
                %v1741 = vld [vmem:[%s1727 + $0x18] sm:$0xf]
                %1742 = vst [vmem:[%s1728 + $0x30] sm:$0xf] %v1741
                %v1743 = vld [vmem:[%s1727 + $0x1c] sm:$0xf]
                %1744 = vst [vmem:[%s1728 + $0x38] sm:$0xf] %v1743
              $region176: #{moe_block_forward.5} parent=170 // loop_footer
                %s1726 = sadd.s32 1, %s1722
              $region177: #{moe_block_forward.5} parent=170 // loop_footer_branch
                %1721 = sbr.rel target = $region173
              $region178: #{moe_block_forward.5} parent=170 // loop_exit
                _
            $region171: #{moe_block_forward.5} parent=162 // pred_fallthru
              _
          $region163: #{moe_block_forward.5} parent=158 // pred_fallthru
            _
          %1780 = vnop
        $region159: #{moe_block_forward.5} parent=142 // pred_fallthru
          _
      $region143: #{moe_block_forward.5} parent=5 // pred_fallthru
        _
      %p1781 = scmp.le.s32.totalorder 2, %s9
      // Predicated region
      $region197: #{moe_block_forward.5} parent=5 // pred_check
        %p1782 = pneg %p1781
      $region198: #{moe_block_forward.5} parent=5 // pred_check_branch
        %1784 = sbr.rel (%p1782) target = $region200
      $region199: #{moe_block_forward.5} parent=5 // pred_region
        %s1785 = ssub.s32 %s9, 2
        // Predicated region
        $region201: #{moe_block_forward.5} parent=199 // pred_check
          %p1786 = pneg %p116
        $region202: #{moe_block_forward.5} parent=199 // pred_check_branch
          %1788 = sbr.rel (%p1786) target = $region204
        $region203: #{moe_block_forward.5} parent=199 // pred_region
          %s1789 = sand.u32 %s101, 1
          %s1790 = sand.u32 %s101, 1
          %s1791 = smul.addr %s1790, 32
          %s1792 = scalar_lea.vmem [#allocation5], %s1791
        $region204: #{moe_block_forward.5} parent=199 // pred_fallthru
          _
      $region200: #{moe_block_forward.5} parent=5 // pred_fallthru
        _
    $region6: #{moe_block_forward.5} parent=1 // loop_footer
      %s13 = sadd.s32 1, %s9
    $region7: #{moe_block_forward.5} parent=1 // loop_footer_branch
      %8 = sbr.rel target = $region3
    $region8: #{moe_block_forward.5} parent=1 // loop_exit
      _

// kernel: moe_block_forward.7
$region0: #{moe_block_forward.7}
  #allocation0 [shape = 'u32[]', space=smem, size = 0x4, offset = 0x4, fixed_abs, tag = 'smem constant byte address 0x4 - core index']
  #allocation1 [shape = 'u32[144,128]{1,0:T(1,128)}', space=vmem, size = 0x12000, scoped, tag = 'internal scratch']
  #allocation2 [shape = 'bf16[16,64]{1,0:T(16,128)(2,1)}', space=vmem, size = 0x1000, scoped, tag = 'scratch operand']
  #allocation3 [shape = 'f32[16,64]{1,0:T(8,128)}', space=vmem, size = 0x2000, scoped, tag = 'scratch operand']
  #allocation4 [shape = 's32[1]{0}', space=sflag, size = 0x4, scoped, tag = 'scoped memory for moe_block_forward.7']
  #allocation5 [shape = 'u8[512]{0}', space=smem, size = 0x200, scoped, tag = 'prefetched SMEM operand 0']
  #allocation6 [shape = 's32[1]{0:T(128)S(6)}', space=smem, size = 0x200, scoped, tag = 'prefetched SMEM operand 1']
  %s0 = inlined_call_operand.hbm [shape: s32[4], index: 0, kind: input, shape index: {}]
  %s1 = inlined_call_operand.<no memory space> [shape: s32[1], index: 1, kind: input, shape index: {}]
  %s2 = inlined_call_operand.hbm [shape: f32[16,64], index: 2, kind: input, shape index: {}]
  %s3 = inlined_call_operand.hbm [shape: f32[1,64], index: 3, kind: input, shape index: {}]
  %s4 = inlined_call_operand.hbm [shape: f32[1,64], index: 4, kind: input, shape index: {}]
  %s5 = inlined_call_operand.hbm [shape: bf16[4,64,256], index: 5, kind: input, shape index: {}]
  %s6 = inlined_call_operand.hbm [shape: f32[4,1,256], index: 6, kind: input, shape index: {}]
  %s7 = inlined_call_operand.hbm [shape: bf16[4,256,64], index: 7, kind: input, shape index: {}]
  %s8 = inlined_call_operand.hbm [shape: f32[4,1,64], index: 8, kind: input, shape index: {}]
  %s9 = inlined_call_operand.hbm [shape: f32[4,16,1], index: 9, kind: input, shape index: {}]
  %s10 = inlined_call_operand.hbm [shape: f32[16,64], index: 10, kind: output, shape index: {}]
  %s11 = sld [smem:[#allocation0]]
  $region113: #{moe_block_forward.7} parent=0
    _
  %s13 = ssub.s32 1, %s11
  %s14 = scalar_select 0, %s13, %s11
  %16 = dma.hbm_to_smem %s0, 16, [#allocation5], [#allocation4]
  %17 = sst [smem:[#allocation6]] %s1
  %18 = dma.done [#allocation4], 16
  %19 = sfence
  $region1: #{moe_block_forward.7} parent=0
    #allocation7 [shape = 'u8[8192]{0}', space=vmem, size = 0x2000, scoped, tag = 'input window, operand 2, single buffered']
    #allocation8 [shape = 's32[2]{0}', space=sflag, size = 0x8, scoped, tag = 'scoped memory for moe_block_forward.7']
    #allocation9 [shape = 's32[2]{0}', space=sflag, size = 0x8, scoped, tag = 'scoped memory for moe_block_forward.7']
    #allocation10 [shape = 'u8[512]{0}', space=vmem, size = 0x400, scoped, tag = 'input window, operand 3, single buffered']
    #allocation11 [shape = 's32[1]{0}', space=sflag, size = 0x4, scoped, tag = 'scoped memory for moe_block_forward.7']
    #allocation12 [shape = 'u8[512]{0}', space=vmem, size = 0x400, scoped, tag = 'input window, operand 4, single buffered']
    #allocation13 [shape = 'u8[65536]{0}', space=vmem, size = 0x10000, scoped, tag = 'input window, operand 5']
    #allocation14 [shape = 's32[2]{0}', space=sflag, size = 0x8, scoped, tag = 'scoped memory for moe_block_forward.7']
    #allocation15 [shape = 'u8[2048]{0}', space=vmem, size = 0x800, scoped, tag = 'input window, operand 6']
    #allocation16 [shape = 'u8[131072]{0}', space=vmem, size = 0x20000, scoped, tag = 'input window, operand 7']
    #allocation17 [shape = 's32[2]{0}', space=sflag, size = 0x8, scoped, tag = 'scoped memory for moe_block_forward.7']
    #allocation18 [shape = 'u8[1024]{0}', space=vmem, size = 0x400, scoped, tag = 'input window, operand 8']
    #allocation19 [shape = 'u8[16384]{0}', space=vmem, size = 0x4000, scoped, tag = 'input window, operand 9']
    #allocation20 [shape = 's32[2]{0}', space=sflag, size = 0x8, scoped, tag = 'scoped memory for moe_block_forward.7']
    #allocation21 [shape = 'u8[8192]{0}', space=vmem, size = 0x2000, scoped, tag = 'output window, operand 0, single buffered']
    %20 = vsyncpa [#allocation8], 0
    %21 = vsyncpa [#allocation11], 0
    %22 = vsyncpa [#allocation14], 0
    %s23 = scalar_lea.sflag [#allocation14], 1
    %24 = vsyncpa %s23, 0
    %25 = vsyncpa [#allocation17], 0
    %s26 = scalar_lea.sflag [#allocation17], 1
    %27 = vsyncpa %s26, 0
    %28 = vsyncpa [#allocation20], 0
    %s29 = scalar_lea.sflag [#allocation20], 1
    %30 = vsyncpa %s29, 0
    %31 = vsyncpa [#allocation9], 0
    loop: start=0, step=1, limit=6
    $region2: #{moe_block_forward.7} parent=1 // loop_pre_header
      _
    $region3: #{moe_block_forward.7} parent=1 // loop_header
      %s33 = sphi 0, %s37
      %p34 = scmp.ge.s32.totalorder %s33, 6
      %s40 = sphi 0, %s59
      %s41 = sphi 0, %s55
      %s42 = sphi 0, %s51
      %s43 = sphi 0, %s40
      %s44 = sphi 0, %s41
      %s45 = sphi 0, %s42
      %s46 = sphi 0, %s43
      %s47 = sphi 0, %s44
      %s48 = sphi 0, %s45
      %s62 = sphi 0, %s64
      %s65 = sphi 0, %s62
      %s66 = sphi 0, %s65
      %s82 = sphi 0, %s66
      %s86 = sphi 0, %s86
      %s88 = sphi 0, %s86
      %s89 = sphi 0, %s88
      %s103 = sphi 0, %s89
      %s107 = sphi 0, %s107
      %s109 = sphi 0, %s107
      %s110 = sphi 0, %s109
      %s124 = sphi 0, %s110
      %s134 = sphi 0, %s136
      %s137 = sphi 0, %s134
      %s138 = sphi 0, %s137
      %s154 = sphi 0, %s138
      %s164 = sphi 0, %s166
      %s167 = sphi 0, %s164
      %s168 = sphi 0, %s167
      %s184 = sphi 0, %s168
      %s194 = sphi 0, %s196
      %s197 = sphi 0, %s194
      %s198 = sphi 0, %s197
      %s214 = sphi 0, %s198
      %s222 = sphi 0, %s224
      %s225 = sphi 0, %s222
      %s226 = sphi 0, %s225
      %s242 = sphi 0, %s226
      %s252 = sphi 0, %s254
      %s255 = sphi 0, %s252
      %s256 = sphi 0, %s255
      %s272 = sphi 0, %s256
      %s278 = sphi 0, %s280
      %s281 = sphi 0, %s278
      %s282 = sphi 0, %s281
      %s298 = sphi 0, %s282
    $region4: #{moe_block_forward.7} parent=1 // loop_header_branch
      %36 = sbr.rel (%p34) target = $region8
    $region5: #{moe_block_forward.7} parent=1 // loop_body
      %s38 = ssub.s32 %s33, 1
      %s39 = ssub.s32 %s33, 2
      %s49 = sadd.s32 1, %s42
      %p50 = scmp.ge.s32.totalorder %s49, 1
      %s51 = scalar_select %p50, 0, %s49
      %s52 = sadd.s32 1, %s41
      %s53 = scalar_select %p50, %s52, %s41
      %p54 = scmp.ge.s32.totalorder %s53, 4
      %s55 = scalar_select %p54, 0, %s53
      %s56 = sadd.s32 1, %s40
      %s57 = scalar_select %p54, %s56, %s40
      %p58 = scmp.ge.s32.totalorder %s57, 1
      %s59 = scalar_select %p58, 0, %s57
      %s60 = ssub.s32 %s40, %s59
      %p61 = scmp.eq.s32.totalorder %s60, 0
      %s63 = sadd.s32 %s62, 1
      %s64 = scalar_select %p61, %s62, %s63
      %p67 = pneg %p61
      %p68 = scmp.eq.s32.totalorder %s33, 3
      %p69 = por %p67, %p68
      %p70 = scmp.ne.s32.totalorder %s62, %s65
      %p71 = scmp.eq.s32.totalorder %s33, 0
      %p72 = por %p70, %p71
      %p73 = scmp.ne.s32.totalorder %s62, %s65
      %p74 = scmp.eq.s32.totalorder %s38, 3
      %p75 = por %p73, %p74
      %p76 = scmp.ne.s32.totalorder %s65, %s66
      %p77 = scmp.eq.s32.totalorder %s38, 0
      %p78 = por %p76, %p77
      %p79 = scmp.ne.s32.totalorder %s65, %s66
      %p80 = scmp.eq.s32.totalorder %s39, 3
      %p81 = por %p79, %p80
      %p83 = scmp.ne.s32.totalorder %s66, %s82
      %p84 = scmp.eq.s32.totalorder %s39, 0
      %p85 = por %p83, %p84
      %s87 = sadd.s32 %s86, 1
      %p90 = scmp.eq.s32.totalorder %s33, 3
      %p91 = scmp.ne.s32.totalorder %s86, %s88
      %p92 = scmp.eq.s32.totalorder %s33, 0
      %p93 = por %p91, %p92
      %p94 = scmp.ne.s32.totalorder %s86, %s88
      %p95 = scmp.eq.s32.totalorder %s38, 3
      %p96 = por %p94, %p95
      %p97 = scmp.ne.s32.totalorder %s88, %s89
      %p98 = scmp.eq.s32.totalorder %s38, 0
      %p99 = por %p97, %p98
      %p100 = scmp.ne.s32.totalorder %s88, %s89
      %p101 = scmp.eq.s32.totalorder %s39, 3
      %p102 = por %p100, %p101
      %p104 = scmp.ne.s32.totalorder %s89, %s103
      %p105 = scmp.eq.s32.totalorder %s39, 0
      %p106 = por %p104, %p105
      %s108 = sadd.s32 %s107, 1
      %p111 = scmp.eq.s32.totalorder %s33, 3
      %p112 = scmp.ne.s32.totalorder %s107, %s109
      %p113 = scmp.eq.s32.totalorder %s33, 0
      %p114 = por %p112, %p113
      %p115 = scmp.ne.s32.totalorder %s107, %s109
      %p116 = scmp.eq.s32.totalorder %s38, 3
      %p117 = por %p115, %p116
      %p118 = scmp.ne.s32.totalorder %s109, %s110
      %p119 = scmp.eq.s32.totalorder %s38, 0
      %p120 = por %p118, %p119
      %p121 = scmp.ne.s32.totalorder %s109, %s110
      %p122 = scmp.eq.s32.totalorder %s39, 3
      %p123 = por %p121, %p122
      %p125 = scmp.ne.s32.totalorder %s110, %s124
      %p126 = scmp.eq.s32.totalorder %s39, 0
      %p127 = por %p125, %p126
      %s128 = sld [smem:[#allocation5 + %s41]]
      %s129 = sld [smem:[#allocation5 + %s55]]
      %s130 = ssub.s32 %s128, %s129
      %s131 = ssub.s32 %s42, %s51
      %s132 = sor.u32 %s130, %s131
      %p133 = scmp.eq.s32.totalorder %s132, 0
      %s135 = sadd.s32 %s134, 1
      %s136 = scalar_select %p133, %s134, %s135
      %p139 = pneg %p133
      %p140 = scmp.eq.s32.totalorder %s33, 3
      %p141 = por %p139, %p140
      %p142 = scmp.ne.s32.totalorder %s134, %s137
      %p143 = scmp.eq.s32.totalorder %s33, 0
      %p144 = por %p142, %p143
      %p145 = scmp.ne.s32.totalorder %s134, %s137
      %p146 = scmp.eq.s32.totalorder %s38, 3
      %p147 = por %p145, %p146
      %p148 = scmp.ne.s32.totalorder %s137, %s138
      %p149 = scmp.eq.s32.totalorder %s38, 0
      %p150 = por %p148, %p149
      %p151 = scmp.ne.s32.totalorder %s137, %s138
      %p152 = scmp.eq.s32.totalorder %s39, 3
      %p153 = por %p151, %p152
      %p155 = scmp.ne.s32.totalorder %s138, %s154
      %p156 = scmp.eq.s32.totalorder %s39, 0
      %p157 = por %p155, %p156
      %s158 = sld [smem:[#allocation5 + %s41]]
      %s159 = sld [smem:[#allocation5 + %s55]]
      %s160 = ssub.s32 %s158, %s159
      %s161 = ssub.s32 %s42, %s51
      %s162 = sor.u32 %s160, %s161
      %p163 = scmp.eq.s32.totalorder %s162, 0
      %s165 = sadd.s32 %s164, 1
      %s166 = scalar_select %p163, %s164, %s165
      %p169 = pneg %p163
      %p170 = scmp.eq.s32.totalorder %s33, 3
      %p171 = por %p169, %p170
      %p172 = scmp.ne.s32.totalorder %s164, %s167
      %p173 = scmp.eq.s32.totalorder %s33, 0
      %p174 = por %p172, %p173
      %p175 = scmp.ne.s32.totalorder %s164, %s167
      %p176 = scmp.eq.s32.totalorder %s38, 3
      %p177 = por %p175, %p176
      %p178 = scmp.ne.s32.totalorder %s167, %s168
      %p179 = scmp.eq.s32.totalorder %s38, 0
      %p180 = por %p178, %p179
      %p181 = scmp.ne.s32.totalorder %s167, %s168
      %p182 = scmp.eq.s32.totalorder %s39, 3
      %p183 = por %p181, %p182
      %p185 = scmp.ne.s32.totalorder %s168, %s184
      %p186 = scmp.eq.s32.totalorder %s39, 0
      %p187 = por %p185, %p186
      %s188 = sld [smem:[#allocation5 + %s41]]
      %s189 = sld [smem:[#allocation5 + %s55]]
      %s190 = ssub.s32 %s188, %s189
      %s191 = ssub.s32 %s42, %s51
      %s192 = sor.u32 %s190, %s191
      %p193 = scmp.eq.s32.totalorder %s192, 0
      %s195 = sadd.s32 %s194, 1
      %s196 = scalar_select %p193, %s194, %s195
      %p199 = pneg %p193
      %p200 = scmp.eq.s32.totalorder %s33, 3
      %p201 = por %p199, %p200
      %p202 = scmp.ne.s32.totalorder %s194, %s197
      %p203 = scmp.eq.s32.totalorder %s33, 0
      %p204 = por %p202, %p203
      %p205 = scmp.ne.s32.totalorder %s194, %s197
      %p206 = scmp.eq.s32.totalorder %s38, 3
      %p207 = por %p205, %p206
      %p208 = scmp.ne.s32.totalorder %s197, %s198
      %p209 = scmp.eq.s32.totalorder %s38, 0
      %p210 = por %p208, %p209
      %p211 = scmp.ne.s32.totalorder %s197, %s198
      %p212 = scmp.eq.s32.totalorder %s39, 3
      %p213 = por %p211, %p212
      %p215 = scmp.ne.s32.totalorder %s198, %s214
      %p216 = scmp.eq.s32.totalorder %s39, 0
      %p217 = por %p215, %p216
      %s218 = sld [smem:[#allocation5 + %s41]]
      %s219 = sld [smem:[#allocation5 + %s55]]
      %s220 = ssub.s32 %s218, %s219
      %p221 = scmp.eq.s32.totalorder %s220, 0
      %s223 = sadd.s32 %s222, 1
      %s224 = scalar_select %p221, %s222, %s223
      %p227 = pneg %p221
      %p228 = scmp.eq.s32.totalorder %s33, 3
      %p229 = por %p227, %p228
      %p230 = scmp.ne.s32.totalorder %s222, %s225
      %p231 = scmp.eq.s32.totalorder %s33, 0
      %p232 = por %p230, %p231
      %p233 = scmp.ne.s32.totalorder %s222, %s225
      %p234 = scmp.eq.s32.totalorder %s38, 3
      %p235 = por %p233, %p234
      %p236 = scmp.ne.s32.totalorder %s225, %s226
      %p237 = scmp.eq.s32.totalorder %s38, 0
      %p238 = por %p236, %p237
      %p239 = scmp.ne.s32.totalorder %s225, %s226
      %p240 = scmp.eq.s32.totalorder %s39, 3
      %p241 = por %p239, %p240
      %p243 = scmp.ne.s32.totalorder %s226, %s242
      %p244 = scmp.eq.s32.totalorder %s39, 0
      %p245 = por %p243, %p244
      %s246 = sld [smem:[#allocation5 + %s41]]
      %s247 = sld [smem:[#allocation5 + %s55]]
      %s248 = ssub.s32 %s246, %s247
      %s249 = ssub.s32 %s40, %s59
      %s250 = sor.u32 %s248, %s249
      %p251 = scmp.eq.s32.totalorder %s250, 0
      %s253 = sadd.s32 %s252, 1
      %s254 = scalar_select %p251, %s252, %s253
      %p257 = pneg %p251
      %p258 = scmp.eq.s32.totalorder %s33, 3
      %p259 = por %p257, %p258
      %p260 = scmp.ne.s32.totalorder %s252, %s255
      %p261 = scmp.eq.s32.totalorder %s33, 0
      %p262 = por %p260, %p261
      %p263 = scmp.ne.s32.totalorder %s252, %s255
      %p264 = scmp.eq.s32.totalorder %s38, 3
      %p265 = por %p263, %p264
      %p266 = scmp.ne.s32.totalorder %s255, %s256
      %p267 = scmp.eq.s32.totalorder %s38, 0
      %p268 = por %p266, %p267
      %p269 = scmp.ne.s32.totalorder %s255, %s256
      %p270 = scmp.eq.s32.totalorder %s39, 3
      %p271 = por %p269, %p270
      %p273 = scmp.ne.s32.totalorder %s256, %s272
      %p274 = scmp.eq.s32.totalorder %s39, 0
      %p275 = por %p273, %p274
      %s276 = ssub.s32 %s40, %s59
      %p277 = scmp.eq.s32.totalorder %s276, 0
      %s279 = sadd.s32 %s278, 1
      %s280 = scalar_select %p277, %s278, %s279
      %p283 = pneg %p277
      %p284 = scmp.eq.s32.totalorder %s33, 3
      %p285 = por %p283, %p284
      %p286 = scmp.ne.s32.totalorder %s278, %s281
      %p287 = scmp.eq.s32.totalorder %s33, 0
      %p288 = por %p286, %p287
      %p289 = scmp.ne.s32.totalorder %s278, %s281
      %p290 = scmp.eq.s32.totalorder %s38, 3
      %p291 = por %p289, %p290
      %p292 = scmp.ne.s32.totalorder %s281, %s282
      %p293 = scmp.eq.s32.totalorder %s38, 0
      %p294 = por %p292, %p293
      %p295 = scmp.ne.s32.totalorder %s281, %s282
      %p296 = scmp.eq.s32.totalorder %s39, 3
      %p297 = por %p295, %p296
      %p299 = scmp.ne.s32.totalorder %s282, %s298
      %p300 = scmp.eq.s32.totalorder %s39, 0
      %p301 = por %p299, %p300
      %p302 = scmp.le.s32.totalorder 1, %s33
      %p303 = scmp.lt.s32.totalorder %s33, 5
      %p304 = pnand %p302, %p303
      %p305 = pneg %p304
      // Predicated region
      $region9: #{moe_block_forward.7} parent=5 // pred_check
        _
      $region10: #{moe_block_forward.7} parent=5 // pred_check_branch
        %307 = sbr.rel (%p304) target = $region12
      $region11: #{moe_block_forward.7} parent=5 // pred_region
        %s308 = ssub.s32 %s33, 1
        // Predicated region
        $region13: #{moe_block_forward.7} parent=11 // pred_check
          %p309 = pneg %p78
        $region14: #{moe_block_forward.7} parent=11 // pred_check_branch
          %311 = sbr.rel (%p309) target = $region16
        $region15: #{moe_block_forward.7} parent=11 // pred_region
          %s312 = smul.u32 2, %s43
          %s314 = ssub.s32 256, 256
          %315 = vsyncadd [#allocation8], %s314
          %s316 = smul.addr %s312, 128
          %s317 = scalar_lea.hbm %s2, %s316
          %s318 = sshll.u32 [#allocation7], 4
          %s319 = int_to_ptr.vmem [resolvable:$true] %s318
          %324 = dma.hbm_to_vmem [thread:$0]  %s317, 256, %s319, [#allocation8], 128, 128, 8
        $region16: #{moe_block_forward.7} parent=11 // pred_fallthru
          _
        // Predicated region
        $region17: #{moe_block_forward.7} parent=11 // pred_check
          %p325 = pneg %p99
        $region18: #{moe_block_forward.7} parent=11 // pred_check_branch
          %327 = sbr.rel (%p325) target = $region20
        $region19: #{moe_block_forward.7} parent=11 // pred_region
          %s329 = ssub.s32 16, 16
          %330 = vsyncadd [#allocation11], %s329
          %s332 = sshll.u32 [#allocation10], 4
          %s333 = int_to_ptr.vmem [resolvable:$true] %s332
          %335 = dma.hbm_to_vmem [thread:$0]  %s3, 16, %s333, [#allocation11]
        $region20: #{moe_block_forward.7} parent=11 // pred_fallthru
          _
        // Predicated region
        $region21: #{moe_block_forward.7} parent=11 // pred_check
          %p336 = pneg %p120
        $region22: #{moe_block_forward.7} parent=11 // pred_check_branch
          %338 = sbr.rel (%p336) target = $region24
        $region23: #{moe_block_forward.7} parent=11 // pred_region
          %s340 = ssub.s32 16, 16
          %341 = vsyncadd [#allocation11], %s340
          %s343 = sshll.u32 [#allocation12], 4
          %s344 = int_to_ptr.vmem [resolvable:$true] %s343
          %346 = dma.hbm_to_vmem [thread:$0]  %s4, 16, %s344, [#allocation11]
        $region24: #{moe_block_forward.7} parent=11 // pred_fallthru
          _
      $region12: #{moe_block_forward.7} parent=5 // pred_fallthru
        _
      %p347 = scmp.lt.s32.totalorder %s33, 4
      // Predicated region
      $region25: #{moe_block_forward.7} parent=5 // pred_check
        %p348 = pneg %p347
      $region26: #{moe_block_forward.7} parent=5 // pred_check_branch
        %350 = sbr.rel (%p348) target = $region28
      $region27: #{moe_block_forward.7} parent=5 // pred_region
        // Predicated region
        $region29: #{moe_block_forward.7} parent=27 // pred_check
          %p351 = pneg %p144
        $region30: #{moe_block_forward.7} parent=27 // pred_check_branch
          %353 = sbr.rel (%p351) target = $region32
        $region31: #{moe_block_forward.7} parent=27 // pred_region
          %s354 = sand.u32 %s33, 1
          %s355 = scalar_lea.sflag [#allocation14], %s354
          %s356 = sand.u32 %s134, 1
          %s357 = smul.addr %s356, 64
          %s358 = scalar_lea.vmem [#allocation13], %s357
          %s359 = sld [smem:[#allocation5 + %s41]]
          %s360 = smul.u32 2, %s42
          %s362 = ssub.s32 1024, 1024
          %363 = vsyncadd %s355, %s362
          %s364 = smul.addr %s359, 16
          %s365 = sadd.s32 %s360, %s364
          %s366 = smul.addr %s365, 64
          %s367 = scalar_lea.hbm %s5, %s366
          %s368 = sshll.u32 %s358, 4
          %s369 = int_to_ptr.vmem [resolvable:$true] %s368
          %374 = dma.hbm_to_vmem [thread:$0]  %s367, 1024, %s369, %s355, 128, 128, 8
        $region32: #{moe_block_forward.7} parent=27 // pred_fallthru
          _
        // Predicated region
        $region33: #{moe_block_forward.7} parent=27 // pred_check
          %p375 = pneg %p174
        $region34: #{moe_block_forward.7} parent=27 // pred_check_branch
          %377 = sbr.rel (%p375) target = $region36
        $region35: #{moe_block_forward.7} parent=27 // pred_region
          %s378 = sand.u32 %s33, 1
          %s379 = scalar_lea.sflag [#allocation14], %s378
          %s380 = sand.u32 %s164, 1
          %s381 = smul.addr %s380, 2
          %s382 = scalar_lea.vmem [#allocation15], %s381
          %s383 = sld [smem:[#allocation5 + %s41]]
          %s384 = smul.u32 2, %s42
          %s386 = ssub.s32 32, 32
          %387 = vsyncadd %s379, %s386
          %s388 = smul.addr %s383, 2
          %s389 = sadd.s32 %s384, %s388
          %s390 = smul.addr %s389, 16
          %s391 = scalar_lea.hbm %s6, %s390
          %s393 = sshll.u32 %s382, 4
          %s394 = int_to_ptr.vmem [resolvable:$true] %s393
          %396 = dma.hbm_to_vmem [thread:$0]  %s391, 32, %s394, %s379
        $region36: #{moe_block_forward.7} parent=27 // pred_fallthru
          _
        // Predicated region
        $region37: #{moe_block_forward.7} parent=27 // pred_check
          %p397 = pneg %p204
        $region38: #{moe_block_forward.7} parent=27 // pred_check_branch
          %399 = sbr.rel (%p397) target = $region40
        $region39: #{moe_block_forward.7} parent=27 // pred_region
          %s400 = sand.u32 %s33, 1
          %s401 = scalar_lea.sflag [#allocation17], %s400
          %s402 = sand.u32 %s194, 1
          %s403 = smul.addr %s402, 128
          %s404 = scalar_lea.vmem [#allocation16], %s403
          %s405 = sld [smem:[#allocation5 + %s41]]
          %s406 = smul.u32 32, %s42
          %s408 = ssub.s32 2048, 2048
          %409 = vsyncadd %s401, %s408
          %s410 = smul.addr %s405, 32
          %s411 = sadd.s32 %s406, %s410
          %s412 = smul.addr %s411, 64
          %s413 = scalar_lea.hbm %s7, %s412
          %s414 = sshll.u32 %s404, 4
          %s415 = int_to_ptr.vmem [resolvable:$true] %s414
          %420 = dma.hbm_to_vmem [thread:$0]  %s413, 2048, %s415, %s401, 64, 64, 4
        $region40: #{moe_block_forward.7} parent=27 // pred_fallthru
          _
        // Predicated region
        $region41: #{moe_block_forward.7} parent=27 // pred_check
          %p421 = pneg %p232
        $region42: #{moe_block_forward.7} parent=27 // pred_check_branch
          %423 = sbr.rel (%p421) target = $region44
        $region43: #{moe_block_forward.7} parent=27 // pred_region
          %s424 = sand.u32 %s33, 1
          %s425 = scalar_lea.sflag [#allocation17], %s424
          %s426 = sand.u32 %s222, 1
          %s427 = scalar_lea.vmem [#allocation18], %s426
          %s428 = sld [smem:[#allocation5 + %s41]]
          %s430 = ssub.s32 16, 16
          %431 = vsyncadd %s425, %s430
          %s432 = smul.addr %s428, 16
          %s433 = scalar_lea.hbm %s8, %s432
          %s435 = sshll.u32 %s427, 4
          %s436 = int_to_ptr.vmem [resolvable:$true] %s435
          %438 = dma.hbm_to_vmem [thread:$0]  %s433, 16, %s436, %s425
        $region44: #{moe_block_forward.7} parent=27 // pred_fallthru
          _
        // Predicated region
        $region45: #{moe_block_forward.7} parent=27 // pred_check
          %p439 = pneg %p262
        $region46: #{moe_block_forward.7} parent=27 // pred_check_branch
          %441 = sbr.rel (%p439) target = $region48
        $region47: #{moe_block_forward.7} parent=27 // pred_region
          %s442 = sand.u32 %s252, 1
          %s443 = scalar_lea.sflag [#allocation20], %s442
          %s444 = sand.u32 %s252, 1
          %s445 = smul.addr %s444, 16
          %s446 = scalar_lea.vmem [#allocation19], %s445
          %s447 = sld [smem:[#allocation5 + %s41]]
          %s448 = smul.u32 2, %s40
          %s450 = ssub.s32 256, 256
          %451 = vsyncadd %s443, %s450
          %s452 = smul.addr %s447, 2
          %s453 = sadd.s32 %s448, %s452
          %s454 = smul.addr %s453, 128
          %s455 = scalar_lea.hbm %s9, %s454
          %s456 = sshll.u32 %s446, 4
          %s457 = int_to_ptr.vmem [resolvable:$true] %s456
          %462 = dma.hbm_to_vmem [thread:$0]  %s455, 256, %s457, %s443, 128, 128, 8
        $region48: #{moe_block_forward.7} parent=27 // pred_fallthru
          _
      $region28: #{moe_block_forward.7} parent=5 // pred_fallthru
        _
      %p463 = scmp.le.s32.totalorder 1, %s33
      %p464 = scmp.lt.s32.totalorder %s33, 5
      %p465 = pnand %p463, %p464
      %p466 = pneg %p465
      // Predicated region
      $region49: #{moe_block_forward.7} parent=5 // pred_check
        _
      $region50: #{moe_block_forward.7} parent=5 // pred_check_branch
        %468 = sbr.rel (%p465) target = $region52
      $region51: #{moe_block_forward.7} parent=5 // pred_region
        %s469 = ssub.s32 %s33, 1
        // Predicated region
        $region53: #{moe_block_forward.7} parent=51 // pred_check
          %p470 = pneg %p78
        $region54: #{moe_block_forward.7} parent=51 // pred_check_branch
          %472 = sbr.rel (%p470) target = $region56
        $region55: #{moe_block_forward.7} parent=51 // pred_region
          %473 = dma.done [#allocation8], 256
        $region56: #{moe_block_forward.7} parent=51 // pred_fallthru
          _
        // Predicated region
        $region57: #{moe_block_forward.7} parent=51 // pred_check
          %p474 = pneg %p99
        $region58: #{moe_block_forward.7} parent=51 // pred_check_branch
          %476 = sbr.rel (%p474) target = $region60
        $region59: #{moe_block_forward.7} parent=51 // pred_region
          %477 = dma.done [#allocation11], 16
        $region60: #{moe_block_forward.7} parent=51 // pred_fallthru
          _
        // Predicated region
        $region61: #{moe_block_forward.7} parent=51 // pred_check
          %p478 = pneg %p120
        $region62: #{moe_block_forward.7} parent=51 // pred_check_branch
          %480 = sbr.rel (%p478) target = $region64
        $region63: #{moe_block_forward.7} parent=51 // pred_region
          %481 = dma.done [#allocation11], 16
        $region64: #{moe_block_forward.7} parent=51 // pred_fallthru
          _
        %s482 = sand.u32 %s38, 1
        %s483 = scalar_lea.sflag [#allocation14], %s482
        %s484 = sand.u32 %s137, 1
        %s485 = smul.addr %s484, 64
        %s486 = scalar_lea.vmem [#allocation13], %s485
        // Predicated region
        $region65: #{moe_block_forward.7} parent=51 // pred_check
          %p487 = pneg %p150
        $region66: #{moe_block_forward.7} parent=51 // pred_check_branch
          %489 = sbr.rel (%p487) target = $region68
        $region67: #{moe_block_forward.7} parent=51 // pred_region
          %490 = dma.done %s483, 1024
        $region68: #{moe_block_forward.7} parent=51 // pred_fallthru
          _
        %s491 = sand.u32 %s38, 1
        %s492 = scalar_lea.sflag [#allocation14], %s491
        %s493 = sand.u32 %s167, 1
        %s494 = smul.addr %s493, 2
        %s495 = scalar_lea.vmem [#allocation15], %s494
        // Predicated region
        $region69: #{moe_block_forward.7} parent=51 // pred_check
          %p496 = pneg %p180
        $region70: #{moe_block_forward.7} parent=51 // pred_check_branch
          %498 = sbr.rel (%p496) target = $region72
        $region71: #{moe_block_forward.7} parent=51 // pred_region
          %499 = dma.done %s492, 32
        $region72: #{moe_block_forward.7} parent=51 // pred_fallthru
          _
        %s500 = sand.u32 %s38, 1
        %s501 = scalar_lea.sflag [#allocation17], %s500
        %s502 = sand.u32 %s197, 1
        %s503 = smul.addr %s502, 128
        %s504 = scalar_lea.vmem [#allocation16], %s503
        // Predicated region
        $region73: #{moe_block_forward.7} parent=51 // pred_check
          %p505 = pneg %p210
        $region74: #{moe_block_forward.7} parent=51 // pred_check_branch
          %507 = sbr.rel (%p505) target = $region76
        $region75: #{moe_block_forward.7} parent=51 // pred_region
          %508 = dma.done %s501, 2048
        $region76: #{moe_block_forward.7} parent=51 // pred_fallthru
          _
        %s509 = sand.u32 %s38, 1
        %s510 = scalar_lea.sflag [#allocation17], %s509
        %s511 = sand.u32 %s225, 1
        %s512 = scalar_lea.vmem [#allocation18], %s511
        // Predicated region
        $region77: #{moe_block_forward.7} parent=51 // pred_check
          %p513 = pneg %p238
        $region78: #{moe_block_forward.7} parent=51 // pred_check_branch
          %515 = sbr.rel (%p513) target = $region80
        $region79: #{moe_block_forward.7} parent=51 // pred_region
          %516 = dma.done %s510, 16
        $region80: #{moe_block_forward.7} parent=51 // pred_fallthru
          _
        %s517 = sand.u32 %s255, 1
        %s518 = scalar_lea.sflag [#allocation20], %s517
        %s519 = sand.u32 %s255, 1
        %s520 = smul.addr %s519, 16
        %s521 = scalar_lea.vmem [#allocation19], %s520
        // Predicated region
        $region81: #{moe_block_forward.7} parent=51 // pred_check
          %p522 = pneg %p268
        $region82: #{moe_block_forward.7} parent=51 // pred_check_branch
          %524 = sbr.rel (%p522) target = $region84
        $region83: #{moe_block_forward.7} parent=51 // pred_region
          %525 = dma.done %s518, 256
        $region84: #{moe_block_forward.7} parent=51 // pred_fallthru
          _
        %p526 = pneg %p78
        %p527 = pneg %p75
        %p528 = pneg %p99
        %p529 = pneg %p96
        %p530 = pneg %p120
        %p531 = pneg %p117
        %s532 = sand.u32 %s38, 1
        %s533 = scalar_lea.sflag [#allocation14], %s532
        %s534 = sand.u32 %s137, 1
        %s535 = smul.addr %s534, 64
        %s536 = scalar_lea.vmem [#allocation13], %s535
        %p537 = pneg %p150
        %p538 = pneg %p147
        %s539 = sand.u32 %s38, 1
        %s540 = scalar_lea.sflag [#allocation14], %s539
        %s541 = sand.u32 %s167, 1
        %s542 = smul.addr %s541, 2
        %s543 = scalar_lea.vmem [#allocation15], %s542
        %p544 = pneg %p180
        %p545 = pneg %p177
        %s546 = sand.u32 %s38, 1
        %s547 = scalar_lea.sflag [#allocation17], %s546
        %s548 = sand.u32 %s197, 1
        %s549 = smul.addr %s548, 128
        %s550 = scalar_lea.vmem [#allocation16], %s549
        %p551 = pneg %p210
        %p552 = pneg %p207
        %s553 = sand.u32 %s38, 1
        %s554 = scalar_lea.sflag [#allocation17], %s553
        %s555 = sand.u32 %s225, 1
        %s556 = scalar_lea.vmem [#allocation18], %s555
        %p557 = pneg %p238
        %p558 = pneg %p235
        %s559 = sand.u32 %s255, 1
        %s560 = scalar_lea.sflag [#allocation20], %s559
        %s561 = sand.u32 %s255, 1
        %s562 = smul.addr %s561, 16
        %s563 = scalar_lea.vmem [#allocation19], %s562
        %p564 = pneg %p268
        %p565 = pneg %p265
        %p566 = pneg %p294
        %p567 = pneg %p291
        %s568 = smul.u32 2, %s43
        %s569 = sld [smem:[#allocation5 + %s44]]
        %s570 = smul.u32 2, %s45
        %s571 = sld [smem:[#allocation5 + %s44]]
        %s572 = smul.u32 2, %s45
        %s573 = sld [smem:[#allocation5 + %s44]]
        %s574 = smul.u32 32, %s45
        %s575 = sld [smem:[#allocation5 + %s44]]
        %s576 = sld [smem:[#allocation5 + %s44]]
        %s577 = smul.u32 2, %s43
        %s578 = smul.u32 2, %s43
        %p580 = scmp.eq.s32.totalorder %s44, 0
        %p581 = scmp.eq.s32.totalorder %s45, 0
        %p582 = pnand %p580, %p581
        %p583 = pneg %p582
        // Predicated region
        $region85: #{moe_block_forward.7} parent=51 // pred_check
          _
        $region86: #{moe_block_forward.7} parent=51 // pred_check_branch
          %585 = sbr.rel (%p582) target = $region88
        $region87: #{moe_block_forward.7} parent=51 // pred_region
          %v586 = vld [vmem:[#allocation7] sm:$0xff]
          %v587 = vld [vmem:[#allocation7 + $0x8] sm:$0xff]
          %vm588 = vcmask 523264
          %589 = vst.msk [vmem:[#allocation3] sm:$0xff] %vm588, %v586
          %590 = vst.msk [vmem:[#allocation3 + $0x8] sm:$0xff] %vm588, %v587
          %v591 = vsel %vm588, %v586, 0.0
          %592 = vadd.xlane.f32.xlu0 %v591
          %v593 = vpop.xlane.xlu0 %592
          %v594 = vsel %vm588, %v587, 0.0
          %595 = vadd.xlane.f32.xlu0 %v594
          %v596 = vpop.xlane.xlu0 %595
          %v597 = vrcp.pop 64.0
          %v598 = vmul.f32 %v593, %v597
          %v599 = vmul.f32 %v596, %v597
          %v600 = vsub.f32 %v586, %v598
          %v601 = vsub.f32 %v587, %v599
          %v602 = vmul.f32 %v600, %v600
          %v603 = vmul.f32 %v601, %v601
          %v604 = vsel %vm588, %v602, 0.0
          %605 = vadd.xlane.f32.xlu0 %v604
          %v606 = vpop.xlane.xlu0 %605
          %v607 = vsel %vm588, %v603, 0.0
          %608 = vadd.xlane.f32.xlu0 %v607
          %v609 = vpop.xlane.xlu0 %608
          %v610 = vmul.f32 %v606, %v597
          %v611 = vmul.f32 %v609, %v597
          %v612 = vadd.f32 %v610, 1e-05
          %v613 = vadd.f32 %v611, 1e-05
          %v614 = vrsqrt.pop %v612
          %v615 = vrsqrt.pop %v613
          %v616 = vmul.f32 %v600, %v614
          %v617 = vmul.f32 %v601, %v615
          %v618 = vld [vmem:[#allocation10] sm:$0x1]
          %v620 = vlaneseq
          %v621 = vshrl.u32 %v620, 7
          %v622 = vsub.s32 0, %v621
          %v623 = vrot.slane %v618, %v622
          %v625 = vmul.f32 %v616, %v623
          %v626 = vmul.f32 %v617, %v623
          %v627 = vld [vmem:[#allocation12] sm:$0x1]
          %v629 = vlaneseq
          %v630 = vshrl.u32 %v629, 7
          %v631 = vsub.s32 0, %v630
          %v632 = vrot.slane %v627, %v631
          %v634 = vadd.f32 %v625, %v632
          %v635 = vadd.f32 %v626, %v632
          %v636 = vpack.c.bf16 %v635, %v634
          %637 = vst.msk [vmem:[#allocation2] sm:$0xff] %vm588, %v636
        $region88: #{moe_block_forward.7} parent=51 // pred_fallthru
          _
        %s638 = sld [smem:[#allocation6]]
        %p639 = scmp.lt.s32.totalorder %s44, %s638
        // Predicated region
        $region89: #{moe_block_forward.7} parent=51 // pred_check
          %p640 = pneg %p639
        $region90: #{moe_block_forward.7} parent=51 // pred_check_branch
          %642 = sbr.rel (%p640) target = $region92
        $region91: #{moe_block_forward.7} parent=51 // pred_region
          %v643 = vld [vmem:[#allocation2] sm:$0xff]
          %v644 = vld [vmem:[%s486] sm:$0xff]
          %v645 = vld [vmem:[%s486 + $0x8] sm:$0xff]
          %v646 = vld [vmem:[%s486 + $0x10] sm:$0xff]
          %v647 = vld [vmem:[%s486 + $0x18] sm:$0xff]
          %v648 = vld [vmem:[%s486 + $0x20] sm:$0xff]
          %v649 = vld [vmem:[%s486 + $0x28] sm:$0xff]
          %v650 = vld [vmem:[%s486 + $0x30] sm:$0xff]
          %v651 = vld [vmem:[%s486 + $0x38] sm:$0xff]
          %v652 = vld [vmem:[%s495] sm:$0x3]
          %v654 = vlaneseq
          %v655 = vshrl.u32 %v654, 7
          %v656 = vsub.s32 0, %v655
          %v657 = vrot.slane %v652, %v656
          %v658 = vlaneseq
          %v659 = vshrl.u32 %v658, 7
          %v660 = vsub.s32 1, %v659
          %v661 = vrot.slane %v652, %v660
          %v672 = vunpack.c.l.b16 %v644
          %v673 = vunpack.c.h.b16 %v644
          %v674 = vunpack.c.l.b16 %v645
          %v675 = vunpack.c.h.b16 %v645
          %v676 = vunpack.c.l.b16 %v646
          %v677 = vunpack.c.h.b16 %v646
          %v678 = vunpack.c.l.b16 %v647
          %v679 = vunpack.c.h.b16 %v647
          %v680 = vunpack.c.l.b16 %v648
          %v681 = vunpack.c.h.b16 %v648
          %v682 = vunpack.c.l.b16 %v649
          %v683 = vunpack.c.h.b16 %v649
          %v684 = vunpack.c.l.b16 %v650
          %v685 = vunpack.c.h.b16 %v650
          %v686 = vunpack.c.l.b16 %v651
          %v687 = vunpack.c.h.b16 %v651
          %v688 = vpack.c.b16 %v674, %v672
          %v689 = vpack.c.b16 %v675, %v673
          %v690 = vpack.c.b16 %v678, %v676
          %v691 = vpack.c.b16 %v679, %v677
          %v692 = vpack.c.b16 %v682, %v680
          %v693 = vpack.c.b16 %v683, %v681
          %v694 = vpack.c.b16 %v686, %v684
          %v695 = vpack.c.b16 %v687, %v685
          %vm704 = vcmask 523264
          %v706 = vsel %vm704, %v643, 0
          %708 = vmatprep.subr.bf16.mxu0 %v689
          %709 = vmatpush1.bf16.msra.mxu0 %v688
          %710 = vmatprep.subr.bf16.mxu0 %v691
          %711 = vmatpush1.bf16.msra.mxu0 %v690
          %712 = vmatprep.subr.bf16.mxu0 %v693
          %713 = vmatpush1.bf16.msra.mxu0 %v692
          %714 = vmatprep.subr.bf16.mxu0 %v695
          %715 = vmatpush1.bf16.msra.mxu0 %v694
          %716 = vmatprep.subr.bf16.mxu0 0
          %717 = vmatpush1.bf16.msra.mxu0 0
          %718 = vmatprep.subr.bf16.mxu0 0
          %719 = vmatpush1.bf16.msra.mxu0 0
          %720 = vmatprep.subr.bf16.mxu0 0
          %721 = vmatpush1.bf16.msra.mxu0 0
          %722 = vmatprep.subr.bf16.mxu0 0
          %723 = vmatpush1.bf16.msra.mxu0 0
          %724 = vmatprep.subr.bf16.mxu0 0
          %725 = vmatpush1.bf16.msra.mxu0 0
          %726 = vmatprep.subr.bf16.mxu0 0
          %727 = vmatpush1.bf16.msra.mxu0 0
          %728 = vmatprep.subr.bf16.mxu0 0
          %729 = vmatpush1.bf16.msra.mxu0 0
          %730 = vmatprep.subr.bf16.mxu0 0
          %731 = vmatpush1.bf16.msra.mxu0 0
          %732 = vmatprep.subr.bf16.mxu0 0
          %733 = vmatpush1.bf16.msra.mxu0 0
          %734 = vmatprep.subr.bf16.mxu0 0
          %735 = vmatpush1.bf16.msra.mxu0 0
          %736 = vmatprep.subr.bf16.mxu0 0
          %737 = vmatpush1.bf16.msra.mxu0 0
          %738 = vmatprep.subr.bf16.mxu0 0
          %739 = vmatpush1.bf16.msra.mxu0 0
          %740 = vmatprep.mubr.bf16.mxu0 0
          %741 = vmatmul.mubr.bf16.gmra.mrb[0].mxu0 %v706
          %v742 = vpop.f32.mrb[0].mxu0
          %v743 = vadd.f32 %v657, %v742
          %v744 = vpop.f32.mrb[0].mxu0
          %v745 = vadd.f32 %v661, %v744
          %v746 = vpop.f32.mrb[0].mxu0
          %v747 = vadd.f32 %v657, %v746
          %v748 = vpop.f32.mrb[0].mxu0
          %v749 = vadd.f32 %v661, %v748
          %750 = vdwg.mxu0
          %v751 = vmul.f32 %v743, 1.702
          %v752 = vmul.f32 %v745, 1.702
          %v753 = vmul.f32 %v747, 1.702
          %v754 = vmul.f32 %v749, 1.702
          %v755 = vxor.u32 %v751, 2147483648
          %v756 = vxor.u32 %v752, 2147483648
          %v757 = vxor.u32 %v753, 2147483648
          %v758 = vxor.u32 %v754, 2147483648
          %v759 = vmul.f32 %v755, 1.442695
          %v760 = vpow.pop %v759
          %v761 = vmul.f32 %v756, 1.442695
          %v762 = vpow.pop %v761
          %v763 = vmul.f32 %v757, 1.442695
          %v764 = vpow.pop %v763
          %v765 = vmul.f32 %v758, 1.442695
          %v766 = vpow.pop %v765
          %v767 = vadd.f32 %v760, 1.0
          %v768 = vadd.f32 %v762, 1.0
          %v769 = vadd.f32 %v764, 1.0
          %v770 = vadd.f32 %v766, 1.0
          %v771 = vrcp.pop %v767
          %v772 = vmul.f32 1.0, %v771
          %v773 = vrcp.pop %v768
          %v774 = vmul.f32 1.0, %v773
          %v775 = vrcp.pop %v769
          %v776 = vmul.f32 1.0, %v775
          %v777 = vrcp.pop %v770
          %v778 = vmul.f32 1.0, %v777
          %v779 = vmul.f32 %v743, %v772
          %v780 = vmul.f32 %v745, %v774
          %v781 = vmul.f32 %v747, %v776
          %v782 = vmul.f32 %v749, %v778
          %v783 = vld [vmem:[%s504] sm:$0xf]
          %v784 = vld [vmem:[%s504 + $0x4] sm:$0xf]
          %v785 = vld [vmem:[%s504 + $0x8] sm:$0xf]
          %v786 = vld [vmem:[%s504 + $0xc] sm:$0xf]
          %v787 = vld [vmem:[%s504 + $0x10] sm:$0xf]
          %v788 = vld [vmem:[%s504 + $0x14] sm:$0xf]
          %v789 = vld [vmem:[%s504 + $0x18] sm:$0xf]
          %v790 = vld [vmem:[%s504 + $0x1c] sm:$0xf]
          %v791 = vld [vmem:[%s504 + $0x20] sm:$0xf]
          %v792 = vld [vmem:[%s504 + $0x24] sm:$0xf]
          %v793 = vld [vmem:[%s504 + $0x28] sm:$0xf]
          %v794 = vld [vmem:[%s504 + $0x2c] sm:$0xf]
          %v795 = vld [vmem:[%s504 + $0x30] sm:$0xf]
          %v796 = vld [vmem:[%s504 + $0x34] sm:$0xf]
          %v797 = vld [vmem:[%s504 + $0x38] sm:$0xf]
          %v798 = vld [vmem:[%s504 + $0x3c] sm:$0xf]
          %v799 = vld [vmem:[%s504 + $0x40] sm:$0xf]
          %v800 = vld [vmem:[%s504 + $0x44] sm:$0xf]
          %v801 = vld [vmem:[%s504 + $0x48] sm:$0xf]
          %v802 = vld [vmem:[%s504 + $0x4c] sm:$0xf]
          %v803 = vld [vmem:[%s504 + $0x50] sm:$0xf]
          %v804 = vld [vmem:[%s504 + $0x54] sm:$0xf]
          %v805 = vld [vmem:[%s504 + $0x58] sm:$0xf]
          %v806 = vld [vmem:[%s504 + $0x5c] sm:$0xf]
          %v807 = vld [vmem:[%s504 + $0x60] sm:$0xf]
          %v808 = vld [vmem:[%s504 + $0x64] sm:$0xf]
          %v809 = vld [vmem:[%s504 + $0x68] sm:$0xf]
          %v810 = vld [vmem:[%s504 + $0x6c] sm:$0xf]
          %v811 = vld [vmem:[%s504 + $0x70] sm:$0xf]
          %v812 = vld [vmem:[%s504 + $0x74] sm:$0xf]
          %v813 = vld [vmem:[%s504 + $0x78] sm:$0xf]
          %v814 = vld [vmem:[%s504 + $0x7c] sm:$0xf]
          %v815 = vpack.c.bf16 %v781, %v779
          %v816 = vpack.c.bf16 %v782, %v780
          %v849 = vunpack.c.l.b16 %v783
          %v850 = vunpack.c.l.b16 %v784
          %v851 = vunpack.c.l.b16 %v785
          %v852 = vunpack.c.l.b16 %v786
          %v853 = vunpack.c.l.b16 %v787
          %v854 = vunpack.c.l.b16 %v788
          %v855 = vunpack.c.l.b16 %v789
          %v856 = vunpack.c.l.b16 %v790
          %v857 = vunpack.c.l.b16 %v791
          %v858 = vunpack.c.l.b16 %v792
          %v859 = vunpack.c.l.b16 %v793
          %v860 = vunpack.c.l.b16 %v794
          %v861 = vunpack.c.l.b16 %v795
          %v862 = vunpack.c.l.b16 %v796
          %v863 = vunpack.c.l.b16 %v797
          %v864 = vunpack.c.l.b16 %v798
          %v865 = vunpack.c.l.b16 %v799
          %v866 = vunpack.c.l.b16 %v800
          %v867 = vunpack.c.l.b16 %v801
          %v868 = vunpack.c.l.b16 %v802
          %v869 = vunpack.c.l.b16 %v803
          %v870 = vunpack.c.l.b16 %v804
          %v871 = vunpack.c.l.b16 %v805
          %v872 = vunpack.c.l.b16 %v806
          %v873 = vunpack.c.l.b16 %v807
          %v874 = vunpack.c.l.b16 %v808
          %v875 = vunpack.c.l.b16 %v809
          %v876 = vunpack.c.l.b16 %v810
          %v877 = vunpack.c.l.b16 %v811
          %v878 = vunpack.c.l.b16 %v812
          %v879 = vunpack.c.l.b16 %v813
          %v880 = vunpack.c.l.b16 %v814
          %v881 = vpack.c.b16 %v850, %v849
          %v882 = vpack.c.b16 %v852, %v851
          %v883 = vpack.c.b16 %v854, %v853
          %v884 = vpack.c.b16 %v856, %v855
          %v885 = vpack.c.b16 %v858, %v857
          %v886 = vpack.c.b16 %v860, %v859
          %v887 = vpack.c.b16 %v862, %v861
          %v888 = vpack.c.b16 %v864, %v863
          %v889 = vpack.c.b16 %v866, %v865
          %v890 = vpack.c.b16 %v868, %v867
          %v891 = vpack.c.b16 %v870, %v869
          %v892 = vpack.c.b16 %v872, %v871
          %v893 = vpack.c.b16 %v874, %v873
          %v894 = vpack.c.b16 %v876, %v875
          %v895 = vpack.c.b16 %v878, %v877
          %v896 = vpack.c.b16 %v880, %v879
          %913 = vmatprep.subr.bf16.mxu0 0
          %914 = vmatpush1.bf16.msra.mxu0 %v881
          %915 = vmatprep.subr.bf16.mxu0 0
          %916 = vmatpush1.bf16.msra.mxu0 %v882
          %917 = vmatprep.subr.bf16.mxu0 0
          %918 = vmatpush1.bf16.msra.mxu0 %v883
          %919 = vmatprep.subr.bf16.mxu0 0
          %920 = vmatpush1.bf16.msra.mxu0 %v884
          %921 = vmatprep.subr.bf16.mxu0 0
          %922 = vmatpush1.bf16.msra.mxu0 %v885
          %923 = vmatprep.subr.bf16.mxu0 0
          %924 = vmatpush1.bf16.msra.mxu0 %v886
          %925 = vmatprep.subr.bf16.mxu0 0
          %926 = vmatpush1.bf16.msra.mxu0 %v887
          %927 = vmatprep.subr.bf16.mxu0 0
          %928 = vmatpush1.bf16.msra.mxu0 %v888
          %929 = vmatprep.subr.bf16.mxu0 0
          %930 = vmatpush1.bf16.msra.mxu0 %v889
          %931 = vmatprep.subr.bf16.mxu0 0
          %932 = vmatpush1.bf16.msra.mxu0 %v890
          %933 = vmatprep.subr.bf16.mxu0 0
          %934 = vmatpush1.bf16.msra.mxu0 %v891
          %935 = vmatprep.subr.bf16.mxu0 0
          %936 = vmatpush1.bf16.msra.mxu0 %v892
          %937 = vmatprep.subr.bf16.mxu0 0
          %938 = vmatpush1.bf16.msra.mxu0 %v893
          %939 = vmatprep.subr.bf16.mxu0 0
          %940 = vmatpush1.bf16.msra.mxu0 %v894
          %941 = vmatprep.subr.bf16.mxu0 0
          %942 = vmatpush1.bf16.msra.mxu0 %v895
          %943 = vmatprep.subr.bf16.mxu0 0
          %944 = vmatpush1.bf16.msra.mxu0 %v896
          %945 = vmatprep.mubr.bf16.mxu0 %v816
          %946 = vmatmul.mubr.bf16.gmra.mrb[0].mxu0 %v815
          %v947 = vpop.f32.mrb[0].mxu0
          %v948 = vadd.f32 0.0, %v947
          %v949 = vpop.f32.mrb[0].mxu0
          %v950 = vpop.f32.mrb[0].mxu0
          %v951 = vadd.f32 0.0, %v950
          %v952 = vpop.f32.mrb[0].mxu0
          %953 = vdwg.mxu0
          %v954 = vld [vmem:[%s521] sm:$0xff]
          %v955 = vld [vmem:[%s521 + $0x8] sm:$0xff]
          // Predicated region
          $region93: #{moe_block_forward.7} parent=91 // pred_check
            %p956 = pneg %p581
          $region94: #{moe_block_forward.7} parent=91 // pred_check_branch
            %958 = sbr.rel (%p956) target = $region96
          $region95: #{moe_block_forward.7} parent=91 // pred_region
            %v959 = vld [vmem:[#allocation3] sm:$0xff]
            %v960 = vld [vmem:[#allocation3 + $0x8] sm:$0xff]
            %v961 = vld [vmem:[%s512] sm:$0x1]
            %963 = vset.pattern.permute.xlu0 0
            %964 = vperm.xlu0 %963, %v954
            %v965 = vpop.permute.xlu0 %964
            %968 = vset.pattern.permute.xlu0 0
            %969 = vperm.xlu0 %968, %v955
            %v970 = vpop.permute.xlu0 %969
            %v973 = vlaneseq
            %v974 = vshrl.u32 %v973, 7
            %v975 = vsub.s32 0, %v974
            %v976 = vrot.slane %v961, %v975
            %v978 = vmul.f32 %v965, %v976
            %v979 = vmul.f32 %v970, %v976
            %v980 = vadd.f32 %v959, %v978
            %v981 = vadd.f32 %v960, %v979
            %982 = vst.msk [vmem:[#allocation3] sm:$0xff] %vm704, %v980
            %983 = vst.msk [vmem:[#allocation3 + $0x8] sm:$0xff] %vm704, %v981
          $region96: #{moe_block_forward.7} parent=91 // pred_fallthru
            _
          %v984 = vld [vmem:[#allocation3] sm:$0xff]
          %v985 = vld [vmem:[#allocation3 + $0x8] sm:$0xff]
          %987 = vset.pattern.permute.xlu0 0
          %988 = vperm.xlu0 %987, %v954
          %v989 = vpop.permute.xlu0 %988
          %992 = vset.pattern.permute.xlu0 0
          %993 = vperm.xlu0 %992, %v955
          %v994 = vpop.permute.xlu0 %993
          %v996 = vmul.f32 %v989, %v948
          %v997 = vmul.f32 %v994, %v951
          %v998 = vadd.f32 %v984, %v996
          %v999 = vadd.f32 %v985, %v997
          %1000 = vst.msk [vmem:[#allocation3] sm:$0xff] %vm704, %v998
          %1001 = vst.msk [vmem:[#allocation3 + $0x8] sm:$0xff] %vm704, %v999
        $region92: #{moe_block_forward.7} parent=51 // pred_fallthru
          _
        %p1002 = scmp.eq.s32.totalorder %s44, 3
        %p1003 = pnand %p1002, %p581
        %p1004 = pneg %p1003
        // Predicated region
        $region97: #{moe_block_forward.7} parent=51 // pred_check
          _
        $region98: #{moe_block_forward.7} parent=51 // pred_check_branch
          %1006 = sbr.rel (%p1003) target = $region100
        $region99: #{moe_block_forward.7} parent=51 // pred_region
          %v1007 = vld [vmem:[#allocation3] sm:$0xff]
          %v1008 = vld [vmem:[#allocation3 + $0x8] sm:$0xff]
          %vm1009 = vcmask 523264
          %1010 = vst.msk [vmem:[#allocation21] sm:$0xff] %vm1009, %v1007
          %1011 = vst.msk [vmem:[#allocation21 + $0x8] sm:$0xff] %vm1009, %v1008
        $region100: #{moe_block_forward.7} parent=51 // pred_fallthru
          _
        // Predicated region
        $region101: #{moe_block_forward.7} parent=51 // pred_check
          %p1012 = pneg %p291
        $region102: #{moe_block_forward.7} parent=51 // pred_check_branch
          %1014 = sbr.rel (%p1012) target = $region104
        $region103: #{moe_block_forward.7} parent=51 // pred_region
          %s1015 = smul.u32 2, %s43
          %s1017 = ssub.s32 256, 256
          %1018 = vsyncadd [#allocation9], %s1017
          %s1019 = smul.addr %s1015, 128
          %s1020 = scalar_lea.hbm %s10, %s1019
          %s1021 = sshll.u32 [#allocation21], 4
          %s1022 = int_to_ptr.vmem [resolvable:$true] %s1021
          %1027 = dma.vmem_to_hbm [thread:$0]  %s1022, 256, %s1020, [#allocation9], 128, 128, 8
        $region104: #{moe_block_forward.7} parent=51 // pred_fallthru
          _
        // Predicated region
        $region105: #{moe_block_forward.7} parent=51 // pred_check
          %p1028 = pneg %p291
        $region106: #{moe_block_forward.7} parent=51 // pred_check_branch
          %1030 = sbr.rel (%p1028) target = $region108
        $region107: #{moe_block_forward.7} parent=51 // pred_region
          %1031 = dma.done [#allocation9], 256
        $region108: #{moe_block_forward.7} parent=51 // pred_fallthru
          _
      $region52: #{moe_block_forward.7} parent=5 // pred_fallthru
        _
      %p1032 = scmp.le.s32.totalorder 2, %s33
      // Predicated region
      $region109: #{moe_block_forward.7} parent=5 // pred_check
        %p1033 = pneg %p1032
      $region110: #{moe_block_forward.7} parent=5 // pred_check_branch
        %1035 = sbr.rel (%p1033) target = $region112
      $region111: #{moe_block_forward.7} parent=5 // pred_region
        %s1036 = ssub.s32 %s33, 2
      $region112: #{moe_block_forward.7} parent=5 // pred_fallthru
        _
    $region6: #{moe_block_forward.7} parent=1 // loop_footer
      %s37 = sadd.s32 1, %s33
    $region7: #{moe_block_forward.7} parent=1 // loop_footer_branch
      %32 = sbr.rel target = $region3
    $region8: #{moe_block_forward.7} parent=1 // loop_exit
      _
    %1037 = vsyncpa [#allocation8], 1
    %s1038 = scalar_lea.sflag [#allocation8], 1
    %1039 = vsyncpa %s1038, 1
    %1040 = vsyncpa [#allocation11], 1
    %1041 = vsyncpa [#allocation14], 1
    %s1042 = scalar_lea.sflag [#allocation14], 1
    %1043 = vsyncpa %s1042, 1
    %1044 = vsyncpa [#allocation17], 1
    %s1045 = scalar_lea.sflag [#allocation17], 1
    %1046 = vsyncpa %s1045, 1
    %1047 = vsyncpa [#allocation20], 1
    %s1048 = scalar_lea.sflag [#allocation20], 1
    %1049 = vsyncpa %s1048, 1
    %1050 = vsyncpa [#allocation9], 1
    %s1051 = scalar_lea.sflag [#allocation9], 1
    %1052 = vsyncpa %s1051, 1

</llo_original>
